<compile_context>
chip_gen: v5e
topology: v5e:2x2
jax: 0.10.0
libtpu: 0.0.40
codegen_flags: <defaults>
</compile_context>

<pallas_src>
import functools

import jax
import jax.numpy as jnp
import numpy as np
from jax.experimental import pallas as pl
from jax.experimental.pallas import tpu as pltpu


def _round_up(x, m):
    return (x + m - 1) // m * m


def _num_groups(batch):
    """Grid groups: 2 on dual-TensorCore chips (v7x) when the batch splits
    evenly, else 1.  v5e/v6e are single-TC, so the grid is a serial loop:
    folding the whole batch into one step removes the ~0.35us/step pipeline
    overhead and the follow-up HLO reduction."""
    try:
        kind = jax.devices()[0].device_kind.lower()
    except Exception:
        kind = ""
    if "7" in kind and batch >= 2 and batch % 2 == 0:
        return 2
    return 1


# ----------------------------------------------------------------------------
# Fused kernel: one batch-group per grid step.
# ----------------------------------------------------------------------------
def _fused_kernel(Wp, L, LPAD, scale, cin_p, hid_p):
    """conv1(3x3,same)+ReLU -> conv2(3x3,same) -> sum(((y - t) @ fw)**2)*scale.

    Layout: channels on sublanes; lanes hold the row-padded (H+2)x(W+2)
    flattened image of every image in the group (each image segment padded to
    a multiple of 128 lanes), with a 128-lane zero halo on both ends so the
    nine 3x3 tap windows are plain static slices with no boundary masks.
    """
    offs = [dh * Wp + dw for dh in (-1, 0, 1) for dw in (-1, 0, 1)]

    def conv9(w_full, buf_ref, nch):
        # 3x3 "same" conv as 9 accumulating channel matmuls taken directly from
        # shifted windows of the zero-padded buffer -- no im2col matrix, no
        # concat, no patch scratch, no extra vector stores (review item #1).
        acc = None
        for i, off in enumerate(offs):
            tap = buf_ref[:, LPAD + off:LPAD + off + L]           # (nch, L)
            part = jnp.dot(w_full[:, i * nch:(i + 1) * nch], tap,
                           preferred_element_type=jnp.float32)
            acc = part if acc is None else acc + part
        return acc

    def kernel(mask_ref, x_ref, t_ref, w1_ref, b1_ref, w2_ref, b2_ref, fw_ref,
               o_ref, hpad_ref):
        mask = mask_ref[...]                                      # (1, L) 0/1 f32

        # ---- conv1 + bias + ReLU.  The mask zeroes the padded ring / filler
        #      lanes of h so they act as conv2's "same" zero padding.
        h = conv9(w1_ref[...], x_ref, cin_p)                      # (hid_p, L)
        h = mask * jnp.maximum(h + b1_ref[...], 0.0)

        # ---- stage h for conv2: zero ONLY the two 128-lane halos (aligned,
        #      one vreg each, every step; never gated on program_id -- that
        #      would break under megacore sharding).  The middle is fully
        #      overwritten, so it is never zero-filled (review item #2).
        hpad_ref[:, 0:LPAD] = jnp.zeros((hid_p, LPAD), jnp.float32)
        hpad_ref[:, LPAD + L:2 * LPAD + L] = jnp.zeros((hid_p, LPAD), jnp.float32)
        hpad_ref[:, LPAD:LPAD + L] = h

        # ---- conv2 + bias and feature-space MSE partial.  Uses linearity:
        #      f = fw @ (y - t), one matmul instead of two.
        y = conv9(w2_ref[...], hpad_ref, hid_p)                   # (C, L)
        d = mask * (y + b2_ref[...] - t_ref[...])
        f = jnp.dot(fw_ref[...], d, preferred_element_type=jnp.float32)
        o_ref[...] = (jnp.sum(f * f) * scale).reshape(1, 1)

    return kernel


# ----------------------------------------------------------------------------
# Jitted wrapper: layout packing (XLA-side plumbing) + single fused pallas_call.
# ----------------------------------------------------------------------------
@functools.partial(jax.jit, static_argnames=("norm", "groups"))
def fused_forward(x_nchw, t_nchw, w1t, b1c, w2t, b2c, fwt, *, norm, groups):
    N, C, H, W = x_nchw.shape
    Hp, Wp = H + 2, W + 2
    HWp = Hp * Wp
    SEG = _round_up(HWp, 128)          # per-image lane segment (zero filler tail)
    G = groups
    NB = N // G                        # images folded onto lanes per grid step
    L = NB * SEG
    LPAD = 128                         # aligned zero halo for the 3x3 tap windows
    LBUF = L + 2 * LPAD
    hid_p = w1t.shape[0]
    cin_p = w1t.shape[1] // 9
    F_ = fwt.shape[0]

    # Row-padded images ((H+2)x(W+2) zero ring), channels padded to a sublane
    # group, images folded onto the lane axis, 128-lane halo on both ends.
    xp = jnp.pad(x_nchw, ((0, 0), (0, cin_p - C), (1, 1), (1, 1)))
    xp = xp.reshape(N, cin_p, HWp)
    xp = jnp.pad(xp, ((0, 0), (0, 0), (0, SEG - HWp)))
    xp = xp.reshape(G, NB, cin_p, SEG).transpose(0, 2, 1, 3).reshape(G, cin_p, L)
    xp = jnp.pad(xp, ((0, 0), (0, 0), (LPAD, LPAD)))              # (G, cin_p, LBUF)

    tp = jnp.pad(t_nchw, ((0, 0), (0, 0), (1, 1), (1, 1))).reshape(N, C, HWp)
    tp = jnp.pad(tp, ((0, 0), (0, 0), (0, SEG - HWp)))
    tp = tp.reshape(G, NB, C, SEG).transpose(0, 2, 1, 3).reshape(G, C, L)

    # 0/1 validity mask over the folded lane axis (1 at real pixels), built once
    # here instead of per-grid-step broadcasted_iota in the kernel.
    m2d = jnp.zeros((Hp, Wp), jnp.float32).at[1:H + 1, 1:W + 1].set(1.0)
    mask = jnp.pad(m2d.reshape(1, HWp), ((0, 0), (0, SEG - HWp)))
    mask = jnp.tile(mask, (1, NB))                                 # (1, L)

    scale = 1.0 / (float(norm) * N * H * W * F_)

    partials = pl.pallas_call(
        _fused_kernel(Wp, L, LPAD, scale, cin_p, hid_p),
        out_shape=jax.ShapeDtypeStruct((G, 1, 1), jnp.float32),
        grid=(G,),
        in_specs=[
            pl.BlockSpec((1, L), lambda g: (0, 0)),                    # mask
            pl.BlockSpec((None, cin_p, LBUF), lambda g: (g, 0, 0)),    # x (padded)
            pl.BlockSpec((None, C, L), lambda g: (g, 0, 0)),           # target
            pl.BlockSpec((hid_p, 9 * cin_p), lambda g: (0, 0)),        # w1 (matmul form)
            pl.BlockSpec((hid_p, 1), lambda g: (0, 0)),                # b1
            pl.BlockSpec((C, 9 * hid_p), lambda g: (0, 0)),            # w2 (matmul form)
            pl.BlockSpec((C, 1), lambda g: (0, 0)),                    # b2
            pl.BlockSpec((F_, C), lambda g: (0, 0)),                   # fw^T
        ],
        out_specs=pl.BlockSpec((None, 1, 1), lambda g: (g, 0, 0)),
        scratch_shapes=[pltpu.VMEM((hid_p, LBUF), jnp.float32)],       # h + halo
        compiler_params=pltpu.CompilerParams(
            dimension_semantics=("parallel",)),   # per-group partials, no races
    )(mask, xp, tp, w1t, b1c, w2t, b2c, fwt)

    # Single-TC path (G == 1): no reduction HLO at all, just a reshape.
    return partials.reshape(()) if G == 1 else jnp.sum(partials)


# ----------------------------------------------------------------------------
# FullModel wrapper (mirrors the PyTorch module's forward)
# ----------------------------------------------------------------------------
class FullModel:
    def __init__(self, in_ch, hidden, feat, norm, key):
        ks = jax.random.split(key, 5)
        # Conv weights stored in HWIO (kh, kw, cin, cout) form for the reference.
        self.w1 = 0.1 * jax.random.normal(ks[0], (3, 3, in_ch, hidden), jnp.float32)
        self.b1 = 0.1 * jax.random.normal(ks[1], (hidden,), jnp.float32)
        self.w2 = 0.1 * jax.random.normal(ks[2], (3, 3, hidden, in_ch), jnp.float32)
        self.b2 = 0.1 * jax.random.normal(ks[3], (in_ch,), jnp.float32)
        self.fw = 0.1 * jax.random.normal(ks[4], (in_ch, feat), jnp.float32)  # loss_model
        self.norm = float(norm)
        # TODO(synk): the original PyTorch FullModel takes arbitrary injected
        # model/loss/loss_model callables; a concrete autoencoder + feature-MSE
        # instantiation is implemented here.

        # Pre-packed matmul-form parameters (kept f32: see header for rationale).
        cin_p = _round_up(in_ch, 8)     # pad Cin to a full sublane group
        hid_p = _round_up(hidden, 8)    # pad hidden channels likewise
        w1p = jnp.pad(self.w1, ((0, 0), (0, 0), (0, cin_p - in_ch), (0, hid_p - hidden)))
        w2p = jnp.pad(self.w2, ((0, 0), (0, 0), (0, hid_p - hidden), (0, 0)))
        self.w1t = w1p.reshape(9 * cin_p, hid_p).T             # (Hid_p, 9*Cin_p)
        self.w2t = w2p.reshape(9 * hid_p, in_ch).T             # (C, 9*Hid_p)
        self.b1c = jnp.pad(self.b1, (0, hid_p - hidden)).reshape(hid_p, 1)
        self.b2c = self.b2.reshape(in_ch, 1)
        self.fwt = self.fw.T                                   # (F, C)

    def __call__(self, input_nchw, target_nchw):
        # output = self.model(input); loss = self.loss(output, target, loss_model, norm)
        groups = _num_groups(input_nchw.shape[0])
        return fused_forward(input_nchw, target_nchw,
                             self.w1t, self.b1c, self.w2t, self.b2c, self.fwt,
                             norm=self.norm, groups=groups)


# ----------------------------------------------------------------------------
# Pure-JAX reference for verification
# ----------------------------------------------------------------------------
def reference(x_nchw, t_nchw, m):
    dn = ("NCHW", "HWIO", "NCHW")
    hp = jax.lax.Precision.HIGHEST
    h = jax.lax.conv_general_dilated(x_nchw, m.w1, (1, 1), "SAME",
                                     dimension_numbers=dn, precision=hp)
    h = jnp.maximum(h + m.b1[None, :, None, None], 0.0)
    y = jax.lax.conv_general_dilated(h, m.w2, (1, 1), "SAME",
                                     dimension_numbers=dn, precision=hp)
    y = y + m.b2[None, :, None, None]
    fo = jnp.einsum("nchw,cf->nfhw", y, m.fw, precision=hp)
    ft = jnp.einsum("nchw,cf->nfhw", t_nchw, m.fw, precision=hp)
    return jnp.mean((fo - ft) ** 2) / m.norm


if __name__ == "__main__":
    N, C, H, W = 2, 4, 16, 16
    HIDDEN, FEAT = 8, 8
    NORM = 2.0

    key = jax.random.PRNGKey(0)
    k_in, k_tgt, k_par = jax.random.split(key, 3)
    # PyTorch-style NCHW inputs
    x_nchw = jax.random.normal(k_in, (N, C, H, W), jnp.float32)
    t_nchw = jax.random.normal(k_tgt, (N, C, H, W), jnp.float32)

    model = FullModel(C, HIDDEN, FEAT, NORM, k_par)

    loss = jax.block_until_ready(model(x_nchw, t_nchw))

    ref = jax.block_until_ready(reference(x_nchw, t_nchw, model))
    np.testing.assert_allclose(np.asarray(loss), np.asarray(ref),
                               rtol=1e-4, atol=1e-5)
    print("KERNEL_OK")
</pallas_src>

<mosaic_0001>
module attributes {stable_mosaic.version = 11 : i64} {
  func.func @kernel(%arg0: i32, %arg1: memref<1x768xf32, #tpu.memory_space<vmem>>, %arg2: memref<1x8x1024xf32, #tpu.memory_space<vmem>>, %arg3: memref<1x4x768xf32, #tpu.memory_space<vmem>>, %arg4: memref<8x72xf32, #tpu.memory_space<vmem>>, %arg5: memref<8x1xf32, #tpu.memory_space<vmem>>, %arg6: memref<4x72xf32, #tpu.memory_space<vmem>>, %arg7: memref<4x1xf32, #tpu.memory_space<vmem>>, %arg8: memref<8x4xf32, #tpu.memory_space<vmem>>, %arg9: memref<1x1x1xf32, #tpu.memory_space<vmem>>, %arg10: memref<8x1024xf32, #tpu.memory_space<vmem>>) attributes {dimension_semantics = [#tpu.dimension_semantics<parallel>], iteration_bounds = array<i64: 1>, scalar_prefetch = 0 : i64, scratch_operands = 1 : i64, tpu.core_type = #tpu.core_type<tc>, window_params = [{pipeline_mode = #tpu.pipeline_mode<synchronous>, transform_indices = @transform_0, window_bounds = array<i64: 1, 768>}, {transform_indices = @transform_1, window_bounds = array<i64: 1, 8, 1024>}, {transform_indices = @transform_2, window_bounds = array<i64: 1, 4, 768>}, {pipeline_mode = #tpu.pipeline_mode<synchronous>, transform_indices = @transform_3, window_bounds = array<i64: 8, 72>}, {pipeline_mode = #tpu.pipeline_mode<synchronous>, transform_indices = @transform_4, window_bounds = array<i64: 8, 1>}, {pipeline_mode = #tpu.pipeline_mode<synchronous>, transform_indices = @transform_5, window_bounds = array<i64: 4, 72>}, {pipeline_mode = #tpu.pipeline_mode<synchronous>, transform_indices = @transform_6, window_bounds = array<i64: 4, 1>}, {pipeline_mode = #tpu.pipeline_mode<synchronous>, transform_indices = @transform_7, window_bounds = array<i64: 8, 4>}, {transform_indices = @transform_8, window_bounds = array<i64: 1, 1, 1>}]} {
    %c0 = arith.constant 0 : index
    %c0_0 = arith.constant 0 : index
    %0 = vector.load %arg1[%c0, %c0_0] : memref<1x768xf32, #tpu.memory_space<vmem>>, vector<1x768xf32>
    %c0_1 = arith.constant 0 : index
    %c0_2 = arith.constant 0 : index
    %1 = vector.load %arg4[%c0_1, %c0_2] : memref<8x72xf32, #tpu.memory_space<vmem>>, vector<8x72xf32>
    %c0_3 = arith.constant 0 : index
    %c0_4 = arith.constant 0 : index
    %c109 = arith.constant 109 : index
    %2 = vector.load %arg2[%c0_3, %c0_4, %c109] : memref<1x8x1024xf32, #tpu.memory_space<vmem>>, vector<1x8x768xf32>
    %3 = vector.shape_cast %2 : vector<1x8x768xf32> to vector<8x768xf32>
    %4 = vector.extract_strided_slice %1 {offsets = [0, 0], sizes = [8, 8], strides = [1, 1]} : vector<8x72xf32> to vector<8x8xf32>
    %cst = arith.constant dense<0.000000e+00> : vector<8x768xf32>
    %5 = tpu.matmul %4, %3, %cst {dimension_numbers = #tpu.dot_dimension_numbers<[1], [0], [0], [1], [0, 0, 1, 1], [], []>} : vector<8x8xf32>, vector<8x768xf32>, vector<8x768xf32> -> vector<8x768xf32>
    %c0_5 = arith.constant 0 : index
    %c0_6 = arith.constant 0 : index
    %c110 = arith.constant 110 : index
    %6 = vector.load %arg2[%c0_5, %c0_6, %c110] : memref<1x8x1024xf32, #tpu.memory_space<vmem>>, vector<1x8x768xf32>
    %7 = vector.shape_cast %6 : vector<1x8x768xf32> to vector<8x768xf32>
    %8 = vector.extract_strided_slice %1 {offsets = [0, 8], sizes = [8, 8], strides = [1, 1]} : vector<8x72xf32> to vector<8x8xf32>
    %cst_7 = arith.constant dense<0.000000e+00> : vector<8x768xf32>
    %9 = tpu.matmul %8, %7, %cst_7 {dimension_numbers = #tpu.dot_dimension_numbers<[1], [0], [0], [1], [0, 0, 1, 1], [], []>} : vector<8x8xf32>, vector<8x768xf32>, vector<8x768xf32> -> vector<8x768xf32>
    %10 = arith.addf %5, %9 : vector<8x768xf32>
    %c0_8 = arith.constant 0 : index
    %c0_9 = arith.constant 0 : index
    %c111 = arith.constant 111 : index
    %11 = vector.load %arg2[%c0_8, %c0_9, %c111] : memref<1x8x1024xf32, #tpu.memory_space<vmem>>, vector<1x8x768xf32>
    %12 = vector.shape_cast %11 : vector<1x8x768xf32> to vector<8x768xf32>
    %13 = vector.extract_strided_slice %1 {offsets = [0, 16], sizes = [8, 8], strides = [1, 1]} : vector<8x72xf32> to vector<8x8xf32>
    %cst_10 = arith.constant dense<0.000000e+00> : vector<8x768xf32>
    %14 = tpu.matmul %13, %12, %cst_10 {dimension_numbers = #tpu.dot_dimension_numbers<[1], [0], [0], [1], [0, 0, 1, 1], [], []>} : vector<8x8xf32>, vector<8x768xf32>, vector<8x768xf32> -> vector<8x768xf32>
    %15 = arith.addf %10, %14 : vector<8x768xf32>
    %c0_11 = arith.constant 0 : index
    %c0_12 = arith.constant 0 : index
    %c127 = arith.constant 127 : index
    %16 = vector.load %arg2[%c0_11, %c0_12, %c127] : memref<1x8x1024xf32, #tpu.memory_space<vmem>>, vector<1x8x768xf32>
    %17 = vector.shape_cast %16 : vector<1x8x768xf32> to vector<8x768xf32>
    %18 = vector.extract_strided_slice %1 {offsets = [0, 24], sizes = [8, 8], strides = [1, 1]} : vector<8x72xf32> to vector<8x8xf32>
    %cst_13 = arith.constant dense<0.000000e+00> : vector<8x768xf32>
    %19 = tpu.matmul %18, %17, %cst_13 {dimension_numbers = #tpu.dot_dimension_numbers<[1], [0], [0], [1], [0, 0, 1, 1], [], []>} : vector<8x8xf32>, vector<8x768xf32>, vector<8x768xf32> -> vector<8x768xf32>
    %20 = arith.addf %15, %19 : vector<8x768xf32>
    %c0_14 = arith.constant 0 : index
    %c0_15 = arith.constant 0 : index
    %c128 = arith.constant 128 : index
    %21 = vector.load %arg2[%c0_14, %c0_15, %c128] : memref<1x8x1024xf32, #tpu.memory_space<vmem>>, vector<1x8x768xf32>
    %22 = vector.shape_cast %21 : vector<1x8x768xf32> to vector<8x768xf32>
    %23 = vector.extract_strided_slice %1 {offsets = [0, 32], sizes = [8, 8], strides = [1, 1]} : vector<8x72xf32> to vector<8x8xf32>
    %cst_16 = arith.constant dense<0.000000e+00> : vector<8x768xf32>
    %24 = tpu.matmul %23, %22, %cst_16 {dimension_numbers = #tpu.dot_dimension_numbers<[1], [0], [0], [1], [0, 0, 1, 1], [], []>} : vector<8x8xf32>, vector<8x768xf32>, vector<8x768xf32> -> vector<8x768xf32>
    %25 = arith.addf %20, %24 : vector<8x768xf32>
    %c0_17 = arith.constant 0 : index
    %c0_18 = arith.constant 0 : index
    %c129 = arith.constant 129 : index
    %26 = vector.load %arg2[%c0_17, %c0_18, %c129] : memref<1x8x1024xf32, #tpu.memory_space<vmem>>, vector<1x8x768xf32>
    %27 = vector.shape_cast %26 : vector<1x8x768xf32> to vector<8x768xf32>
    %28 = vector.extract_strided_slice %1 {offsets = [0, 40], sizes = [8, 8], strides = [1, 1]} : vector<8x72xf32> to vector<8x8xf32>
    %cst_19 = arith.constant dense<0.000000e+00> : vector<8x768xf32>
    %29 = tpu.matmul %28, %27, %cst_19 {dimension_numbers = #tpu.dot_dimension_numbers<[1], [0], [0], [1], [0, 0, 1, 1], [], []>} : vector<8x8xf32>, vector<8x768xf32>, vector<8x768xf32> -> vector<8x768xf32>
    %30 = arith.addf %25, %29 : vector<8x768xf32>
    %c0_20 = arith.constant 0 : index
    %c0_21 = arith.constant 0 : index
    %c145 = arith.constant 145 : index
    %31 = vector.load %arg2[%c0_20, %c0_21, %c145] : memref<1x8x1024xf32, #tpu.memory_space<vmem>>, vector<1x8x768xf32>
    %32 = vector.shape_cast %31 : vector<1x8x768xf32> to vector<8x768xf32>
    %33 = vector.extract_strided_slice %1 {offsets = [0, 48], sizes = [8, 8], strides = [1, 1]} : vector<8x72xf32> to vector<8x8xf32>
    %cst_22 = arith.constant dense<0.000000e+00> : vector<8x768xf32>
    %34 = tpu.matmul %33, %32, %cst_22 {dimension_numbers = #tpu.dot_dimension_numbers<[1], [0], [0], [1], [0, 0, 1, 1], [], []>} : vector<8x8xf32>, vector<8x768xf32>, vector<8x768xf32> -> vector<8x768xf32>
    %35 = arith.addf %30, %34 : vector<8x768xf32>
    %c0_23 = arith.constant 0 : index
    %c0_24 = arith.constant 0 : index
    %c146 = arith.constant 146 : index
    %36 = vector.load %arg2[%c0_23, %c0_24, %c146] : memref<1x8x1024xf32, #tpu.memory_space<vmem>>, vector<1x8x768xf32>
    %37 = vector.shape_cast %36 : vector<1x8x768xf32> to vector<8x768xf32>
    %38 = vector.extract_strided_slice %1 {offsets = [0, 56], sizes = [8, 8], strides = [1, 1]} : vector<8x72xf32> to vector<8x8xf32>
    %cst_25 = arith.constant dense<0.000000e+00> : vector<8x768xf32>
    %39 = tpu.matmul %38, %37, %cst_25 {dimension_numbers = #tpu.dot_dimension_numbers<[1], [0], [0], [1], [0, 0, 1, 1], [], []>} : vector<8x8xf32>, vector<8x768xf32>, vector<8x768xf32> -> vector<8x768xf32>
    %40 = arith.addf %35, %39 : vector<8x768xf32>
    %c0_26 = arith.constant 0 : index
    %c0_27 = arith.constant 0 : index
    %c147 = arith.constant 147 : index
    %41 = vector.load %arg2[%c0_26, %c0_27, %c147] : memref<1x8x1024xf32, #tpu.memory_space<vmem>>, vector<1x8x768xf32>
    %42 = vector.shape_cast %41 : vector<1x8x768xf32> to vector<8x768xf32>
    %43 = vector.extract_strided_slice %1 {offsets = [0, 64], sizes = [8, 8], strides = [1, 1]} : vector<8x72xf32> to vector<8x8xf32>
    %cst_28 = arith.constant dense<0.000000e+00> : vector<8x768xf32>
    %44 = tpu.matmul %43, %42, %cst_28 {dimension_numbers = #tpu.dot_dimension_numbers<[1], [0], [0], [1], [0, 0, 1, 1], [], []>} : vector<8x8xf32>, vector<8x768xf32>, vector<8x768xf32> -> vector<8x768xf32>
    %45 = arith.addf %40, %44 : vector<8x768xf32>
    %c0_29 = arith.constant 0 : index
    %c0_30 = arith.constant 0 : index
    %46 = vector.load %arg5[%c0_29, %c0_30] : memref<8x1xf32, #tpu.memory_space<vmem>>, vector<8x1xf32>
    %47 = vector.broadcast %46 : vector<8x1xf32> to vector<8x768xf32>
    %48 = arith.addf %45, %47 : vector<8x768xf32>
    %cst_31 = arith.constant 0.000000e+00 : f32
    %49 = vector.broadcast %cst_31 : f32 to vector<8x768xf32>
    %50 = arith.maximumf %48, %49 : vector<8x768xf32>
    %51 = vector.broadcast %0 : vector<1x768xf32> to vector<8x768xf32>
    %52 = arith.mulf %51, %50 : vector<8x768xf32>
    %cst_32 = arith.constant 0.000000e+00 : f32
    %53 = vector.broadcast %cst_32 : f32 to vector<8x128xf32>
    %c0_33 = arith.constant 0 : index
    %c0_34 = arith.constant 0 : index
    %54 = vector.load %arg10[%c0_33, %c0_34] : memref<8x1024xf32, #tpu.memory_space<vmem>>, vector<8x128xf32>
    tpu.vector_store %arg10[%c0_33, %c0_34], %53 {strides = array<i32>} : memref<8x1024xf32, #tpu.memory_space<vmem>>, vector<8x128xf32>,
    %cst_35 = arith.constant 0.000000e+00 : f32
    %55 = vector.broadcast %cst_35 : f32 to vector<8x128xf32>
    %c0_36 = arith.constant 0 : index
    %c896 = arith.constant 896 : index
    %56 = vector.load %arg10[%c0_36, %c896] : memref<8x1024xf32, #tpu.memory_space<vmem>>, vector<8x128xf32>
    tpu.vector_store %arg10[%c0_36, %c896], %55 {strides = array<i32>} : memref<8x1024xf32, #tpu.memory_space<vmem>>, vector<8x128xf32>,
    %c0_37 = arith.constant 0 : index
    %c128_38 = arith.constant 128 : index
    %57 = vector.load %arg10[%c0_37, %c128_38] : memref<8x1024xf32, #tpu.memory_space<vmem>>, vector<8x768xf32>
    tpu.vector_store %arg10[%c0_37, %c128_38], %52 {strides = array<i32>} : memref<8x1024xf32, #tpu.memory_space<vmem>>, vector<8x768xf32>,
    %c0_39 = arith.constant 0 : index
    %c0_40 = arith.constant 0 : index
    %58 = vector.load %arg6[%c0_39, %c0_40] : memref<4x72xf32, #tpu.memory_space<vmem>>, vector<4x72xf32>
    %c0_41 = arith.constant 0 : index
    %c109_42 = arith.constant 109 : index
    %59 = vector.load %arg10[%c0_41, %c109_42] : memref<8x1024xf32, #tpu.memory_space<vmem>>, vector<8x768xf32>
    %60 = vector.extract_strided_slice %58 {offsets = [0, 0], sizes = [4, 8], strides = [1, 1]} : vector<4x72xf32> to vector<4x8xf32>
    %cst_43 = arith.constant dense<0.000000e+00> : vector<4x768xf32>
    %61 = tpu.matmul %60, %59, %cst_43 {dimension_numbers = #tpu.dot_dimension_numbers<[1], [0], [0], [1], [0, 0, 1, 1], [], []>} : vector<4x8xf32>, vector<8x768xf32>, vector<4x768xf32> -> vector<4x768xf32>
    %c0_44 = arith.constant 0 : index
    %c110_45 = arith.constant 110 : index
    %62 = vector.load %arg10[%c0_44, %c110_45] : memref<8x1024xf32, #tpu.memory_space<vmem>>, vector<8x768xf32>
    %63 = vector.extract_strided_slice %58 {offsets = [0, 8], sizes = [4, 8], strides = [1, 1]} : vector<4x72xf32> to vector<4x8xf32>
    %cst_46 = arith.constant dense<0.000000e+00> : vector<4x768xf32>
    %64 = tpu.matmul %63, %62, %cst_46 {dimension_numbers = #tpu.dot_dimension_numbers<[1], [0], [0], [1], [0, 0, 1, 1], [], []>} : vector<4x8xf32>, vector<8x768xf32>, vector<4x768xf32> -> vector<4x768xf32>
    %65 = arith.addf %61, %64 : vector<4x768xf32>
    %c0_47 = arith.constant 0 : index
    %c111_48 = arith.constant 111 : index
    %66 = vector.load %arg10[%c0_47, %c111_48] : memref<8x1024xf32, #tpu.memory_space<vmem>>, vector<8x768xf32>
    %67 = vector.extract_strided_slice %58 {offsets = [0, 16], sizes = [4, 8], strides = [1, 1]} : vector<4x72xf32> to vector<4x8xf32>
    %cst_49 = arith.constant dense<0.000000e+00> : vector<4x768xf32>
    %68 = tpu.matmul %67, %66, %cst_49 {dimension_numbers = #tpu.dot_dimension_numbers<[1], [0], [0], [1], [0, 0, 1, 1], [], []>} : vector<4x8xf32>, vector<8x768xf32>, vector<4x768xf32> -> vector<4x768xf32>
    %69 = arith.addf %65, %68 : vector<4x768xf32>
    %c0_50 = arith.constant 0 : index
    %c127_51 = arith.constant 127 : index
    %70 = vector.load %arg10[%c0_50, %c127_51] : memref<8x1024xf32, #tpu.memory_space<vmem>>, vector<8x768xf32>
    %71 = vector.extract_strided_slice %58 {offsets = [0, 24], sizes = [4, 8], strides = [1, 1]} : vector<4x72xf32> to vector<4x8xf32>
    %cst_52 = arith.constant dense<0.000000e+00> : vector<4x768xf32>
    %72 = tpu.matmul %71, %70, %cst_52 {dimension_numbers = #tpu.dot_dimension_numbers<[1], [0], [0], [1], [0, 0, 1, 1], [], []>} : vector<4x8xf32>, vector<8x768xf32>, vector<4x768xf32> -> vector<4x768xf32>
    %73 = arith.addf %69, %72 : vector<4x768xf32>
    %c0_53 = arith.constant 0 : index
    %c128_54 = arith.constant 128 : index
    %74 = vector.load %arg10[%c0_53, %c128_54] : memref<8x1024xf32, #tpu.memory_space<vmem>>, vector<8x768xf32>
    %75 = vector.extract_strided_slice %58 {offsets = [0, 32], sizes = [4, 8], strides = [1, 1]} : vector<4x72xf32> to vector<4x8xf32>
    %cst_55 = arith.constant dense<0.000000e+00> : vector<4x768xf32>
    %76 = tpu.matmul %75, %74, %cst_55 {dimension_numbers = #tpu.dot_dimension_numbers<[1], [0], [0], [1], [0, 0, 1, 1], [], []>} : vector<4x8xf32>, vector<8x768xf32>, vector<4x768xf32> -> vector<4x768xf32>
    %77 = arith.addf %73, %76 : vector<4x768xf32>
    %c0_56 = arith.constant 0 : index
    %c129_57 = arith.constant 129 : index
    %78 = vector.load %arg10[%c0_56, %c129_57] : memref<8x1024xf32, #tpu.memory_space<vmem>>, vector<8x768xf32>
    %79 = vector.extract_strided_slice %58 {offsets = [0, 40], sizes = [4, 8], strides = [1, 1]} : vector<4x72xf32> to vector<4x8xf32>
    %cst_58 = arith.constant dense<0.000000e+00> : vector<4x768xf32>
    %80 = tpu.matmul %79, %78, %cst_58 {dimension_numbers = #tpu.dot_dimension_numbers<[1], [0], [0], [1], [0, 0, 1, 1], [], []>} : vector<4x8xf32>, vector<8x768xf32>, vector<4x768xf32> -> vector<4x768xf32>
    %81 = arith.addf %77, %80 : vector<4x768xf32>
    %c0_59 = arith.constant 0 : index
    %c145_60 = arith.constant 145 : index
    %82 = vector.load %arg10[%c0_59, %c145_60] : memref<8x1024xf32, #tpu.memory_space<vmem>>, vector<8x768xf32>
    %83 = vector.extract_strided_slice %58 {offsets = [0, 48], sizes = [4, 8], strides = [1, 1]} : vector<4x72xf32> to vector<4x8xf32>
    %cst_61 = arith.constant dense<0.000000e+00> : vector<4x768xf32>
    %84 = tpu.matmul %83, %82, %cst_61 {dimension_numbers = #tpu.dot_dimension_numbers<[1], [0], [0], [1], [0, 0, 1, 1], [], []>} : vector<4x8xf32>, vector<8x768xf32>, vector<4x768xf32> -> vector<4x768xf32>
    %85 = arith.addf %81, %84 : vector<4x768xf32>
    %c0_62 = arith.constant 0 : index
    %c146_63 = arith.constant 146 : index
    %86 = vector.load %arg10[%c0_62, %c146_63] : memref<8x1024xf32, #tpu.memory_space<vmem>>, vector<8x768xf32>
    %87 = vector.extract_strided_slice %58 {offsets = [0, 56], sizes = [4, 8], strides = [1, 1]} : vector<4x72xf32> to vector<4x8xf32>
    %cst_64 = arith.constant dense<0.000000e+00> : vector<4x768xf32>
    %88 = tpu.matmul %87, %86, %cst_64 {dimension_numbers = #tpu.dot_dimension_numbers<[1], [0], [0], [1], [0, 0, 1, 1], [], []>} : vector<4x8xf32>, vector<8x768xf32>, vector<4x768xf32> -> vector<4x768xf32>
    %89 = arith.addf %85, %88 : vector<4x768xf32>
    %c0_65 = arith.constant 0 : index
    %c147_66 = arith.constant 147 : index
    %90 = vector.load %arg10[%c0_65, %c147_66] : memref<8x1024xf32, #tpu.memory_space<vmem>>, vector<8x768xf32>
    %91 = vector.extract_strided_slice %58 {offsets = [0, 64], sizes = [4, 8], strides = [1, 1]} : vector<4x72xf32> to vector<4x8xf32>
    %cst_67 = arith.constant dense<0.000000e+00> : vector<4x768xf32>
    %92 = tpu.matmul %91, %90, %cst_67 {dimension_numbers = #tpu.dot_dimension_numbers<[1], [0], [0], [1], [0, 0, 1, 1], [], []>} : vector<4x8xf32>, vector<8x768xf32>, vector<4x768xf32> -> vector<4x768xf32>
    %93 = arith.addf %89, %92 : vector<4x768xf32>
    %c0_68 = arith.constant 0 : index
    %c0_69 = arith.constant 0 : index
    %94 = vector.load %arg7[%c0_68, %c0_69] : memref<4x1xf32, #tpu.memory_space<vmem>>, vector<4x1xf32>
    %95 = vector.broadcast %94 : vector<4x1xf32> to vector<4x768xf32>
    %96 = arith.addf %93, %95 : vector<4x768xf32>
    %c0_70 = arith.constant 0 : index
    %c0_71 = arith.constant 0 : index
    %c0_72 = arith.constant 0 : index
    %97 = vector.load %arg3[%c0_70, %c0_71, %c0_72] : memref<1x4x768xf32, #tpu.memory_space<vmem>>, vector<1x4x768xf32>
    %98 = vector.shape_cast %97 : vector<1x4x768xf32> to vector<4x768xf32>
    %99 = arith.subf %96, %98 : vector<4x768xf32>
    %100 = vector.broadcast %0 : vector<1x768xf32> to vector<4x768xf32>
    %101 = arith.mulf %100, %99 : vector<4x768xf32>
    %c0_73 = arith.constant 0 : index
    %c0_74 = arith.constant 0 : index
    %102 = vector.load %arg8[%c0_73, %c0_74] : memref<8x4xf32, #tpu.memory_space<vmem>>, vector<8x4xf32>
    %cst_75 = arith.constant dense<0.000000e+00> : vector<8x768xf32>
    %103 = tpu.matmul %102, %101, %cst_75 {dimension_numbers = #tpu.dot_dimension_numbers<[1], [0], [0], [1], [0, 0, 1, 1], [], []>} : vector<8x4xf32>, vector<4x768xf32>, vector<8x768xf32> -> vector<8x768xf32>
    %104 = arith.mulf %103, %103 : vector<8x768xf32>
    %105 = vector.shape_cast %104 : vector<8x768xf32> to vector<1x8x768xf32>
    %cst_76 = arith.constant dense<0.000000e+00> : vector<1xf32>
    %106 = vector.multi_reduction <add>, %105, %cst_76 [1, 2] : vector<1x8x768xf32> to vector<1xf32>
    %107 = vector.shape_cast %106 : vector<1xf32> to vector<1x1x1xf32>
    %108 = vector.extract %107[0, 0, 0] : f32 from vector<1x1x1xf32>
    %cst_77 = arith.constant 1.22070313E-4 : f32
    %109 = arith.mulf %108, %cst_77 : f32
    %110 = vector.broadcast %109 : f32 to vector<1x1xf32>
    %c0_78 = arith.constant 0 : index
    %c0_79 = arith.constant 0 : index
    %c0_80 = arith.constant 0 : index
    %111 = vector.load %arg9[%c0_78, %c0_79, %c0_80] : memref<1x1x1xf32, #tpu.memory_space<vmem>>, vector<1x1x1xf32>
    %112 = vector.shape_cast %111 : vector<1x1x1xf32> to vector<1x1xf32>
    %113 = vector.shape_cast %110 : vector<1x1xf32> to vector<1x1x1xf32>
    tpu.vector_store %arg9[%c0_78, %c0_79, %c0_80], %113 {strides = array<i32>} : memref<1x1x1xf32, #tpu.memory_space<vmem>>, vector<1x1x1xf32>,
    return
  }
  func.func @transform_0(%arg0: i32) -> (i32, i32) {
    %c0_i32 = arith.constant 0 : i32
    %c0_i32_0 = arith.constant 0 : i32
    %c0_i32_1 = arith.constant 0 : i32
    return %c0_i32, %c0_i32_0 : i32, i32
  }
  func.func @transform_1(%arg0: i32) -> (i32, i32, i32) {
    %c0_i32 = arith.constant 0 : i32
    %c0_i32_0 = arith.constant 0 : i32
    %c0_i32_1 = arith.constant 0 : i32
    return %arg0, %c0_i32, %c0_i32_0 : i32, i32, i32
  }
  func.func @transform_2(%arg0: i32) -> (i32, i32, i32) {
    %c0_i32 = arith.constant 0 : i32
    %c0_i32_0 = arith.constant 0 : i32
    %c0_i32_1 = arith.constant 0 : i32
    return %arg0, %c0_i32, %c0_i32_0 : i32, i32, i32
  }
  func.func @transform_3(%arg0: i32) -> (i32, i32) {
    %c0_i32 = arith.constant 0 : i32
    %c0_i32_0 = arith.constant 0 : i32
    %c0_i32_1 = arith.constant 0 : i32
    return %c0_i32, %c0_i32_0 : i32, i32
  }
  func.func @transform_4(%arg0: i32) -> (i32, i32) {
    %c0_i32 = arith.constant 0 : i32
    %c0_i32_0 = arith.constant 0 : i32
    %c0_i32_1 = arith.constant 0 : i32
    return %c0_i32, %c0_i32_0 : i32, i32
  }
  func.func @transform_5(%arg0: i32) -> (i32, i32) {
    %c0_i32 = arith.constant 0 : i32
    %c0_i32_0 = arith.constant 0 : i32
    %c0_i32_1 = arith.constant 0 : i32
    return %c0_i32, %c0_i32_0 : i32, i32
  }
  func.func @transform_6(%arg0: i32) -> (i32, i32) {
    %c0_i32 = arith.constant 0 : i32
    %c0_i32_0 = arith.constant 0 : i32
    %c0_i32_1 = arith.constant 0 : i32
    return %c0_i32, %c0_i32_0 : i32, i32
  }
  func.func @transform_7(%arg0: i32) -> (i32, i32) {
    %c0_i32 = arith.constant 0 : i32
    %c0_i32_0 = arith.constant 0 : i32
    %c0_i32_1 = arith.constant 0 : i32
    return %c0_i32, %c0_i32_0 : i32, i32
  }
  func.func @transform_8(%arg0: i32) -> (i32, i32, i32) {
    %c0_i32 = arith.constant 0 : i32
    %c0_i32_0 = arith.constant 0 : i32
    %c0_i32_1 = arith.constant 0 : i32
    return %arg0, %c0_i32, %c0_i32_0 : i32, i32, i32
  }
}

</mosaic_0001>

<llo_original>
// kernel: fused_forward.1
$region0: #{fused_forward.1}
  #allocation0 [shape = 'u32[]', space=smem, size = 0x4, offset = 0x4, fixed_abs, tag = 'smem constant byte address 0x4 - core index']
  #allocation1 [shape = 'u32[72,128]{1,0:T(1,128)}', space=vmem, size = 0x9000, scoped, tag = 'internal scratch']
  #allocation2 [shape = 'f32[8,1024]{1,0:T(8,128)}', space=vmem, size = 0x8000, scoped, tag = 'scratch operand']
  %s0 = inlined_call_operand.vmem [shape: f32[1,768], index: 0, kind: input, shape index: {}]
  %s1 = inlined_call_operand.vmem [shape: f32[1,8,1024], index: 1, kind: input, shape index: {}]
  %s2 = inlined_call_operand.vmem [shape: f32[1,4,768], index: 2, kind: input, shape index: {}]
  %s3 = inlined_call_operand.vmem [shape: f32[8,72], index: 3, kind: input, shape index: {}]
  %s4 = inlined_call_operand.vmem [shape: f32[8,1], index: 4, kind: input, shape index: {}]
  %s5 = inlined_call_operand.vmem [shape: f32[4,72], index: 5, kind: input, shape index: {}]
  %s6 = inlined_call_operand.vmem [shape: f32[4,1], index: 6, kind: input, shape index: {}]
  %s7 = inlined_call_operand.vmem [shape: f32[8,4], index: 7, kind: input, shape index: {}]
  %s8 = inlined_call_operand.hbm [shape: f32[1,1,1], index: 8, kind: output, shape index: {}]
  %s9 = sld [smem:[#allocation0]]
  $region42: #{fused_forward.1} parent=0
    _
  %s11 = ssub.s32 1, %s9
  %s12 = scalar_select 0, %s11, %s9
  $region1: #{fused_forward.1} parent=0
    #allocation3 [shape = 'u8[512]{0}', space=vmem, size = 0x400, scoped, tag = 'output window, operand 0, single buffered']
    #allocation4 [shape = 's32[1]{0}', space=sflag, size = 0x4, scoped, tag = 'scoped memory for fused_forward.1']
    %13 = vsyncpa [#allocation4], 0
    // Predicated region
    $region2: #{fused_forward.1} parent=1 // pred_check
      _
    $region3: #{fused_forward.1} parent=1 // pred_check_branch
      %15 = sbr.rel (0) target = $region5
    $region4: #{fused_forward.1} parent=1 // pred_region
      _
    $region5: #{fused_forward.1} parent=1 // pred_fallthru
      _
    // Predicated region
    $region6: #{fused_forward.1} parent=1 // pred_check
      _
    $region7: #{fused_forward.1} parent=1 // pred_check_branch
      %17 = sbr.rel (0) target = $region9
    $region8: #{fused_forward.1} parent=1 // pred_region
      _
    $region9: #{fused_forward.1} parent=1 // pred_fallthru
      _
    // Predicated region
    $region10: #{fused_forward.1} parent=1 // pred_check
      _
    $region11: #{fused_forward.1} parent=1 // pred_check_branch
      %19 = sbr.rel (0) target = $region13
    $region12: #{fused_forward.1} parent=1 // pred_region
      _
    $region13: #{fused_forward.1} parent=1 // pred_fallthru
      _
    // Predicated region
    $region14: #{fused_forward.1} parent=1 // pred_check
      _
    $region15: #{fused_forward.1} parent=1 // pred_check_branch
      %21 = sbr.rel (0) target = $region17
    $region16: #{fused_forward.1} parent=1 // pred_region
      _
    $region17: #{fused_forward.1} parent=1 // pred_fallthru
      _
    // Predicated region
    $region18: #{fused_forward.1} parent=1 // pred_check
      _
    $region19: #{fused_forward.1} parent=1 // pred_check_branch
      %23 = sbr.rel (0) target = $region21
    $region20: #{fused_forward.1} parent=1 // pred_region
      _
    $region21: #{fused_forward.1} parent=1 // pred_fallthru
      _
    // Predicated region
    $region22: #{fused_forward.1} parent=1 // pred_check
      _
    $region23: #{fused_forward.1} parent=1 // pred_check_branch
      %25 = sbr.rel (0) target = $region25
    $region24: #{fused_forward.1} parent=1 // pred_region
      _
    $region25: #{fused_forward.1} parent=1 // pred_fallthru
      _
    // Predicated region
    $region26: #{fused_forward.1} parent=1 // pred_check
      _
    $region27: #{fused_forward.1} parent=1 // pred_check_branch
      %27 = sbr.rel (0) target = $region29
    $region28: #{fused_forward.1} parent=1 // pred_region
      _
    $region29: #{fused_forward.1} parent=1 // pred_fallthru
      _
    // Predicated region
    $region30: #{fused_forward.1} parent=1 // pred_check
      _
    $region31: #{fused_forward.1} parent=1 // pred_check_branch
      %29 = sbr.rel (0) target = $region33
    $region32: #{fused_forward.1} parent=1 // pred_region
      _
    $region33: #{fused_forward.1} parent=1 // pred_fallthru
      _
    %v30 = vld [vmem:[%s0] sm:$0x3f]
    %v31 = vld [vmem:[%s3] sm:$0xff]
    %v32 = vld [vmem:[%s1] sm:$0xff]
    %v33 = vld [vmem:[%s1 + $0x8] sm:$0xff]
    %v34 = vld [vmem:[%s1 + $0x10] sm:$0xff]
    %v35 = vld [vmem:[%s1 + $0x18] sm:$0xff]
    %v36 = vld [vmem:[%s1 + $0x20] sm:$0xff]
    %v37 = vld [vmem:[%s1 + $0x28] sm:$0xff]
    %v38 = vld [vmem:[%s1 + $0x30] sm:$0xff]
    %40 = vrot.lane.b32.xlu0 %v31, 120
    %v41 = vpop.permute.xlu0 %40
    %49 = vrot.lane.b32.xlu0 %v32, 18
    %v50 = vpop.permute.xlu0 %49
    %51 = vrot.lane.b32.xlu0 %v33, 18
    %v52 = vpop.permute.xlu0 %51
    %53 = vrot.lane.b32.xlu0 %v34, 18
    %v54 = vpop.permute.xlu0 %53
    %55 = vrot.lane.b32.xlu0 %v35, 18
    %v56 = vpop.permute.xlu0 %55
    %57 = vrot.lane.b32.xlu0 %v36, 18
    %v58 = vpop.permute.xlu0 %57
    %59 = vrot.lane.b32.xlu0 %v37, 18
    %v60 = vpop.permute.xlu0 %59
    %61 = vrot.lane.b32.xlu0 %v38, 18
    %v62 = vpop.permute.xlu0 %61
    %vm63 = vcmask 146432
    %v64 = vsel %vm63, %v50, %v52
    %v65 = vsel %vm63, %v52, %v54
    %v66 = vsel %vm63, %v54, %v56
    %v67 = vsel %vm63, %v56, %v58
    %v68 = vsel %vm63, %v58, %v60
    %v69 = vsel %vm63, %v60, %v62
    %vm76 = vcmask 64512
    %v77 = vsel %vm76, %v41, 0
    %79 = vmatpush.msra.mxu0 0.0
    %80 = vmatpush.msra.mxu0 0.0
    %81 = vmatpush.msra.mxu0 0.0
    %82 = vmatpush.msra.mxu0 0.0
    %83 = vmatpush.msra.mxu0 0.0
    %84 = vmatpush.msra.mxu0 0.0
    %85 = vmatpush.msra.mxu0 0.0
    %86 = vmatpush.msra.mxu0 0.0
    %87 = vmatpush.msra.mxu0 0.0
    %88 = vmatpush.msra.mxu0 0.0
    %89 = vmatpush.msra.mxu0 0.0
    %90 = vmatpush.msra.mxu0 0.0
    %91 = vmatpush.msra.mxu0 0.0
    %92 = vmatpush.msra.mxu0 0.0
    %93 = vmatpush.msra.mxu0 0.0
    %94 = vmatpush.msra.mxu0 %v64
    %95 = vmatmul.f32.gmra.mxu0 %v77
    %v96 = vpop.f32.mrf.mxu0
    %v97 = vadd.f32 0.0, %v96
    %98 = vdwg.mxu0
    %99 = vmatpush.msra.mxu0 0.0
    %100 = vmatpush.msra.mxu0 0.0
    %101 = vmatpush.msra.mxu0 0.0
    %102 = vmatpush.msra.mxu0 0.0
    %103 = vmatpush.msra.mxu0 0.0
    %104 = vmatpush.msra.mxu0 0.0
    %105 = vmatpush.msra.mxu0 0.0
    %106 = vmatpush.msra.mxu0 0.0
    %107 = vmatpush.msra.mxu0 0.0
    %108 = vmatpush.msra.mxu0 0.0
    %109 = vmatpush.msra.mxu0 0.0
    %110 = vmatpush.msra.mxu0 0.0
    %111 = vmatpush.msra.mxu0 0.0
    %112 = vmatpush.msra.mxu0 0.0
    %113 = vmatpush.msra.mxu0 0.0
    %114 = vmatpush.msra.mxu0 %v65
    %115 = vmatmul.f32.gmra.mxu0 %v77
    %v116 = vpop.f32.mrf.mxu0
    %v117 = vadd.f32 0.0, %v116
    %118 = vdwg.mxu0
    %119 = vmatpush.msra.mxu0 0.0
    %120 = vmatpush.msra.mxu0 0.0
    %121 = vmatpush.msra.mxu0 0.0
    %122 = vmatpush.msra.mxu0 0.0
    %123 = vmatpush.msra.mxu0 0.0
    %124 = vmatpush.msra.mxu0 0.0
    %125 = vmatpush.msra.mxu0 0.0
    %126 = vmatpush.msra.mxu0 0.0
    %127 = vmatpush.msra.mxu0 0.0
    %128 = vmatpush.msra.mxu0 0.0
    %129 = vmatpush.msra.mxu0 0.0
    %130 = vmatpush.msra.mxu0 0.0
    %131 = vmatpush.msra.mxu0 0.0
    %132 = vmatpush.msra.mxu0 0.0
    %133 = vmatpush.msra.mxu0 0.0
    %134 = vmatpush.msra.mxu0 %v66
    %135 = vmatmul.f32.gmra.mxu0 %v77
    %v136 = vpop.f32.mrf.mxu0
    %v137 = vadd.f32 0.0, %v136
    %138 = vdwg.mxu0
    %139 = vmatpush.msra.mxu0 0.0
    %140 = vmatpush.msra.mxu0 0.0
    %141 = vmatpush.msra.mxu0 0.0
    %142 = vmatpush.msra.mxu0 0.0
    %143 = vmatpush.msra.mxu0 0.0
    %144 = vmatpush.msra.mxu0 0.0
    %145 = vmatpush.msra.mxu0 0.0
    %146 = vmatpush.msra.mxu0 0.0
    %147 = vmatpush.msra.mxu0 0.0
    %148 = vmatpush.msra.mxu0 0.0
    %149 = vmatpush.msra.mxu0 0.0
    %150 = vmatpush.msra.mxu0 0.0
    %151 = vmatpush.msra.mxu0 0.0
    %152 = vmatpush.msra.mxu0 0.0
    %153 = vmatpush.msra.mxu0 0.0
    %154 = vmatpush.msra.mxu0 %v67
    %155 = vmatmul.f32.gmra.mxu0 %v77
    %v156 = vpop.f32.mrf.mxu0
    %v157 = vadd.f32 0.0, %v156
    %158 = vdwg.mxu0
    %159 = vmatpush.msra.mxu0 0.0
    %160 = vmatpush.msra.mxu0 0.0
    %161 = vmatpush.msra.mxu0 0.0
    %162 = vmatpush.msra.mxu0 0.0
    %163 = vmatpush.msra.mxu0 0.0
    %164 = vmatpush.msra.mxu0 0.0
    %165 = vmatpush.msra.mxu0 0.0
    %166 = vmatpush.msra.mxu0 0.0
    %167 = vmatpush.msra.mxu0 0.0
    %168 = vmatpush.msra.mxu0 0.0
    %169 = vmatpush.msra.mxu0 0.0
    %170 = vmatpush.msra.mxu0 0.0
    %171 = vmatpush.msra.mxu0 0.0
    %172 = vmatpush.msra.mxu0 0.0
    %173 = vmatpush.msra.mxu0 0.0
    %174 = vmatpush.msra.mxu0 %v68
    %175 = vmatmul.f32.gmra.mxu0 %v77
    %v176 = vpop.f32.mrf.mxu0
    %v177 = vadd.f32 0.0, %v176
    %178 = vdwg.mxu0
    %179 = vmatpush.msra.mxu0 0.0
    %180 = vmatpush.msra.mxu0 0.0
    %181 = vmatpush.msra.mxu0 0.0
    %182 = vmatpush.msra.mxu0 0.0
    %183 = vmatpush.msra.mxu0 0.0
    %184 = vmatpush.msra.mxu0 0.0
    %185 = vmatpush.msra.mxu0 0.0
    %186 = vmatpush.msra.mxu0 0.0
    %187 = vmatpush.msra.mxu0 0.0
    %188 = vmatpush.msra.mxu0 0.0
    %189 = vmatpush.msra.mxu0 0.0
    %190 = vmatpush.msra.mxu0 0.0
    %191 = vmatpush.msra.mxu0 0.0
    %192 = vmatpush.msra.mxu0 0.0
    %193 = vmatpush.msra.mxu0 0.0
    %194 = vmatpush.msra.mxu0 %v69
    %195 = vmatmul.f32.gmra.mxu0 %v77
    %v196 = vpop.f32.mrf.mxu0
    %v197 = vadd.f32 0.0, %v196
    %198 = vdwg.mxu0
    %199 = vrot.lane.b32.xlu0 %v32, 19
    %v200 = vpop.permute.xlu0 %199
    %201 = vrot.lane.b32.xlu0 %v33, 19
    %v202 = vpop.permute.xlu0 %201
    %203 = vrot.lane.b32.xlu0 %v34, 19
    %v204 = vpop.permute.xlu0 %203
    %205 = vrot.lane.b32.xlu0 %v35, 19
    %v206 = vpop.permute.xlu0 %205
    %207 = vrot.lane.b32.xlu0 %v36, 19
    %v208 = vpop.permute.xlu0 %207
    %209 = vrot.lane.b32.xlu0 %v37, 19
    %v210 = vpop.permute.xlu0 %209
    %211 = vrot.lane.b32.xlu0 %v38, 19
    %v212 = vpop.permute.xlu0 %211
    %vm213 = vcmask 154624
    %v214 = vsel %vm213, %v200, %v202
    %v215 = vsel %vm213, %v202, %v204
    %v216 = vsel %vm213, %v204, %v206
    %v217 = vsel %vm213, %v206, %v208
    %v218 = vsel %vm213, %v208, %v210
    %v219 = vsel %vm213, %v210, %v212
    %v226 = vsel %vm76, %v31, 0
    %228 = vmatpush.msra.mxu0 0.0
    %229 = vmatpush.msra.mxu0 0.0
    %230 = vmatpush.msra.mxu0 0.0
    %231 = vmatpush.msra.mxu0 0.0
    %232 = vmatpush.msra.mxu0 0.0
    %233 = vmatpush.msra.mxu0 0.0
    %234 = vmatpush.msra.mxu0 0.0
    %235 = vmatpush.msra.mxu0 0.0
    %236 = vmatpush.msra.mxu0 0.0
    %237 = vmatpush.msra.mxu0 0.0
    %238 = vmatpush.msra.mxu0 0.0
    %239 = vmatpush.msra.mxu0 0.0
    %240 = vmatpush.msra.mxu0 0.0
    %241 = vmatpush.msra.mxu0 0.0
    %242 = vmatpush.msra.mxu0 0.0
    %243 = vmatpush.msra.mxu0 %v214
    %244 = vmatmul.f32.gmra.mxu0 %v226
    %v245 = vpop.f32.mrf.mxu0
    %v246 = vadd.f32 %v97, %v245
    %247 = vdwg.mxu0
    %248 = vmatpush.msra.mxu0 0.0
    %249 = vmatpush.msra.mxu0 0.0
    %250 = vmatpush.msra.mxu0 0.0
    %251 = vmatpush.msra.mxu0 0.0
    %252 = vmatpush.msra.mxu0 0.0
    %253 = vmatpush.msra.mxu0 0.0
    %254 = vmatpush.msra.mxu0 0.0
    %255 = vmatpush.msra.mxu0 0.0
    %256 = vmatpush.msra.mxu0 0.0
    %257 = vmatpush.msra.mxu0 0.0
    %258 = vmatpush.msra.mxu0 0.0
    %259 = vmatpush.msra.mxu0 0.0
    %260 = vmatpush.msra.mxu0 0.0
    %261 = vmatpush.msra.mxu0 0.0
    %262 = vmatpush.msra.mxu0 0.0
    %263 = vmatpush.msra.mxu0 %v215
    %264 = vmatmul.f32.gmra.mxu0 %v226
    %v265 = vpop.f32.mrf.mxu0
    %v266 = vadd.f32 %v117, %v265
    %267 = vdwg.mxu0
    %268 = vmatpush.msra.mxu0 0.0
    %269 = vmatpush.msra.mxu0 0.0
    %270 = vmatpush.msra.mxu0 0.0
    %271 = vmatpush.msra.mxu0 0.0
    %272 = vmatpush.msra.mxu0 0.0
    %273 = vmatpush.msra.mxu0 0.0
    %274 = vmatpush.msra.mxu0 0.0
    %275 = vmatpush.msra.mxu0 0.0
    %276 = vmatpush.msra.mxu0 0.0
    %277 = vmatpush.msra.mxu0 0.0
    %278 = vmatpush.msra.mxu0 0.0
    %279 = vmatpush.msra.mxu0 0.0
    %280 = vmatpush.msra.mxu0 0.0
    %281 = vmatpush.msra.mxu0 0.0
    %282 = vmatpush.msra.mxu0 0.0
    %283 = vmatpush.msra.mxu0 %v216
    %284 = vmatmul.f32.gmra.mxu0 %v226
    %v285 = vpop.f32.mrf.mxu0
    %v286 = vadd.f32 %v137, %v285
    %287 = vdwg.mxu0
    %288 = vmatpush.msra.mxu0 0.0
    %289 = vmatpush.msra.mxu0 0.0
    %290 = vmatpush.msra.mxu0 0.0
    %291 = vmatpush.msra.mxu0 0.0
    %292 = vmatpush.msra.mxu0 0.0
    %293 = vmatpush.msra.mxu0 0.0
    %294 = vmatpush.msra.mxu0 0.0
    %295 = vmatpush.msra.mxu0 0.0
    %296 = vmatpush.msra.mxu0 0.0
    %297 = vmatpush.msra.mxu0 0.0
    %298 = vmatpush.msra.mxu0 0.0
    %299 = vmatpush.msra.mxu0 0.0
    %300 = vmatpush.msra.mxu0 0.0
    %301 = vmatpush.msra.mxu0 0.0
    %302 = vmatpush.msra.mxu0 0.0
    %303 = vmatpush.msra.mxu0 %v217
    %304 = vmatmul.f32.gmra.mxu0 %v226
    %v305 = vpop.f32.mrf.mxu0
    %v306 = vadd.f32 %v157, %v305
    %307 = vdwg.mxu0
    %308 = vmatpush.msra.mxu0 0.0
    %309 = vmatpush.msra.mxu0 0.0
    %310 = vmatpush.msra.mxu0 0.0
    %311 = vmatpush.msra.mxu0 0.0
    %312 = vmatpush.msra.mxu0 0.0
    %313 = vmatpush.msra.mxu0 0.0
    %314 = vmatpush.msra.mxu0 0.0
    %315 = vmatpush.msra.mxu0 0.0
    %316 = vmatpush.msra.mxu0 0.0
    %317 = vmatpush.msra.mxu0 0.0
    %318 = vmatpush.msra.mxu0 0.0
    %319 = vmatpush.msra.mxu0 0.0
    %320 = vmatpush.msra.mxu0 0.0
    %321 = vmatpush.msra.mxu0 0.0
    %322 = vmatpush.msra.mxu0 0.0
    %323 = vmatpush.msra.mxu0 %v218
    %324 = vmatmul.f32.gmra.mxu0 %v226
    %v325 = vpop.f32.mrf.mxu0
    %v326 = vadd.f32 %v177, %v325
    %327 = vdwg.mxu0
    %328 = vmatpush.msra.mxu0 0.0
    %329 = vmatpush.msra.mxu0 0.0
    %330 = vmatpush.msra.mxu0 0.0
    %331 = vmatpush.msra.mxu0 0.0
    %332 = vmatpush.msra.mxu0 0.0
    %333 = vmatpush.msra.mxu0 0.0
    %334 = vmatpush.msra.mxu0 0.0
    %335 = vmatpush.msra.mxu0 0.0
    %336 = vmatpush.msra.mxu0 0.0
    %337 = vmatpush.msra.mxu0 0.0
    %338 = vmatpush.msra.mxu0 0.0
    %339 = vmatpush.msra.mxu0 0.0
    %340 = vmatpush.msra.mxu0 0.0
    %341 = vmatpush.msra.mxu0 0.0
    %342 = vmatpush.msra.mxu0 0.0
    %343 = vmatpush.msra.mxu0 %v219
    %344 = vmatmul.f32.gmra.mxu0 %v226
    %v345 = vpop.f32.mrf.mxu0
    %v346 = vadd.f32 %v197, %v345
    %347 = vdwg.mxu0
    %348 = vrot.lane.b32.xlu0 %v31, 112
    %v349 = vpop.permute.xlu0 %348
    %350 = vrot.lane.b32.xlu0 %v32, 17
    %v351 = vpop.permute.xlu0 %350
    %352 = vrot.lane.b32.xlu0 %v33, 17
    %v353 = vpop.permute.xlu0 %352
    %354 = vrot.lane.b32.xlu0 %v34, 17
    %v355 = vpop.permute.xlu0 %354
    %356 = vrot.lane.b32.xlu0 %v35, 17
    %v357 = vpop.permute.xlu0 %356
    %358 = vrot.lane.b32.xlu0 %v36, 17
    %v359 = vpop.permute.xlu0 %358
    %360 = vrot.lane.b32.xlu0 %v37, 17
    %v361 = vpop.permute.xlu0 %360
    %362 = vrot.lane.b32.xlu0 %v38, 17
    %v363 = vpop.permute.xlu0 %362
    %vm364 = vcmask 138240
    %v365 = vsel %vm364, %v351, %v353
    %v366 = vsel %vm364, %v353, %v355
    %v367 = vsel %vm364, %v355, %v357
    %v368 = vsel %vm364, %v357, %v359
    %v369 = vsel %vm364, %v359, %v361
    %v370 = vsel %vm364, %v361, %v363
    %v377 = vsel %vm76, %v349, 0
    %379 = vmatpush.msra.mxu0 0.0
    %380 = vmatpush.msra.mxu0 0.0
    %381 = vmatpush.msra.mxu0 0.0
    %382 = vmatpush.msra.mxu0 0.0
    %383 = vmatpush.msra.mxu0 0.0
    %384 = vmatpush.msra.mxu0 0.0
    %385 = vmatpush.msra.mxu0 0.0
    %386 = vmatpush.msra.mxu0 0.0
    %387 = vmatpush.msra.mxu0 0.0
    %388 = vmatpush.msra.mxu0 0.0
    %389 = vmatpush.msra.mxu0 0.0
    %390 = vmatpush.msra.mxu0 0.0
    %391 = vmatpush.msra.mxu0 0.0
    %392 = vmatpush.msra.mxu0 0.0
    %393 = vmatpush.msra.mxu0 0.0
    %394 = vmatpush.msra.mxu0 %v365
    %395 = vmatmul.f32.gmra.mxu0 %v377
    %v396 = vpop.f32.mrf.mxu0
    %v397 = vadd.f32 0.0, %v396
    %398 = vdwg.mxu0
    %399 = vmatpush.msra.mxu0 0.0
    %400 = vmatpush.msra.mxu0 0.0
    %401 = vmatpush.msra.mxu0 0.0
    %402 = vmatpush.msra.mxu0 0.0
    %403 = vmatpush.msra.mxu0 0.0
    %404 = vmatpush.msra.mxu0 0.0
    %405 = vmatpush.msra.mxu0 0.0
    %406 = vmatpush.msra.mxu0 0.0
    %407 = vmatpush.msra.mxu0 0.0
    %408 = vmatpush.msra.mxu0 0.0
    %409 = vmatpush.msra.mxu0 0.0
    %410 = vmatpush.msra.mxu0 0.0
    %411 = vmatpush.msra.mxu0 0.0
    %412 = vmatpush.msra.mxu0 0.0
    %413 = vmatpush.msra.mxu0 0.0
    %414 = vmatpush.msra.mxu0 %v366
    %415 = vmatmul.f32.gmra.mxu0 %v377
    %v416 = vpop.f32.mrf.mxu0
    %v417 = vadd.f32 0.0, %v416
    %418 = vdwg.mxu0
    %419 = vmatpush.msra.mxu0 0.0
    %420 = vmatpush.msra.mxu0 0.0
    %421 = vmatpush.msra.mxu0 0.0
    %422 = vmatpush.msra.mxu0 0.0
    %423 = vmatpush.msra.mxu0 0.0
    %424 = vmatpush.msra.mxu0 0.0
    %425 = vmatpush.msra.mxu0 0.0
    %426 = vmatpush.msra.mxu0 0.0
    %427 = vmatpush.msra.mxu0 0.0
    %428 = vmatpush.msra.mxu0 0.0
    %429 = vmatpush.msra.mxu0 0.0
    %430 = vmatpush.msra.mxu0 0.0
    %431 = vmatpush.msra.mxu0 0.0
    %432 = vmatpush.msra.mxu0 0.0
    %433 = vmatpush.msra.mxu0 0.0
    %434 = vmatpush.msra.mxu0 %v367
    %435 = vmatmul.f32.gmra.mxu0 %v377
    %v436 = vpop.f32.mrf.mxu0
    %v437 = vadd.f32 0.0, %v436
    %438 = vdwg.mxu0
    %439 = vmatpush.msra.mxu0 0.0
    %440 = vmatpush.msra.mxu0 0.0
    %441 = vmatpush.msra.mxu0 0.0
    %442 = vmatpush.msra.mxu0 0.0
    %443 = vmatpush.msra.mxu0 0.0
    %444 = vmatpush.msra.mxu0 0.0
    %445 = vmatpush.msra.mxu0 0.0
    %446 = vmatpush.msra.mxu0 0.0
    %447 = vmatpush.msra.mxu0 0.0
    %448 = vmatpush.msra.mxu0 0.0
    %449 = vmatpush.msra.mxu0 0.0
    %450 = vmatpush.msra.mxu0 0.0
    %451 = vmatpush.msra.mxu0 0.0
    %452 = vmatpush.msra.mxu0 0.0
    %453 = vmatpush.msra.mxu0 0.0
    %454 = vmatpush.msra.mxu0 %v368
    %455 = vmatmul.f32.gmra.mxu0 %v377
    %v456 = vpop.f32.mrf.mxu0
    %v457 = vadd.f32 0.0, %v456
    %458 = vdwg.mxu0
    %459 = vmatpush.msra.mxu0 0.0
    %460 = vmatpush.msra.mxu0 0.0
    %461 = vmatpush.msra.mxu0 0.0
    %462 = vmatpush.msra.mxu0 0.0
    %463 = vmatpush.msra.mxu0 0.0
    %464 = vmatpush.msra.mxu0 0.0
    %465 = vmatpush.msra.mxu0 0.0
    %466 = vmatpush.msra.mxu0 0.0
    %467 = vmatpush.msra.mxu0 0.0
    %468 = vmatpush.msra.mxu0 0.0
    %469 = vmatpush.msra.mxu0 0.0
    %470 = vmatpush.msra.mxu0 0.0
    %471 = vmatpush.msra.mxu0 0.0
    %472 = vmatpush.msra.mxu0 0.0
    %473 = vmatpush.msra.mxu0 0.0
    %474 = vmatpush.msra.mxu0 %v369
    %475 = vmatmul.f32.gmra.mxu0 %v377
    %v476 = vpop.f32.mrf.mxu0
    %v477 = vadd.f32 0.0, %v476
    %478 = vdwg.mxu0
    %479 = vmatpush.msra.mxu0 0.0
    %480 = vmatpush.msra.mxu0 0.0
    %481 = vmatpush.msra.mxu0 0.0
    %482 = vmatpush.msra.mxu0 0.0
    %483 = vmatpush.msra.mxu0 0.0
    %484 = vmatpush.msra.mxu0 0.0
    %485 = vmatpush.msra.mxu0 0.0
    %486 = vmatpush.msra.mxu0 0.0
    %487 = vmatpush.msra.mxu0 0.0
    %488 = vmatpush.msra.mxu0 0.0
    %489 = vmatpush.msra.mxu0 0.0
    %490 = vmatpush.msra.mxu0 0.0
    %491 = vmatpush.msra.mxu0 0.0
    %492 = vmatpush.msra.mxu0 0.0
    %493 = vmatpush.msra.mxu0 0.0
    %494 = vmatpush.msra.mxu0 %v370
    %495 = vmatmul.f32.gmra.mxu0 %v377
    %v496 = vpop.f32.mrf.mxu0
    %v497 = vadd.f32 0.0, %v496
    %498 = vdwg.mxu0
    %v499 = vadd.f32 %v246, %v397
    %v500 = vadd.f32 %v266, %v417
    %v501 = vadd.f32 %v286, %v437
    %v502 = vadd.f32 %v306, %v457
    %v503 = vadd.f32 %v326, %v477
    %v504 = vadd.f32 %v346, %v497
    %505 = vrot.lane.b32.xlu0 %v31, 104
    %v506 = vpop.permute.xlu0 %505
    %507 = vrot.lane.b32.xlu0 %v32, 1
    %v508 = vpop.permute.xlu0 %507
    %509 = vrot.lane.b32.xlu0 %v33, 1
    %v510 = vpop.permute.xlu0 %509
    %511 = vrot.lane.b32.xlu0 %v34, 1
    %v512 = vpop.permute.xlu0 %511
    %513 = vrot.lane.b32.xlu0 %v35, 1
    %v514 = vpop.permute.xlu0 %513
    %515 = vrot.lane.b32.xlu0 %v36, 1
    %v516 = vpop.permute.xlu0 %515
    %517 = vrot.lane.b32.xlu0 %v37, 1
    %v518 = vpop.permute.xlu0 %517
    %519 = vrot.lane.b32.xlu0 %v38, 1
    %v520 = vpop.permute.xlu0 %519
    %vm521 = vcmask 7168
    %v522 = vsel %vm521, %v508, %v510
    %v523 = vsel %vm521, %v510, %v512
    %v524 = vsel %vm521, %v512, %v514
    %v525 = vsel %vm521, %v514, %v516
    %v526 = vsel %vm521, %v516, %v518
    %v527 = vsel %vm521, %v518, %v520
    %v534 = vsel %vm76, %v506, 0
    %536 = vmatpush.msra.mxu0 0.0
    %537 = vmatpush.msra.mxu0 0.0
    %538 = vmatpush.msra.mxu0 0.0
    %539 = vmatpush.msra.mxu0 0.0
    %540 = vmatpush.msra.mxu0 0.0
    %541 = vmatpush.msra.mxu0 0.0
    %542 = vmatpush.msra.mxu0 0.0
    %543 = vmatpush.msra.mxu0 0.0
    %544 = vmatpush.msra.mxu0 0.0
    %545 = vmatpush.msra.mxu0 0.0
    %546 = vmatpush.msra.mxu0 0.0
    %547 = vmatpush.msra.mxu0 0.0
    %548 = vmatpush.msra.mxu0 0.0
    %549 = vmatpush.msra.mxu0 0.0
    %550 = vmatpush.msra.mxu0 0.0
    %551 = vmatpush.msra.mxu0 %v522
    %552 = vmatmul.f32.gmra.mxu0 %v534
    %v553 = vpop.f32.mrf.mxu0
    %v554 = vadd.f32 0.0, %v553
    %555 = vdwg.mxu0
    %556 = vmatpush.msra.mxu0 0.0
    %557 = vmatpush.msra.mxu0 0.0
    %558 = vmatpush.msra.mxu0 0.0
    %559 = vmatpush.msra.mxu0 0.0
    %560 = vmatpush.msra.mxu0 0.0
    %561 = vmatpush.msra.mxu0 0.0
    %562 = vmatpush.msra.mxu0 0.0
    %563 = vmatpush.msra.mxu0 0.0
    %564 = vmatpush.msra.mxu0 0.0
    %565 = vmatpush.msra.mxu0 0.0
    %566 = vmatpush.msra.mxu0 0.0
    %567 = vmatpush.msra.mxu0 0.0
    %568 = vmatpush.msra.mxu0 0.0
    %569 = vmatpush.msra.mxu0 0.0
    %570 = vmatpush.msra.mxu0 0.0
    %571 = vmatpush.msra.mxu0 %v523
    %572 = vmatmul.f32.gmra.mxu0 %v534
    %v573 = vpop.f32.mrf.mxu0
    %v574 = vadd.f32 0.0, %v573
    %575 = vdwg.mxu0
    %576 = vmatpush.msra.mxu0 0.0
    %577 = vmatpush.msra.mxu0 0.0
    %578 = vmatpush.msra.mxu0 0.0
    %579 = vmatpush.msra.mxu0 0.0
    %580 = vmatpush.msra.mxu0 0.0
    %581 = vmatpush.msra.mxu0 0.0
    %582 = vmatpush.msra.mxu0 0.0
    %583 = vmatpush.msra.mxu0 0.0
    %584 = vmatpush.msra.mxu0 0.0
    %585 = vmatpush.msra.mxu0 0.0
    %586 = vmatpush.msra.mxu0 0.0
    %587 = vmatpush.msra.mxu0 0.0
    %588 = vmatpush.msra.mxu0 0.0
    %589 = vmatpush.msra.mxu0 0.0
    %590 = vmatpush.msra.mxu0 0.0
    %591 = vmatpush.msra.mxu0 %v524
    %592 = vmatmul.f32.gmra.mxu0 %v534
    %v593 = vpop.f32.mrf.mxu0
    %v594 = vadd.f32 0.0, %v593
    %595 = vdwg.mxu0
    %596 = vmatpush.msra.mxu0 0.0
    %597 = vmatpush.msra.mxu0 0.0
    %598 = vmatpush.msra.mxu0 0.0
    %599 = vmatpush.msra.mxu0 0.0
    %600 = vmatpush.msra.mxu0 0.0
    %601 = vmatpush.msra.mxu0 0.0
    %602 = vmatpush.msra.mxu0 0.0
    %603 = vmatpush.msra.mxu0 0.0
    %604 = vmatpush.msra.mxu0 0.0
    %605 = vmatpush.msra.mxu0 0.0
    %606 = vmatpush.msra.mxu0 0.0
    %607 = vmatpush.msra.mxu0 0.0
    %608 = vmatpush.msra.mxu0 0.0
    %609 = vmatpush.msra.mxu0 0.0
    %610 = vmatpush.msra.mxu0 0.0
    %611 = vmatpush.msra.mxu0 %v525
    %612 = vmatmul.f32.gmra.mxu0 %v534
    %v613 = vpop.f32.mrf.mxu0
    %v614 = vadd.f32 0.0, %v613
    %615 = vdwg.mxu0
    %616 = vmatpush.msra.mxu0 0.0
    %617 = vmatpush.msra.mxu0 0.0
    %618 = vmatpush.msra.mxu0 0.0
    %619 = vmatpush.msra.mxu0 0.0
    %620 = vmatpush.msra.mxu0 0.0
    %621 = vmatpush.msra.mxu0 0.0
    %622 = vmatpush.msra.mxu0 0.0
    %623 = vmatpush.msra.mxu0 0.0
    %624 = vmatpush.msra.mxu0 0.0
    %625 = vmatpush.msra.mxu0 0.0
    %626 = vmatpush.msra.mxu0 0.0
    %627 = vmatpush.msra.mxu0 0.0
    %628 = vmatpush.msra.mxu0 0.0
    %629 = vmatpush.msra.mxu0 0.0
    %630 = vmatpush.msra.mxu0 0.0
    %631 = vmatpush.msra.mxu0 %v526
    %632 = vmatmul.f32.gmra.mxu0 %v534
    %v633 = vpop.f32.mrf.mxu0
    %v634 = vadd.f32 0.0, %v633
    %635 = vdwg.mxu0
    %636 = vmatpush.msra.mxu0 0.0
    %637 = vmatpush.msra.mxu0 0.0
    %638 = vmatpush.msra.mxu0 0.0
    %639 = vmatpush.msra.mxu0 0.0
    %640 = vmatpush.msra.mxu0 0.0
    %641 = vmatpush.msra.mxu0 0.0
    %642 = vmatpush.msra.mxu0 0.0
    %643 = vmatpush.msra.mxu0 0.0
    %644 = vmatpush.msra.mxu0 0.0
    %645 = vmatpush.msra.mxu0 0.0
    %646 = vmatpush.msra.mxu0 0.0
    %647 = vmatpush.msra.mxu0 0.0
    %648 = vmatpush.msra.mxu0 0.0
    %649 = vmatpush.msra.mxu0 0.0
    %650 = vmatpush.msra.mxu0 0.0
    %651 = vmatpush.msra.mxu0 %v527
    %652 = vmatmul.f32.gmra.mxu0 %v534
    %v653 = vpop.f32.mrf.mxu0
    %v654 = vadd.f32 0.0, %v653
    %655 = vdwg.mxu0
    %v656 = vadd.f32 %v499, %v554
    %v657 = vadd.f32 %v500, %v574
    %v658 = vadd.f32 %v501, %v594
    %v659 = vadd.f32 %v502, %v614
    %v660 = vadd.f32 %v503, %v634
    %v661 = vadd.f32 %v504, %v654
    %662 = vrot.lane.b32.xlu0 %v31, 96
    %v663 = vpop.permute.xlu0 %662
    %v664 = vsel %vm76, %v663, 0
    %666 = vmatpush.msra.mxu0 0.0
    %667 = vmatpush.msra.mxu0 0.0
    %668 = vmatpush.msra.mxu0 0.0
    %669 = vmatpush.msra.mxu0 0.0
    %670 = vmatpush.msra.mxu0 0.0
    %671 = vmatpush.msra.mxu0 0.0
    %672 = vmatpush.msra.mxu0 0.0
    %673 = vmatpush.msra.mxu0 0.0
    %674 = vmatpush.msra.mxu0 0.0
    %675 = vmatpush.msra.mxu0 0.0
    %676 = vmatpush.msra.mxu0 0.0
    %677 = vmatpush.msra.mxu0 0.0
    %678 = vmatpush.msra.mxu0 0.0
    %679 = vmatpush.msra.mxu0 0.0
    %680 = vmatpush.msra.mxu0 0.0
    %681 = vmatpush.msra.mxu0 %v33
    %682 = vmatmul.f32.gmra.mxu0 %v664
    %v683 = vpop.f32.mrf.mxu0
    %v684 = vadd.f32 0.0, %v683
    %685 = vdwg.mxu0
    %686 = vmatpush.msra.mxu0 0.0
    %687 = vmatpush.msra.mxu0 0.0
    %688 = vmatpush.msra.mxu0 0.0
    %689 = vmatpush.msra.mxu0 0.0
    %690 = vmatpush.msra.mxu0 0.0
    %691 = vmatpush.msra.mxu0 0.0
    %692 = vmatpush.msra.mxu0 0.0
    %693 = vmatpush.msra.mxu0 0.0
    %694 = vmatpush.msra.mxu0 0.0
    %695 = vmatpush.msra.mxu0 0.0
    %696 = vmatpush.msra.mxu0 0.0
    %697 = vmatpush.msra.mxu0 0.0
    %698 = vmatpush.msra.mxu0 0.0
    %699 = vmatpush.msra.mxu0 0.0
    %700 = vmatpush.msra.mxu0 0.0
    %701 = vmatpush.msra.mxu0 %v34
    %702 = vmatmul.f32.gmra.mxu0 %v664
    %v703 = vpop.f32.mrf.mxu0
    %v704 = vadd.f32 0.0, %v703
    %705 = vdwg.mxu0
    %706 = vmatpush.msra.mxu0 0.0
    %707 = vmatpush.msra.mxu0 0.0
    %708 = vmatpush.msra.mxu0 0.0
    %709 = vmatpush.msra.mxu0 0.0
    %710 = vmatpush.msra.mxu0 0.0
    %711 = vmatpush.msra.mxu0 0.0
    %712 = vmatpush.msra.mxu0 0.0
    %713 = vmatpush.msra.mxu0 0.0
    %714 = vmatpush.msra.mxu0 0.0
    %715 = vmatpush.msra.mxu0 0.0
    %716 = vmatpush.msra.mxu0 0.0
    %717 = vmatpush.msra.mxu0 0.0
    %718 = vmatpush.msra.mxu0 0.0
    %719 = vmatpush.msra.mxu0 0.0
    %720 = vmatpush.msra.mxu0 0.0
    %721 = vmatpush.msra.mxu0 %v35
    %722 = vmatmul.f32.gmra.mxu0 %v664
    %v723 = vpop.f32.mrf.mxu0
    %v724 = vadd.f32 0.0, %v723
    %725 = vdwg.mxu0
    %726 = vmatpush.msra.mxu0 0.0
    %727 = vmatpush.msra.mxu0 0.0
    %728 = vmatpush.msra.mxu0 0.0
    %729 = vmatpush.msra.mxu0 0.0
    %730 = vmatpush.msra.mxu0 0.0
    %731 = vmatpush.msra.mxu0 0.0
    %732 = vmatpush.msra.mxu0 0.0
    %733 = vmatpush.msra.mxu0 0.0
    %734 = vmatpush.msra.mxu0 0.0
    %735 = vmatpush.msra.mxu0 0.0
    %736 = vmatpush.msra.mxu0 0.0
    %737 = vmatpush.msra.mxu0 0.0
    %738 = vmatpush.msra.mxu0 0.0
    %739 = vmatpush.msra.mxu0 0.0
    %740 = vmatpush.msra.mxu0 0.0
    %741 = vmatpush.msra.mxu0 %v36
    %742 = vmatmul.f32.gmra.mxu0 %v664
    %v743 = vpop.f32.mrf.mxu0
    %v744 = vadd.f32 0.0, %v743
    %745 = vdwg.mxu0
    %746 = vmatpush.msra.mxu0 0.0
    %747 = vmatpush.msra.mxu0 0.0
    %748 = vmatpush.msra.mxu0 0.0
    %749 = vmatpush.msra.mxu0 0.0
    %750 = vmatpush.msra.mxu0 0.0
    %751 = vmatpush.msra.mxu0 0.0
    %752 = vmatpush.msra.mxu0 0.0
    %753 = vmatpush.msra.mxu0 0.0
    %754 = vmatpush.msra.mxu0 0.0
    %755 = vmatpush.msra.mxu0 0.0
    %756 = vmatpush.msra.mxu0 0.0
    %757 = vmatpush.msra.mxu0 0.0
    %758 = vmatpush.msra.mxu0 0.0
    %759 = vmatpush.msra.mxu0 0.0
    %760 = vmatpush.msra.mxu0 0.0
    %761 = vmatpush.msra.mxu0 %v37
    %762 = vmatmul.f32.gmra.mxu0 %v664
    %v763 = vpop.f32.mrf.mxu0
    %v764 = vadd.f32 0.0, %v763
    %765 = vdwg.mxu0
    %766 = vmatpush.msra.mxu0 0.0
    %767 = vmatpush.msra.mxu0 0.0
    %768 = vmatpush.msra.mxu0 0.0
    %769 = vmatpush.msra.mxu0 0.0
    %770 = vmatpush.msra.mxu0 0.0
    %771 = vmatpush.msra.mxu0 0.0
    %772 = vmatpush.msra.mxu0 0.0
    %773 = vmatpush.msra.mxu0 0.0
    %774 = vmatpush.msra.mxu0 0.0
    %775 = vmatpush.msra.mxu0 0.0
    %776 = vmatpush.msra.mxu0 0.0
    %777 = vmatpush.msra.mxu0 0.0
    %778 = vmatpush.msra.mxu0 0.0
    %779 = vmatpush.msra.mxu0 0.0
    %780 = vmatpush.msra.mxu0 0.0
    %781 = vmatpush.msra.mxu0 %v38
    %782 = vmatmul.f32.gmra.mxu0 %v664
    %v783 = vpop.f32.mrf.mxu0
    %v784 = vadd.f32 0.0, %v783
    %785 = vdwg.mxu0
    %v786 = vadd.f32 %v656, %v684
    %v787 = vadd.f32 %v657, %v704
    %v788 = vadd.f32 %v658, %v724
    %v789 = vadd.f32 %v659, %v744
    %v790 = vadd.f32 %v660, %v764
    %v791 = vadd.f32 %v661, %v784
    %v792 = vld [vmem:[%s1 + $0x8] sm:$0xff]
    %v793 = vld [vmem:[%s1 + $0x10] sm:$0xff]
    %v794 = vld [vmem:[%s1 + $0x18] sm:$0xff]
    %v795 = vld [vmem:[%s1 + $0x20] sm:$0xff]
    %v796 = vld [vmem:[%s1 + $0x28] sm:$0xff]
    %v797 = vld [vmem:[%s1 + $0x30] sm:$0xff]
    %v798 = vld [vmem:[%s1 + $0x38] sm:$0xff]
    %799 = vrot.lane.b32.xlu0 %v31, 88
    %v800 = vpop.permute.xlu0 %799
    %808 = vrot.lane.b32.xlu0 %v792, 127
    %v809 = vpop.permute.xlu0 %808
    %810 = vrot.lane.b32.xlu0 %v793, 127
    %v811 = vpop.permute.xlu0 %810
    %812 = vrot.lane.b32.xlu0 %v794, 127
    %v813 = vpop.permute.xlu0 %812
    %814 = vrot.lane.b32.xlu0 %v795, 127
    %v815 = vpop.permute.xlu0 %814
    %816 = vrot.lane.b32.xlu0 %v796, 127
    %v817 = vpop.permute.xlu0 %816
    %818 = vrot.lane.b32.xlu0 %v797, 127
    %v819 = vpop.permute.xlu0 %818
    %820 = vrot.lane.b32.xlu0 %v798, 127
    %v821 = vpop.permute.xlu0 %820
    %vm822 = vcmask 1039360
    %v823 = vsel %vm822, %v809, %v811
    %v824 = vsel %vm822, %v811, %v813
    %v825 = vsel %vm822, %v813, %v815
    %v826 = vsel %vm822, %v815, %v817
    %v827 = vsel %vm822, %v817, %v819
    %v828 = vsel %vm822, %v819, %v821
    %v835 = vsel %vm76, %v800, 0
    %837 = vmatpush.msra.mxu0 0.0
    %838 = vmatpush.msra.mxu0 0.0
    %839 = vmatpush.msra.mxu0 0.0
    %840 = vmatpush.msra.mxu0 0.0
    %841 = vmatpush.msra.mxu0 0.0
    %842 = vmatpush.msra.mxu0 0.0
    %843 = vmatpush.msra.mxu0 0.0
    %844 = vmatpush.msra.mxu0 0.0
    %845 = vmatpush.msra.mxu0 0.0
    %846 = vmatpush.msra.mxu0 0.0
    %847 = vmatpush.msra.mxu0 0.0
    %848 = vmatpush.msra.mxu0 0.0
    %849 = vmatpush.msra.mxu0 0.0
    %850 = vmatpush.msra.mxu0 0.0
    %851 = vmatpush.msra.mxu0 0.0
    %852 = vmatpush.msra.mxu0 %v823
    %853 = vmatmul.f32.gmra.mxu0 %v835
    %v854 = vpop.f32.mrf.mxu0
    %v855 = vadd.f32 0.0, %v854
    %856 = vdwg.mxu0
    %857 = vmatpush.msra.mxu0 0.0
    %858 = vmatpush.msra.mxu0 0.0
    %859 = vmatpush.msra.mxu0 0.0
    %860 = vmatpush.msra.mxu0 0.0
    %861 = vmatpush.msra.mxu0 0.0
    %862 = vmatpush.msra.mxu0 0.0
    %863 = vmatpush.msra.mxu0 0.0
    %864 = vmatpush.msra.mxu0 0.0
    %865 = vmatpush.msra.mxu0 0.0
    %866 = vmatpush.msra.mxu0 0.0
    %867 = vmatpush.msra.mxu0 0.0
    %868 = vmatpush.msra.mxu0 0.0
    %869 = vmatpush.msra.mxu0 0.0
    %870 = vmatpush.msra.mxu0 0.0
    %871 = vmatpush.msra.mxu0 0.0
    %872 = vmatpush.msra.mxu0 %v824
    %873 = vmatmul.f32.gmra.mxu0 %v835
    %v874 = vpop.f32.mrf.mxu0
    %v875 = vadd.f32 0.0, %v874
    %876 = vdwg.mxu0
    %877 = vmatpush.msra.mxu0 0.0
    %878 = vmatpush.msra.mxu0 0.0
    %879 = vmatpush.msra.mxu0 0.0
    %880 = vmatpush.msra.mxu0 0.0
    %881 = vmatpush.msra.mxu0 0.0
    %882 = vmatpush.msra.mxu0 0.0
    %883 = vmatpush.msra.mxu0 0.0
    %884 = vmatpush.msra.mxu0 0.0
    %885 = vmatpush.msra.mxu0 0.0
    %886 = vmatpush.msra.mxu0 0.0
    %887 = vmatpush.msra.mxu0 0.0
    %888 = vmatpush.msra.mxu0 0.0
    %889 = vmatpush.msra.mxu0 0.0
    %890 = vmatpush.msra.mxu0 0.0
    %891 = vmatpush.msra.mxu0 0.0
    %892 = vmatpush.msra.mxu0 %v825
    %893 = vmatmul.f32.gmra.mxu0 %v835
    %v894 = vpop.f32.mrf.mxu0
    %v895 = vadd.f32 0.0, %v894
    %896 = vdwg.mxu0
    %897 = vmatpush.msra.mxu0 0.0
    %898 = vmatpush.msra.mxu0 0.0
    %899 = vmatpush.msra.mxu0 0.0
    %900 = vmatpush.msra.mxu0 0.0
    %901 = vmatpush.msra.mxu0 0.0
    %902 = vmatpush.msra.mxu0 0.0
    %903 = vmatpush.msra.mxu0 0.0
    %904 = vmatpush.msra.mxu0 0.0
    %905 = vmatpush.msra.mxu0 0.0
    %906 = vmatpush.msra.mxu0 0.0
    %907 = vmatpush.msra.mxu0 0.0
    %908 = vmatpush.msra.mxu0 0.0
    %909 = vmatpush.msra.mxu0 0.0
    %910 = vmatpush.msra.mxu0 0.0
    %911 = vmatpush.msra.mxu0 0.0
    %912 = vmatpush.msra.mxu0 %v826
    %913 = vmatmul.f32.gmra.mxu0 %v835
    %v914 = vpop.f32.mrf.mxu0
    %v915 = vadd.f32 0.0, %v914
    %916 = vdwg.mxu0
    %917 = vmatpush.msra.mxu0 0.0
    %918 = vmatpush.msra.mxu0 0.0
    %919 = vmatpush.msra.mxu0 0.0
    %920 = vmatpush.msra.mxu0 0.0
    %921 = vmatpush.msra.mxu0 0.0
    %922 = vmatpush.msra.mxu0 0.0
    %923 = vmatpush.msra.mxu0 0.0
    %924 = vmatpush.msra.mxu0 0.0
    %925 = vmatpush.msra.mxu0 0.0
    %926 = vmatpush.msra.mxu0 0.0
    %927 = vmatpush.msra.mxu0 0.0
    %928 = vmatpush.msra.mxu0 0.0
    %929 = vmatpush.msra.mxu0 0.0
    %930 = vmatpush.msra.mxu0 0.0
    %931 = vmatpush.msra.mxu0 0.0
    %932 = vmatpush.msra.mxu0 %v827
    %933 = vmatmul.f32.gmra.mxu0 %v835
    %v934 = vpop.f32.mrf.mxu0
    %v935 = vadd.f32 0.0, %v934
    %936 = vdwg.mxu0
    %937 = vmatpush.msra.mxu0 0.0
    %938 = vmatpush.msra.mxu0 0.0
    %939 = vmatpush.msra.mxu0 0.0
    %940 = vmatpush.msra.mxu0 0.0
    %941 = vmatpush.msra.mxu0 0.0
    %942 = vmatpush.msra.mxu0 0.0
    %943 = vmatpush.msra.mxu0 0.0
    %944 = vmatpush.msra.mxu0 0.0
    %945 = vmatpush.msra.mxu0 0.0
    %946 = vmatpush.msra.mxu0 0.0
    %947 = vmatpush.msra.mxu0 0.0
    %948 = vmatpush.msra.mxu0 0.0
    %949 = vmatpush.msra.mxu0 0.0
    %950 = vmatpush.msra.mxu0 0.0
    %951 = vmatpush.msra.mxu0 0.0
    %952 = vmatpush.msra.mxu0 %v828
    %953 = vmatmul.f32.gmra.mxu0 %v835
    %v954 = vpop.f32.mrf.mxu0
    %v955 = vadd.f32 0.0, %v954
    %956 = vdwg.mxu0
    %v957 = vadd.f32 %v786, %v855
    %v958 = vadd.f32 %v787, %v875
    %v959 = vadd.f32 %v788, %v895
    %v960 = vadd.f32 %v789, %v915
    %v961 = vadd.f32 %v790, %v935
    %v962 = vadd.f32 %v791, %v955
    %963 = vrot.lane.b32.xlu0 %v31, 80
    %v964 = vpop.permute.xlu0 %963
    %965 = vrot.lane.b32.xlu0 %v792, 111
    %v966 = vpop.permute.xlu0 %965
    %967 = vrot.lane.b32.xlu0 %v793, 111
    %v968 = vpop.permute.xlu0 %967
    %969 = vrot.lane.b32.xlu0 %v794, 111
    %v970 = vpop.permute.xlu0 %969
    %971 = vrot.lane.b32.xlu0 %v795, 111
    %v972 = vpop.permute.xlu0 %971
    %973 = vrot.lane.b32.xlu0 %v796, 111
    %v974 = vpop.permute.xlu0 %973
    %975 = vrot.lane.b32.xlu0 %v797, 111
    %v976 = vpop.permute.xlu0 %975
    %977 = vrot.lane.b32.xlu0 %v798, 111
    %v978 = vpop.permute.xlu0 %977
    %vm979 = vcmask 908288
    %v980 = vsel %vm979, %v966, %v968
    %v981 = vsel %vm979, %v968, %v970
    %v982 = vsel %vm979, %v970, %v972
    %v983 = vsel %vm979, %v972, %v974
    %v984 = vsel %vm979, %v974, %v976
    %v985 = vsel %vm979, %v976, %v978
    %v992 = vsel %vm76, %v964, 0
    %994 = vmatpush.msra.mxu0 0.0
    %995 = vmatpush.msra.mxu0 0.0
    %996 = vmatpush.msra.mxu0 0.0
    %997 = vmatpush.msra.mxu0 0.0
    %998 = vmatpush.msra.mxu0 0.0
    %999 = vmatpush.msra.mxu0 0.0
    %1000 = vmatpush.msra.mxu0 0.0
    %1001 = vmatpush.msra.mxu0 0.0
    %1002 = vmatpush.msra.mxu0 0.0
    %1003 = vmatpush.msra.mxu0 0.0
    %1004 = vmatpush.msra.mxu0 0.0
    %1005 = vmatpush.msra.mxu0 0.0
    %1006 = vmatpush.msra.mxu0 0.0
    %1007 = vmatpush.msra.mxu0 0.0
    %1008 = vmatpush.msra.mxu0 0.0
    %1009 = vmatpush.msra.mxu0 %v980
    %1010 = vmatmul.f32.gmra.mxu0 %v992
    %v1011 = vpop.f32.mrf.mxu0
    %v1012 = vadd.f32 0.0, %v1011
    %1013 = vdwg.mxu0
    %1014 = vmatpush.msra.mxu0 0.0
    %1015 = vmatpush.msra.mxu0 0.0
    %1016 = vmatpush.msra.mxu0 0.0
    %1017 = vmatpush.msra.mxu0 0.0
    %1018 = vmatpush.msra.mxu0 0.0
    %1019 = vmatpush.msra.mxu0 0.0
    %1020 = vmatpush.msra.mxu0 0.0
    %1021 = vmatpush.msra.mxu0 0.0
    %1022 = vmatpush.msra.mxu0 0.0
    %1023 = vmatpush.msra.mxu0 0.0
    %1024 = vmatpush.msra.mxu0 0.0
    %1025 = vmatpush.msra.mxu0 0.0
    %1026 = vmatpush.msra.mxu0 0.0
    %1027 = vmatpush.msra.mxu0 0.0
    %1028 = vmatpush.msra.mxu0 0.0
    %1029 = vmatpush.msra.mxu0 %v981
    %1030 = vmatmul.f32.gmra.mxu0 %v992
    %v1031 = vpop.f32.mrf.mxu0
    %v1032 = vadd.f32 0.0, %v1031
    %1033 = vdwg.mxu0
    %1034 = vmatpush.msra.mxu0 0.0
    %1035 = vmatpush.msra.mxu0 0.0
    %1036 = vmatpush.msra.mxu0 0.0
    %1037 = vmatpush.msra.mxu0 0.0
    %1038 = vmatpush.msra.mxu0 0.0
    %1039 = vmatpush.msra.mxu0 0.0
    %1040 = vmatpush.msra.mxu0 0.0
    %1041 = vmatpush.msra.mxu0 0.0
    %1042 = vmatpush.msra.mxu0 0.0
    %1043 = vmatpush.msra.mxu0 0.0
    %1044 = vmatpush.msra.mxu0 0.0
    %1045 = vmatpush.msra.mxu0 0.0
    %1046 = vmatpush.msra.mxu0 0.0
    %1047 = vmatpush.msra.mxu0 0.0
    %1048 = vmatpush.msra.mxu0 0.0
    %1049 = vmatpush.msra.mxu0 %v982
    %1050 = vmatmul.f32.gmra.mxu0 %v992
    %v1051 = vpop.f32.mrf.mxu0
    %v1052 = vadd.f32 0.0, %v1051
    %1053 = vdwg.mxu0
    %1054 = vmatpush.msra.mxu0 0.0
    %1055 = vmatpush.msra.mxu0 0.0
    %1056 = vmatpush.msra.mxu0 0.0
    %1057 = vmatpush.msra.mxu0 0.0
    %1058 = vmatpush.msra.mxu0 0.0
    %1059 = vmatpush.msra.mxu0 0.0
    %1060 = vmatpush.msra.mxu0 0.0
    %1061 = vmatpush.msra.mxu0 0.0
    %1062 = vmatpush.msra.mxu0 0.0
    %1063 = vmatpush.msra.mxu0 0.0
    %1064 = vmatpush.msra.mxu0 0.0
    %1065 = vmatpush.msra.mxu0 0.0
    %1066 = vmatpush.msra.mxu0 0.0
    %1067 = vmatpush.msra.mxu0 0.0
    %1068 = vmatpush.msra.mxu0 0.0
    %1069 = vmatpush.msra.mxu0 %v983
    %1070 = vmatmul.f32.gmra.mxu0 %v992
    %v1071 = vpop.f32.mrf.mxu0
    %v1072 = vadd.f32 0.0, %v1071
    %1073 = vdwg.mxu0
    %1074 = vmatpush.msra.mxu0 0.0
    %1075 = vmatpush.msra.mxu0 0.0
    %1076 = vmatpush.msra.mxu0 0.0
    %1077 = vmatpush.msra.mxu0 0.0
    %1078 = vmatpush.msra.mxu0 0.0
    %1079 = vmatpush.msra.mxu0 0.0
    %1080 = vmatpush.msra.mxu0 0.0
    %1081 = vmatpush.msra.mxu0 0.0
    %1082 = vmatpush.msra.mxu0 0.0
    %1083 = vmatpush.msra.mxu0 0.0
    %1084 = vmatpush.msra.mxu0 0.0
    %1085 = vmatpush.msra.mxu0 0.0
    %1086 = vmatpush.msra.mxu0 0.0
    %1087 = vmatpush.msra.mxu0 0.0
    %1088 = vmatpush.msra.mxu0 0.0
    %1089 = vmatpush.msra.mxu0 %v984
    %1090 = vmatmul.f32.gmra.mxu0 %v992
    %v1091 = vpop.f32.mrf.mxu0
    %v1092 = vadd.f32 0.0, %v1091
    %1093 = vdwg.mxu0
    %1094 = vmatpush.msra.mxu0 0.0
    %1095 = vmatpush.msra.mxu0 0.0
    %1096 = vmatpush.msra.mxu0 0.0
    %1097 = vmatpush.msra.mxu0 0.0
    %1098 = vmatpush.msra.mxu0 0.0
    %1099 = vmatpush.msra.mxu0 0.0
    %1100 = vmatpush.msra.mxu0 0.0
    %1101 = vmatpush.msra.mxu0 0.0
    %1102 = vmatpush.msra.mxu0 0.0
    %1103 = vmatpush.msra.mxu0 0.0
    %1104 = vmatpush.msra.mxu0 0.0
    %1105 = vmatpush.msra.mxu0 0.0
    %1106 = vmatpush.msra.mxu0 0.0
    %1107 = vmatpush.msra.mxu0 0.0
    %1108 = vmatpush.msra.mxu0 0.0
    %1109 = vmatpush.msra.mxu0 %v985
    %1110 = vmatmul.f32.gmra.mxu0 %v992
    %v1111 = vpop.f32.mrf.mxu0
    %v1112 = vadd.f32 0.0, %v1111
    %1113 = vdwg.mxu0
    %v1114 = vadd.f32 %v957, %v1012
    %v1115 = vadd.f32 %v958, %v1032
    %v1116 = vadd.f32 %v959, %v1052
    %v1117 = vadd.f32 %v960, %v1072
    %v1118 = vadd.f32 %v961, %v1092
    %v1119 = vadd.f32 %v962, %v1112
    %1120 = vrot.lane.b32.xlu0 %v31, 72
    %v1121 = vpop.permute.xlu0 %1120
    %1122 = vrot.lane.b32.xlu0 %v792, 110
    %v1123 = vpop.permute.xlu0 %1122
    %1124 = vrot.lane.b32.xlu0 %v793, 110
    %v1125 = vpop.permute.xlu0 %1124
    %1126 = vrot.lane.b32.xlu0 %v794, 110
    %v1127 = vpop.permute.xlu0 %1126
    %1128 = vrot.lane.b32.xlu0 %v795, 110
    %v1129 = vpop.permute.xlu0 %1128
    %1130 = vrot.lane.b32.xlu0 %v796, 110
    %v1131 = vpop.permute.xlu0 %1130
    %1132 = vrot.lane.b32.xlu0 %v797, 110
    %v1133 = vpop.permute.xlu0 %1132
    %1134 = vrot.lane.b32.xlu0 %v798, 110
    %v1135 = vpop.permute.xlu0 %1134
    %vm1136 = vcmask 900096
    %v1137 = vsel %vm1136, %v1123, %v1125
    %v1138 = vsel %vm1136, %v1125, %v1127
    %v1139 = vsel %vm1136, %v1127, %v1129
    %v1140 = vsel %vm1136, %v1129, %v1131
    %v1141 = vsel %vm1136, %v1131, %v1133
    %v1142 = vsel %vm1136, %v1133, %v1135
    %v1149 = vsel %vm76, %v1121, 0
    %1151 = vmatpush.msra.mxu0 0.0
    %1152 = vmatpush.msra.mxu0 0.0
    %1153 = vmatpush.msra.mxu0 0.0
    %1154 = vmatpush.msra.mxu0 0.0
    %1155 = vmatpush.msra.mxu0 0.0
    %1156 = vmatpush.msra.mxu0 0.0
    %1157 = vmatpush.msra.mxu0 0.0
    %1158 = vmatpush.msra.mxu0 0.0
    %1159 = vmatpush.msra.mxu0 0.0
    %1160 = vmatpush.msra.mxu0 0.0
    %1161 = vmatpush.msra.mxu0 0.0
    %1162 = vmatpush.msra.mxu0 0.0
    %1163 = vmatpush.msra.mxu0 0.0
    %1164 = vmatpush.msra.mxu0 0.0
    %1165 = vmatpush.msra.mxu0 0.0
    %1166 = vmatpush.msra.mxu0 %v1137
    %1167 = vmatmul.f32.gmra.mxu0 %v1149
    %v1168 = vpop.f32.mrf.mxu0
    %v1169 = vadd.f32 0.0, %v1168
    %1170 = vdwg.mxu0
    %1171 = vmatpush.msra.mxu0 0.0
    %1172 = vmatpush.msra.mxu0 0.0
    %1173 = vmatpush.msra.mxu0 0.0
    %1174 = vmatpush.msra.mxu0 0.0
    %1175 = vmatpush.msra.mxu0 0.0
    %1176 = vmatpush.msra.mxu0 0.0
    %1177 = vmatpush.msra.mxu0 0.0
    %1178 = vmatpush.msra.mxu0 0.0
    %1179 = vmatpush.msra.mxu0 0.0
    %1180 = vmatpush.msra.mxu0 0.0
    %1181 = vmatpush.msra.mxu0 0.0
    %1182 = vmatpush.msra.mxu0 0.0
    %1183 = vmatpush.msra.mxu0 0.0
    %1184 = vmatpush.msra.mxu0 0.0
    %1185 = vmatpush.msra.mxu0 0.0
    %1186 = vmatpush.msra.mxu0 %v1138
    %1187 = vmatmul.f32.gmra.mxu0 %v1149
    %v1188 = vpop.f32.mrf.mxu0
    %v1189 = vadd.f32 0.0, %v1188
    %1190 = vdwg.mxu0
    %1191 = vmatpush.msra.mxu0 0.0
    %1192 = vmatpush.msra.mxu0 0.0
    %1193 = vmatpush.msra.mxu0 0.0
    %1194 = vmatpush.msra.mxu0 0.0
    %1195 = vmatpush.msra.mxu0 0.0
    %1196 = vmatpush.msra.mxu0 0.0
    %1197 = vmatpush.msra.mxu0 0.0
    %1198 = vmatpush.msra.mxu0 0.0
    %1199 = vmatpush.msra.mxu0 0.0
    %1200 = vmatpush.msra.mxu0 0.0
    %1201 = vmatpush.msra.mxu0 0.0
    %1202 = vmatpush.msra.mxu0 0.0
    %1203 = vmatpush.msra.mxu0 0.0
    %1204 = vmatpush.msra.mxu0 0.0
    %1205 = vmatpush.msra.mxu0 0.0
    %1206 = vmatpush.msra.mxu0 %v1139
    %1207 = vmatmul.f32.gmra.mxu0 %v1149
    %v1208 = vpop.f32.mrf.mxu0
    %v1209 = vadd.f32 0.0, %v1208
    %1210 = vdwg.mxu0
    %1211 = vmatpush.msra.mxu0 0.0
    %1212 = vmatpush.msra.mxu0 0.0
    %1213 = vmatpush.msra.mxu0 0.0
    %1214 = vmatpush.msra.mxu0 0.0
    %1215 = vmatpush.msra.mxu0 0.0
    %1216 = vmatpush.msra.mxu0 0.0
    %1217 = vmatpush.msra.mxu0 0.0
    %1218 = vmatpush.msra.mxu0 0.0
    %1219 = vmatpush.msra.mxu0 0.0
    %1220 = vmatpush.msra.mxu0 0.0
    %1221 = vmatpush.msra.mxu0 0.0
    %1222 = vmatpush.msra.mxu0 0.0
    %1223 = vmatpush.msra.mxu0 0.0
    %1224 = vmatpush.msra.mxu0 0.0
    %1225 = vmatpush.msra.mxu0 0.0
    %1226 = vmatpush.msra.mxu0 %v1140
    %1227 = vmatmul.f32.gmra.mxu0 %v1149
    %v1228 = vpop.f32.mrf.mxu0
    %v1229 = vadd.f32 0.0, %v1228
    %1230 = vdwg.mxu0
    %1231 = vmatpush.msra.mxu0 0.0
    %1232 = vmatpush.msra.mxu0 0.0
    %1233 = vmatpush.msra.mxu0 0.0
    %1234 = vmatpush.msra.mxu0 0.0
    %1235 = vmatpush.msra.mxu0 0.0
    %1236 = vmatpush.msra.mxu0 0.0
    %1237 = vmatpush.msra.mxu0 0.0
    %1238 = vmatpush.msra.mxu0 0.0
    %1239 = vmatpush.msra.mxu0 0.0
    %1240 = vmatpush.msra.mxu0 0.0
    %1241 = vmatpush.msra.mxu0 0.0
    %1242 = vmatpush.msra.mxu0 0.0
    %1243 = vmatpush.msra.mxu0 0.0
    %1244 = vmatpush.msra.mxu0 0.0
    %1245 = vmatpush.msra.mxu0 0.0
    %1246 = vmatpush.msra.mxu0 %v1141
    %1247 = vmatmul.f32.gmra.mxu0 %v1149
    %v1248 = vpop.f32.mrf.mxu0
    %v1249 = vadd.f32 0.0, %v1248
    %1250 = vdwg.mxu0
    %1251 = vmatpush.msra.mxu0 0.0
    %1252 = vmatpush.msra.mxu0 0.0
    %1253 = vmatpush.msra.mxu0 0.0
    %1254 = vmatpush.msra.mxu0 0.0
    %1255 = vmatpush.msra.mxu0 0.0
    %1256 = vmatpush.msra.mxu0 0.0
    %1257 = vmatpush.msra.mxu0 0.0
    %1258 = vmatpush.msra.mxu0 0.0
    %1259 = vmatpush.msra.mxu0 0.0
    %1260 = vmatpush.msra.mxu0 0.0
    %1261 = vmatpush.msra.mxu0 0.0
    %1262 = vmatpush.msra.mxu0 0.0
    %1263 = vmatpush.msra.mxu0 0.0
    %1264 = vmatpush.msra.mxu0 0.0
    %1265 = vmatpush.msra.mxu0 0.0
    %1266 = vmatpush.msra.mxu0 %v1142
    %1267 = vmatmul.f32.gmra.mxu0 %v1149
    %v1268 = vpop.f32.mrf.mxu0
    %v1269 = vadd.f32 0.0, %v1268
    %1270 = vdwg.mxu0
    %v1271 = vadd.f32 %v1114, %v1169
    %v1272 = vadd.f32 %v1115, %v1189
    %v1273 = vadd.f32 %v1116, %v1209
    %v1274 = vadd.f32 %v1117, %v1229
    %v1275 = vadd.f32 %v1118, %v1249
    %v1276 = vadd.f32 %v1119, %v1269
    %1277 = vrot.lane.b32.xlu0 %v31, 64
    %v1278 = vpop.permute.xlu0 %1277
    %1279 = vrot.lane.b32.xlu0 %v792, 109
    %v1280 = vpop.permute.xlu0 %1279
    %1281 = vrot.lane.b32.xlu0 %v793, 109
    %v1282 = vpop.permute.xlu0 %1281
    %1283 = vrot.lane.b32.xlu0 %v794, 109
    %v1284 = vpop.permute.xlu0 %1283
    %1285 = vrot.lane.b32.xlu0 %v795, 109
    %v1286 = vpop.permute.xlu0 %1285
    %1287 = vrot.lane.b32.xlu0 %v796, 109
    %v1288 = vpop.permute.xlu0 %1287
    %1289 = vrot.lane.b32.xlu0 %v797, 109
    %v1290 = vpop.permute.xlu0 %1289
    %1291 = vrot.lane.b32.xlu0 %v798, 109
    %v1292 = vpop.permute.xlu0 %1291
    %vm1293 = vcmask 891904
    %v1294 = vsel %vm1293, %v1280, %v1282
    %v1295 = vsel %vm1293, %v1282, %v1284
    %v1296 = vsel %vm1293, %v1284, %v1286
    %v1297 = vsel %vm1293, %v1286, %v1288
    %v1298 = vsel %vm1293, %v1288, %v1290
    %v1299 = vsel %vm1293, %v1290, %v1292
    %v1306 = vsel %vm76, %v1278, 0
    %1308 = vmatpush.msra.mxu0 0.0
    %1309 = vmatpush.msra.mxu0 0.0
    %1310 = vmatpush.msra.mxu0 0.0
    %1311 = vmatpush.msra.mxu0 0.0
    %1312 = vmatpush.msra.mxu0 0.0
    %1313 = vmatpush.msra.mxu0 0.0
    %1314 = vmatpush.msra.mxu0 0.0
    %1315 = vmatpush.msra.mxu0 0.0
    %1316 = vmatpush.msra.mxu0 0.0
    %1317 = vmatpush.msra.mxu0 0.0
    %1318 = vmatpush.msra.mxu0 0.0
    %1319 = vmatpush.msra.mxu0 0.0
    %1320 = vmatpush.msra.mxu0 0.0
    %1321 = vmatpush.msra.mxu0 0.0
    %1322 = vmatpush.msra.mxu0 0.0
    %1323 = vmatpush.msra.mxu0 %v1294
    %1324 = vmatmul.f32.gmra.mxu0 %v1306
    %v1325 = vpop.f32.mrf.mxu0
    %v1326 = vadd.f32 0.0, %v1325
    %1327 = vdwg.mxu0
    %1328 = vmatpush.msra.mxu0 0.0
    %1329 = vmatpush.msra.mxu0 0.0
    %1330 = vmatpush.msra.mxu0 0.0
    %1331 = vmatpush.msra.mxu0 0.0
    %1332 = vmatpush.msra.mxu0 0.0
    %1333 = vmatpush.msra.mxu0 0.0
    %1334 = vmatpush.msra.mxu0 0.0
    %1335 = vmatpush.msra.mxu0 0.0
    %1336 = vmatpush.msra.mxu0 0.0
    %1337 = vmatpush.msra.mxu0 0.0
    %1338 = vmatpush.msra.mxu0 0.0
    %1339 = vmatpush.msra.mxu0 0.0
    %1340 = vmatpush.msra.mxu0 0.0
    %1341 = vmatpush.msra.mxu0 0.0
    %1342 = vmatpush.msra.mxu0 0.0
    %1343 = vmatpush.msra.mxu0 %v1295
    %1344 = vmatmul.f32.gmra.mxu0 %v1306
    %v1345 = vpop.f32.mrf.mxu0
    %v1346 = vadd.f32 0.0, %v1345
    %1347 = vdwg.mxu0
    %1348 = vmatpush.msra.mxu0 0.0
    %1349 = vmatpush.msra.mxu0 0.0
    %1350 = vmatpush.msra.mxu0 0.0
    %1351 = vmatpush.msra.mxu0 0.0
    %1352 = vmatpush.msra.mxu0 0.0
    %1353 = vmatpush.msra.mxu0 0.0
    %1354 = vmatpush.msra.mxu0 0.0
    %1355 = vmatpush.msra.mxu0 0.0
    %1356 = vmatpush.msra.mxu0 0.0
    %1357 = vmatpush.msra.mxu0 0.0
    %1358 = vmatpush.msra.mxu0 0.0
    %1359 = vmatpush.msra.mxu0 0.0
    %1360 = vmatpush.msra.mxu0 0.0
    %1361 = vmatpush.msra.mxu0 0.0
    %1362 = vmatpush.msra.mxu0 0.0
    %1363 = vmatpush.msra.mxu0 %v1296
    %1364 = vmatmul.f32.gmra.mxu0 %v1306
    %v1365 = vpop.f32.mrf.mxu0
    %v1366 = vadd.f32 0.0, %v1365
    %1367 = vdwg.mxu0
    %1368 = vmatpush.msra.mxu0 0.0
    %1369 = vmatpush.msra.mxu0 0.0
    %1370 = vmatpush.msra.mxu0 0.0
    %1371 = vmatpush.msra.mxu0 0.0
    %1372 = vmatpush.msra.mxu0 0.0
    %1373 = vmatpush.msra.mxu0 0.0
    %1374 = vmatpush.msra.mxu0 0.0
    %1375 = vmatpush.msra.mxu0 0.0
    %1376 = vmatpush.msra.mxu0 0.0
    %1377 = vmatpush.msra.mxu0 0.0
    %1378 = vmatpush.msra.mxu0 0.0
    %1379 = vmatpush.msra.mxu0 0.0
    %1380 = vmatpush.msra.mxu0 0.0
    %1381 = vmatpush.msra.mxu0 0.0
    %1382 = vmatpush.msra.mxu0 0.0
    %1383 = vmatpush.msra.mxu0 %v1297
    %1384 = vmatmul.f32.gmra.mxu0 %v1306
    %v1385 = vpop.f32.mrf.mxu0
    %v1386 = vadd.f32 0.0, %v1385
    %1387 = vdwg.mxu0
    %1388 = vmatpush.msra.mxu0 0.0
    %1389 = vmatpush.msra.mxu0 0.0
    %1390 = vmatpush.msra.mxu0 0.0
    %1391 = vmatpush.msra.mxu0 0.0
    %1392 = vmatpush.msra.mxu0 0.0
    %1393 = vmatpush.msra.mxu0 0.0
    %1394 = vmatpush.msra.mxu0 0.0
    %1395 = vmatpush.msra.mxu0 0.0
    %1396 = vmatpush.msra.mxu0 0.0
    %1397 = vmatpush.msra.mxu0 0.0
    %1398 = vmatpush.msra.mxu0 0.0
    %1399 = vmatpush.msra.mxu0 0.0
    %1400 = vmatpush.msra.mxu0 0.0
    %1401 = vmatpush.msra.mxu0 0.0
    %1402 = vmatpush.msra.mxu0 0.0
    %1403 = vmatpush.msra.mxu0 %v1298
    %1404 = vmatmul.f32.gmra.mxu0 %v1306
    %v1405 = vpop.f32.mrf.mxu0
    %v1406 = vadd.f32 0.0, %v1405
    %1407 = vdwg.mxu0
    %1408 = vmatpush.msra.mxu0 0.0
    %1409 = vmatpush.msra.mxu0 0.0
    %1410 = vmatpush.msra.mxu0 0.0
    %1411 = vmatpush.msra.mxu0 0.0
    %1412 = vmatpush.msra.mxu0 0.0
    %1413 = vmatpush.msra.mxu0 0.0
    %1414 = vmatpush.msra.mxu0 0.0
    %1415 = vmatpush.msra.mxu0 0.0
    %1416 = vmatpush.msra.mxu0 0.0
    %1417 = vmatpush.msra.mxu0 0.0
    %1418 = vmatpush.msra.mxu0 0.0
    %1419 = vmatpush.msra.mxu0 0.0
    %1420 = vmatpush.msra.mxu0 0.0
    %1421 = vmatpush.msra.mxu0 0.0
    %1422 = vmatpush.msra.mxu0 0.0
    %1423 = vmatpush.msra.mxu0 %v1299
    %1424 = vmatmul.f32.gmra.mxu0 %v1306
    %v1425 = vpop.f32.mrf.mxu0
    %v1426 = vadd.f32 0.0, %v1425
    %1427 = vdwg.mxu0
    %v1428 = vadd.f32 %v1271, %v1326
    %v1429 = vadd.f32 %v1272, %v1346
    %v1430 = vadd.f32 %v1273, %v1366
    %v1431 = vadd.f32 %v1274, %v1386
    %v1432 = vadd.f32 %v1275, %v1406
    %v1433 = vadd.f32 %v1276, %v1426
    %v1434 = vld [vmem:[%s4] sm:$0xff]
    %1436 = vset.pattern.permute.xlu0 0
    %1437 = vperm.xlu0 %1436, %v1434
    %v1438 = vpop.permute.xlu0 %1437
    %v1440 = vadd.f32 %v1428, %v1438
    %v1441 = vadd.f32 %v1429, %v1438
    %v1442 = vadd.f32 %v1430, %v1438
    %v1443 = vadd.f32 %v1431, %v1438
    %v1444 = vadd.f32 %v1432, %v1438
    %v1445 = vadd.f32 %v1433, %v1438
    %v1446 = vmax.f32 %v1440, 0.0
    %v1447 = vmax.f32 %v1441, 0.0
    %v1448 = vmax.f32 %v1442, 0.0
    %v1449 = vmax.f32 %v1443, 0.0
    %v1450 = vmax.f32 %v1444, 0.0
    %v1451 = vmax.f32 %v1445, 0.0
    %v1453 = vperm.slane %v30, 0
    %v1454 = vperm.slane %v30, 1
    %v1455 = vperm.slane %v30, 2
    %v1456 = vperm.slane %v30, 3
    %v1457 = vperm.slane %v30, 4
    %v1458 = vperm.slane %v30, 5
    %v1465 = vmul.f32 %v1453, %v1446
    %v1466 = vmul.f32 %v1454, %v1447
    %v1467 = vmul.f32 %v1455, %v1448
    %v1468 = vmul.f32 %v1456, %v1449
    %v1469 = vmul.f32 %v1457, %v1450
    %v1470 = vmul.f32 %v1458, %v1451
    %1471 = vst [vmem:[#allocation2] sm:$0xff] 0.0
    %1472 = vst [vmem:[#allocation2 + $0x38] sm:$0xff] 0.0
    %1473 = vst [vmem:[#allocation2 + $0x8] sm:$0xff] %v1465
    %1474 = vst [vmem:[#allocation2 + $0x10] sm:$0xff] %v1466
    %1475 = vst [vmem:[#allocation2 + $0x18] sm:$0xff] %v1467
    %1476 = vst [vmem:[#allocation2 + $0x20] sm:$0xff] %v1468
    %1477 = vst [vmem:[#allocation2 + $0x28] sm:$0xff] %v1469
    %1478 = vst [vmem:[#allocation2 + $0x30] sm:$0xff] %v1470
    %v1479 = vld [vmem:[%s5] sm:$0xf]
    %v1480 = vld [vmem:[#allocation2] sm:$0xff]
    %v1481 = vld [vmem:[#allocation2 + $0x8] sm:$0xff]
    %v1482 = vld [vmem:[#allocation2 + $0x10] sm:$0xff]
    %v1483 = vld [vmem:[#allocation2 + $0x18] sm:$0xff]
    %v1484 = vld [vmem:[#allocation2 + $0x20] sm:$0xff]
    %v1485 = vld [vmem:[#allocation2 + $0x28] sm:$0xff]
    %v1486 = vld [vmem:[#allocation2 + $0x30] sm:$0xff]
    %1488 = vrot.lane.b32.xlu0 %v1479, 120
    %v1489 = vpop.permute.xlu0 %1488
    %1497 = vrot.lane.b32.xlu0 %v1480, 18
    %v1498 = vpop.permute.xlu0 %1497
    %1499 = vrot.lane.b32.xlu0 %v1481, 18
    %v1500 = vpop.permute.xlu0 %1499
    %1501 = vrot.lane.b32.xlu0 %v1482, 18
    %v1502 = vpop.permute.xlu0 %1501
    %1503 = vrot.lane.b32.xlu0 %v1483, 18
    %v1504 = vpop.permute.xlu0 %1503
    %1505 = vrot.lane.b32.xlu0 %v1484, 18
    %v1506 = vpop.permute.xlu0 %1505
    %1507 = vrot.lane.b32.xlu0 %v1485, 18
    %v1508 = vpop.permute.xlu0 %1507
    %1509 = vrot.lane.b32.xlu0 %v1486, 18
    %v1510 = vpop.permute.xlu0 %1509
    %v1511 = vsel %vm63, %v1498, %v1500
    %v1512 = vsel %vm63, %v1500, %v1502
    %v1513 = vsel %vm63, %v1502, %v1504
    %v1514 = vsel %vm63, %v1504, %v1506
    %v1515 = vsel %vm63, %v1506, %v1508
    %v1516 = vsel %vm63, %v1508, %v1510
    %v1523 = vsel %vm76, %v1489, 0
    %1525 = vmatpush.msra.mxu0 0.0
    %1526 = vmatpush.msra.mxu0 0.0
    %1527 = vmatpush.msra.mxu0 0.0
    %1528 = vmatpush.msra.mxu0 0.0
    %1529 = vmatpush.msra.mxu0 0.0
    %1530 = vmatpush.msra.mxu0 0.0
    %1531 = vmatpush.msra.mxu0 0.0
    %1532 = vmatpush.msra.mxu0 0.0
    %1533 = vmatpush.msra.mxu0 0.0
    %1534 = vmatpush.msra.mxu0 0.0
    %1535 = vmatpush.msra.mxu0 0.0
    %1536 = vmatpush.msra.mxu0 0.0
    %1537 = vmatpush.msra.mxu0 0.0
    %1538 = vmatpush.msra.mxu0 0.0
    %1539 = vmatpush.msra.mxu0 0.0
    %1540 = vmatpush.msra.mxu0 %v1511
    %1541 = vmatmul.f32.gmra.mxu0 %v1523
    %v1542 = vpop.f32.mrf.mxu0
    %v1543 = vadd.f32 0.0, %v1542
    %1544 = vdwg.mxu0
    %1545 = vmatpush.msra.mxu0 0.0
    %1546 = vmatpush.msra.mxu0 0.0
    %1547 = vmatpush.msra.mxu0 0.0
    %1548 = vmatpush.msra.mxu0 0.0
    %1549 = vmatpush.msra.mxu0 0.0
    %1550 = vmatpush.msra.mxu0 0.0
    %1551 = vmatpush.msra.mxu0 0.0
    %1552 = vmatpush.msra.mxu0 0.0
    %1553 = vmatpush.msra.mxu0 0.0
    %1554 = vmatpush.msra.mxu0 0.0
    %1555 = vmatpush.msra.mxu0 0.0
    %1556 = vmatpush.msra.mxu0 0.0
    %1557 = vmatpush.msra.mxu0 0.0
    %1558 = vmatpush.msra.mxu0 0.0
    %1559 = vmatpush.msra.mxu0 0.0
    %1560 = vmatpush.msra.mxu0 %v1512
    %1561 = vmatmul.f32.gmra.mxu0 %v1523
    %v1562 = vpop.f32.mrf.mxu0
    %v1563 = vadd.f32 0.0, %v1562
    %1564 = vdwg.mxu0
    %1565 = vmatpush.msra.mxu0 0.0
    %1566 = vmatpush.msra.mxu0 0.0
    %1567 = vmatpush.msra.mxu0 0.0
    %1568 = vmatpush.msra.mxu0 0.0
    %1569 = vmatpush.msra.mxu0 0.0
    %1570 = vmatpush.msra.mxu0 0.0
    %1571 = vmatpush.msra.mxu0 0.0
    %1572 = vmatpush.msra.mxu0 0.0
    %1573 = vmatpush.msra.mxu0 0.0
    %1574 = vmatpush.msra.mxu0 0.0
    %1575 = vmatpush.msra.mxu0 0.0
    %1576 = vmatpush.msra.mxu0 0.0
    %1577 = vmatpush.msra.mxu0 0.0
    %1578 = vmatpush.msra.mxu0 0.0
    %1579 = vmatpush.msra.mxu0 0.0
    %1580 = vmatpush.msra.mxu0 %v1513
    %1581 = vmatmul.f32.gmra.mxu0 %v1523
    %v1582 = vpop.f32.mrf.mxu0
    %v1583 = vadd.f32 0.0, %v1582
    %1584 = vdwg.mxu0
    %1585 = vmatpush.msra.mxu0 0.0
    %1586 = vmatpush.msra.mxu0 0.0
    %1587 = vmatpush.msra.mxu0 0.0
    %1588 = vmatpush.msra.mxu0 0.0
    %1589 = vmatpush.msra.mxu0 0.0
    %1590 = vmatpush.msra.mxu0 0.0
    %1591 = vmatpush.msra.mxu0 0.0
    %1592 = vmatpush.msra.mxu0 0.0
    %1593 = vmatpush.msra.mxu0 0.0
    %1594 = vmatpush.msra.mxu0 0.0
    %1595 = vmatpush.msra.mxu0 0.0
    %1596 = vmatpush.msra.mxu0 0.0
    %1597 = vmatpush.msra.mxu0 0.0
    %1598 = vmatpush.msra.mxu0 0.0
    %1599 = vmatpush.msra.mxu0 0.0
    %1600 = vmatpush.msra.mxu0 %v1514
    %1601 = vmatmul.f32.gmra.mxu0 %v1523
    %v1602 = vpop.f32.mrf.mxu0
    %v1603 = vadd.f32 0.0, %v1602
    %1604 = vdwg.mxu0
    %1605 = vmatpush.msra.mxu0 0.0
    %1606 = vmatpush.msra.mxu0 0.0
    %1607 = vmatpush.msra.mxu0 0.0
    %1608 = vmatpush.msra.mxu0 0.0
    %1609 = vmatpush.msra.mxu0 0.0
    %1610 = vmatpush.msra.mxu0 0.0
    %1611 = vmatpush.msra.mxu0 0.0
    %1612 = vmatpush.msra.mxu0 0.0
    %1613 = vmatpush.msra.mxu0 0.0
    %1614 = vmatpush.msra.mxu0 0.0
    %1615 = vmatpush.msra.mxu0 0.0
    %1616 = vmatpush.msra.mxu0 0.0
    %1617 = vmatpush.msra.mxu0 0.0
    %1618 = vmatpush.msra.mxu0 0.0
    %1619 = vmatpush.msra.mxu0 0.0
    %1620 = vmatpush.msra.mxu0 %v1515
    %1621 = vmatmul.f32.gmra.mxu0 %v1523
    %v1622 = vpop.f32.mrf.mxu0
    %v1623 = vadd.f32 0.0, %v1622
    %1624 = vdwg.mxu0
    %1625 = vmatpush.msra.mxu0 0.0
    %1626 = vmatpush.msra.mxu0 0.0
    %1627 = vmatpush.msra.mxu0 0.0
    %1628 = vmatpush.msra.mxu0 0.0
    %1629 = vmatpush.msra.mxu0 0.0
    %1630 = vmatpush.msra.mxu0 0.0
    %1631 = vmatpush.msra.mxu0 0.0
    %1632 = vmatpush.msra.mxu0 0.0
    %1633 = vmatpush.msra.mxu0 0.0
    %1634 = vmatpush.msra.mxu0 0.0
    %1635 = vmatpush.msra.mxu0 0.0
    %1636 = vmatpush.msra.mxu0 0.0
    %1637 = vmatpush.msra.mxu0 0.0
    %1638 = vmatpush.msra.mxu0 0.0
    %1639 = vmatpush.msra.mxu0 0.0
    %1640 = vmatpush.msra.mxu0 %v1516
    %1641 = vmatmul.f32.gmra.mxu0 %v1523
    %v1642 = vpop.f32.mrf.mxu0
    %v1643 = vadd.f32 0.0, %v1642
    %1644 = vdwg.mxu0
    %1645 = vrot.lane.b32.xlu0 %v1480, 19
    %v1646 = vpop.permute.xlu0 %1645
    %1647 = vrot.lane.b32.xlu0 %v1481, 19
    %v1648 = vpop.permute.xlu0 %1647
    %1649 = vrot.lane.b32.xlu0 %v1482, 19
    %v1650 = vpop.permute.xlu0 %1649
    %1651 = vrot.lane.b32.xlu0 %v1483, 19
    %v1652 = vpop.permute.xlu0 %1651
    %1653 = vrot.lane.b32.xlu0 %v1484, 19
    %v1654 = vpop.permute.xlu0 %1653
    %1655 = vrot.lane.b32.xlu0 %v1485, 19
    %v1656 = vpop.permute.xlu0 %1655
    %1657 = vrot.lane.b32.xlu0 %v1486, 19
    %v1658 = vpop.permute.xlu0 %1657
    %v1659 = vsel %vm213, %v1646, %v1648
    %v1660 = vsel %vm213, %v1648, %v1650
    %v1661 = vsel %vm213, %v1650, %v1652
    %v1662 = vsel %vm213, %v1652, %v1654
    %v1663 = vsel %vm213, %v1654, %v1656
    %v1664 = vsel %vm213, %v1656, %v1658
    %v1671 = vsel %vm76, %v1479, 0
    %1673 = vmatpush.msra.mxu0 0.0
    %1674 = vmatpush.msra.mxu0 0.0
    %1675 = vmatpush.msra.mxu0 0.0
    %1676 = vmatpush.msra.mxu0 0.0
    %1677 = vmatpush.msra.mxu0 0.0
    %1678 = vmatpush.msra.mxu0 0.0
    %1679 = vmatpush.msra.mxu0 0.0
    %1680 = vmatpush.msra.mxu0 0.0
    %1681 = vmatpush.msra.mxu0 0.0
    %1682 = vmatpush.msra.mxu0 0.0
    %1683 = vmatpush.msra.mxu0 0.0
    %1684 = vmatpush.msra.mxu0 0.0
    %1685 = vmatpush.msra.mxu0 0.0
    %1686 = vmatpush.msra.mxu0 0.0
    %1687 = vmatpush.msra.mxu0 0.0
    %1688 = vmatpush.msra.mxu0 %v1659
    %1689 = vmatmul.f32.gmra.mxu0 %v1671
    %v1690 = vpop.f32.mrf.mxu0
    %v1691 = vadd.f32 %v1543, %v1690
    %1692 = vdwg.mxu0
    %1693 = vmatpush.msra.mxu0 0.0
    %1694 = vmatpush.msra.mxu0 0.0
    %1695 = vmatpush.msra.mxu0 0.0
    %1696 = vmatpush.msra.mxu0 0.0
    %1697 = vmatpush.msra.mxu0 0.0
    %1698 = vmatpush.msra.mxu0 0.0
    %1699 = vmatpush.msra.mxu0 0.0
    %1700 = vmatpush.msra.mxu0 0.0
    %1701 = vmatpush.msra.mxu0 0.0
    %1702 = vmatpush.msra.mxu0 0.0
    %1703 = vmatpush.msra.mxu0 0.0
    %1704 = vmatpush.msra.mxu0 0.0
    %1705 = vmatpush.msra.mxu0 0.0
    %1706 = vmatpush.msra.mxu0 0.0
    %1707 = vmatpush.msra.mxu0 0.0
    %1708 = vmatpush.msra.mxu0 %v1660
    %1709 = vmatmul.f32.gmra.mxu0 %v1671
    %v1710 = vpop.f32.mrf.mxu0
    %v1711 = vadd.f32 %v1563, %v1710
    %1712 = vdwg.mxu0
    %1713 = vmatpush.msra.mxu0 0.0
    %1714 = vmatpush.msra.mxu0 0.0
    %1715 = vmatpush.msra.mxu0 0.0
    %1716 = vmatpush.msra.mxu0 0.0
    %1717 = vmatpush.msra.mxu0 0.0
    %1718 = vmatpush.msra.mxu0 0.0
    %1719 = vmatpush.msra.mxu0 0.0
    %1720 = vmatpush.msra.mxu0 0.0
    %1721 = vmatpush.msra.mxu0 0.0
    %1722 = vmatpush.msra.mxu0 0.0
    %1723 = vmatpush.msra.mxu0 0.0
    %1724 = vmatpush.msra.mxu0 0.0
    %1725 = vmatpush.msra.mxu0 0.0
    %1726 = vmatpush.msra.mxu0 0.0
    %1727 = vmatpush.msra.mxu0 0.0
    %1728 = vmatpush.msra.mxu0 %v1661
    %1729 = vmatmul.f32.gmra.mxu0 %v1671
    %v1730 = vpop.f32.mrf.mxu0
    %v1731 = vadd.f32 %v1583, %v1730
    %1732 = vdwg.mxu0
    %1733 = vmatpush.msra.mxu0 0.0
    %1734 = vmatpush.msra.mxu0 0.0
    %1735 = vmatpush.msra.mxu0 0.0
    %1736 = vmatpush.msra.mxu0 0.0
    %1737 = vmatpush.msra.mxu0 0.0
    %1738 = vmatpush.msra.mxu0 0.0
    %1739 = vmatpush.msra.mxu0 0.0
    %1740 = vmatpush.msra.mxu0 0.0
    %1741 = vmatpush.msra.mxu0 0.0
    %1742 = vmatpush.msra.mxu0 0.0
    %1743 = vmatpush.msra.mxu0 0.0
    %1744 = vmatpush.msra.mxu0 0.0
    %1745 = vmatpush.msra.mxu0 0.0
    %1746 = vmatpush.msra.mxu0 0.0
    %1747 = vmatpush.msra.mxu0 0.0
    %1748 = vmatpush.msra.mxu0 %v1662
    %1749 = vmatmul.f32.gmra.mxu0 %v1671
    %v1750 = vpop.f32.mrf.mxu0
    %v1751 = vadd.f32 %v1603, %v1750
    %1752 = vdwg.mxu0
    %1753 = vmatpush.msra.mxu0 0.0
    %1754 = vmatpush.msra.mxu0 0.0
    %1755 = vmatpush.msra.mxu0 0.0
    %1756 = vmatpush.msra.mxu0 0.0
    %1757 = vmatpush.msra.mxu0 0.0
    %1758 = vmatpush.msra.mxu0 0.0
    %1759 = vmatpush.msra.mxu0 0.0
    %1760 = vmatpush.msra.mxu0 0.0
    %1761 = vmatpush.msra.mxu0 0.0
    %1762 = vmatpush.msra.mxu0 0.0
    %1763 = vmatpush.msra.mxu0 0.0
    %1764 = vmatpush.msra.mxu0 0.0
    %1765 = vmatpush.msra.mxu0 0.0
    %1766 = vmatpush.msra.mxu0 0.0
    %1767 = vmatpush.msra.mxu0 0.0
    %1768 = vmatpush.msra.mxu0 %v1663
    %1769 = vmatmul.f32.gmra.mxu0 %v1671
    %v1770 = vpop.f32.mrf.mxu0
    %v1771 = vadd.f32 %v1623, %v1770
    %1772 = vdwg.mxu0
    %1773 = vmatpush.msra.mxu0 0.0
    %1774 = vmatpush.msra.mxu0 0.0
    %1775 = vmatpush.msra.mxu0 0.0
    %1776 = vmatpush.msra.mxu0 0.0
    %1777 = vmatpush.msra.mxu0 0.0
    %1778 = vmatpush.msra.mxu0 0.0
    %1779 = vmatpush.msra.mxu0 0.0
    %1780 = vmatpush.msra.mxu0 0.0
    %1781 = vmatpush.msra.mxu0 0.0
    %1782 = vmatpush.msra.mxu0 0.0
    %1783 = vmatpush.msra.mxu0 0.0
    %1784 = vmatpush.msra.mxu0 0.0
    %1785 = vmatpush.msra.mxu0 0.0
    %1786 = vmatpush.msra.mxu0 0.0
    %1787 = vmatpush.msra.mxu0 0.0
    %1788 = vmatpush.msra.mxu0 %v1664
    %1789 = vmatmul.f32.gmra.mxu0 %v1671
    %v1790 = vpop.f32.mrf.mxu0
    %v1791 = vadd.f32 %v1643, %v1790
    %1792 = vdwg.mxu0
    %1793 = vrot.lane.b32.xlu0 %v1479, 112
    %v1794 = vpop.permute.xlu0 %1793
    %1795 = vrot.lane.b32.xlu0 %v1480, 17
    %v1796 = vpop.permute.xlu0 %1795
    %1797 = vrot.lane.b32.xlu0 %v1481, 17
    %v1798 = vpop.permute.xlu0 %1797
    %1799 = vrot.lane.b32.xlu0 %v1482, 17
    %v1800 = vpop.permute.xlu0 %1799
    %1801 = vrot.lane.b32.xlu0 %v1483, 17
    %v1802 = vpop.permute.xlu0 %1801
    %1803 = vrot.lane.b32.xlu0 %v1484, 17
    %v1804 = vpop.permute.xlu0 %1803
    %1805 = vrot.lane.b32.xlu0 %v1485, 17
    %v1806 = vpop.permute.xlu0 %1805
    %1807 = vrot.lane.b32.xlu0 %v1486, 17
    %v1808 = vpop.permute.xlu0 %1807
    %v1809 = vsel %vm364, %v1796, %v1798
    %v1810 = vsel %vm364, %v1798, %v1800
    %v1811 = vsel %vm364, %v1800, %v1802
    %v1812 = vsel %vm364, %v1802, %v1804
    %v1813 = vsel %vm364, %v1804, %v1806
    %v1814 = vsel %vm364, %v1806, %v1808
    %v1821 = vsel %vm76, %v1794, 0
    %1823 = vmatpush.msra.mxu0 0.0
    %1824 = vmatpush.msra.mxu0 0.0
    %1825 = vmatpush.msra.mxu0 0.0
    %1826 = vmatpush.msra.mxu0 0.0
    %1827 = vmatpush.msra.mxu0 0.0
    %1828 = vmatpush.msra.mxu0 0.0
    %1829 = vmatpush.msra.mxu0 0.0
    %1830 = vmatpush.msra.mxu0 0.0
    %1831 = vmatpush.msra.mxu0 0.0
    %1832 = vmatpush.msra.mxu0 0.0
    %1833 = vmatpush.msra.mxu0 0.0
    %1834 = vmatpush.msra.mxu0 0.0
    %1835 = vmatpush.msra.mxu0 0.0
    %1836 = vmatpush.msra.mxu0 0.0
    %1837 = vmatpush.msra.mxu0 0.0
    %1838 = vmatpush.msra.mxu0 %v1809
    %1839 = vmatmul.f32.gmra.mxu0 %v1821
    %v1840 = vpop.f32.mrf.mxu0
    %v1841 = vadd.f32 0.0, %v1840
    %1842 = vdwg.mxu0
    %1843 = vmatpush.msra.mxu0 0.0
    %1844 = vmatpush.msra.mxu0 0.0
    %1845 = vmatpush.msra.mxu0 0.0
    %1846 = vmatpush.msra.mxu0 0.0
    %1847 = vmatpush.msra.mxu0 0.0
    %1848 = vmatpush.msra.mxu0 0.0
    %1849 = vmatpush.msra.mxu0 0.0
    %1850 = vmatpush.msra.mxu0 0.0
    %1851 = vmatpush.msra.mxu0 0.0
    %1852 = vmatpush.msra.mxu0 0.0
    %1853 = vmatpush.msra.mxu0 0.0
    %1854 = vmatpush.msra.mxu0 0.0
    %1855 = vmatpush.msra.mxu0 0.0
    %1856 = vmatpush.msra.mxu0 0.0
    %1857 = vmatpush.msra.mxu0 0.0
    %1858 = vmatpush.msra.mxu0 %v1810
    %1859 = vmatmul.f32.gmra.mxu0 %v1821
    %v1860 = vpop.f32.mrf.mxu0
    %v1861 = vadd.f32 0.0, %v1860
    %1862 = vdwg.mxu0
    %1863 = vmatpush.msra.mxu0 0.0
    %1864 = vmatpush.msra.mxu0 0.0
    %1865 = vmatpush.msra.mxu0 0.0
    %1866 = vmatpush.msra.mxu0 0.0
    %1867 = vmatpush.msra.mxu0 0.0
    %1868 = vmatpush.msra.mxu0 0.0
    %1869 = vmatpush.msra.mxu0 0.0
    %1870 = vmatpush.msra.mxu0 0.0
    %1871 = vmatpush.msra.mxu0 0.0
    %1872 = vmatpush.msra.mxu0 0.0
    %1873 = vmatpush.msra.mxu0 0.0
    %1874 = vmatpush.msra.mxu0 0.0
    %1875 = vmatpush.msra.mxu0 0.0
    %1876 = vmatpush.msra.mxu0 0.0
    %1877 = vmatpush.msra.mxu0 0.0
    %1878 = vmatpush.msra.mxu0 %v1811
    %1879 = vmatmul.f32.gmra.mxu0 %v1821
    %v1880 = vpop.f32.mrf.mxu0
    %v1881 = vadd.f32 0.0, %v1880
    %1882 = vdwg.mxu0
    %1883 = vmatpush.msra.mxu0 0.0
    %1884 = vmatpush.msra.mxu0 0.0
    %1885 = vmatpush.msra.mxu0 0.0
    %1886 = vmatpush.msra.mxu0 0.0
    %1887 = vmatpush.msra.mxu0 0.0
    %1888 = vmatpush.msra.mxu0 0.0
    %1889 = vmatpush.msra.mxu0 0.0
    %1890 = vmatpush.msra.mxu0 0.0
    %1891 = vmatpush.msra.mxu0 0.0
    %1892 = vmatpush.msra.mxu0 0.0
    %1893 = vmatpush.msra.mxu0 0.0
    %1894 = vmatpush.msra.mxu0 0.0
    %1895 = vmatpush.msra.mxu0 0.0
    %1896 = vmatpush.msra.mxu0 0.0
    %1897 = vmatpush.msra.mxu0 0.0
    %1898 = vmatpush.msra.mxu0 %v1812
    %1899 = vmatmul.f32.gmra.mxu0 %v1821
    %v1900 = vpop.f32.mrf.mxu0
    %v1901 = vadd.f32 0.0, %v1900
    %1902 = vdwg.mxu0
    %1903 = vmatpush.msra.mxu0 0.0
    %1904 = vmatpush.msra.mxu0 0.0
    %1905 = vmatpush.msra.mxu0 0.0
    %1906 = vmatpush.msra.mxu0 0.0
    %1907 = vmatpush.msra.mxu0 0.0
    %1908 = vmatpush.msra.mxu0 0.0
    %1909 = vmatpush.msra.mxu0 0.0
    %1910 = vmatpush.msra.mxu0 0.0
    %1911 = vmatpush.msra.mxu0 0.0
    %1912 = vmatpush.msra.mxu0 0.0
    %1913 = vmatpush.msra.mxu0 0.0
    %1914 = vmatpush.msra.mxu0 0.0
    %1915 = vmatpush.msra.mxu0 0.0
    %1916 = vmatpush.msra.mxu0 0.0
    %1917 = vmatpush.msra.mxu0 0.0
    %1918 = vmatpush.msra.mxu0 %v1813
    %1919 = vmatmul.f32.gmra.mxu0 %v1821
    %v1920 = vpop.f32.mrf.mxu0
    %v1921 = vadd.f32 0.0, %v1920
    %1922 = vdwg.mxu0
    %1923 = vmatpush.msra.mxu0 0.0
    %1924 = vmatpush.msra.mxu0 0.0
    %1925 = vmatpush.msra.mxu0 0.0
    %1926 = vmatpush.msra.mxu0 0.0
    %1927 = vmatpush.msra.mxu0 0.0
    %1928 = vmatpush.msra.mxu0 0.0
    %1929 = vmatpush.msra.mxu0 0.0
    %1930 = vmatpush.msra.mxu0 0.0
    %1931 = vmatpush.msra.mxu0 0.0
    %1932 = vmatpush.msra.mxu0 0.0
    %1933 = vmatpush.msra.mxu0 0.0
    %1934 = vmatpush.msra.mxu0 0.0
    %1935 = vmatpush.msra.mxu0 0.0
    %1936 = vmatpush.msra.mxu0 0.0
    %1937 = vmatpush.msra.mxu0 0.0
    %1938 = vmatpush.msra.mxu0 %v1814
    %1939 = vmatmul.f32.gmra.mxu0 %v1821
    %v1940 = vpop.f32.mrf.mxu0
    %v1941 = vadd.f32 0.0, %v1940
    %1942 = vdwg.mxu0
    %v1943 = vadd.f32 %v1691, %v1841
    %v1944 = vadd.f32 %v1711, %v1861
    %v1945 = vadd.f32 %v1731, %v1881
    %v1946 = vadd.f32 %v1751, %v1901
    %v1947 = vadd.f32 %v1771, %v1921
    %v1948 = vadd.f32 %v1791, %v1941
    %1949 = vrot.lane.b32.xlu0 %v1479, 104
    %v1950 = vpop.permute.xlu0 %1949
    %1951 = vrot.lane.b32.xlu0 %v1480, 1
    %v1952 = vpop.permute.xlu0 %1951
    %1953 = vrot.lane.b32.xlu0 %v1481, 1
    %v1954 = vpop.permute.xlu0 %1953
    %1955 = vrot.lane.b32.xlu0 %v1482, 1
    %v1956 = vpop.permute.xlu0 %1955
    %1957 = vrot.lane.b32.xlu0 %v1483, 1
    %v1958 = vpop.permute.xlu0 %1957
    %1959 = vrot.lane.b32.xlu0 %v1484, 1
    %v1960 = vpop.permute.xlu0 %1959
    %1961 = vrot.lane.b32.xlu0 %v1485, 1
    %v1962 = vpop.permute.xlu0 %1961
    %1963 = vrot.lane.b32.xlu0 %v1486, 1
    %v1964 = vpop.permute.xlu0 %1963
    %v1965 = vsel %vm521, %v1952, %v1954
    %v1966 = vsel %vm521, %v1954, %v1956
    %v1967 = vsel %vm521, %v1956, %v1958
    %v1968 = vsel %vm521, %v1958, %v1960
    %v1969 = vsel %vm521, %v1960, %v1962
    %v1970 = vsel %vm521, %v1962, %v1964
    %v1977 = vsel %vm76, %v1950, 0
    %1979 = vmatpush.msra.mxu0 0.0
    %1980 = vmatpush.msra.mxu0 0.0
    %1981 = vmatpush.msra.mxu0 0.0
    %1982 = vmatpush.msra.mxu0 0.0
    %1983 = vmatpush.msra.mxu0 0.0
    %1984 = vmatpush.msra.mxu0 0.0
    %1985 = vmatpush.msra.mxu0 0.0
    %1986 = vmatpush.msra.mxu0 0.0
    %1987 = vmatpush.msra.mxu0 0.0
    %1988 = vmatpush.msra.mxu0 0.0
    %1989 = vmatpush.msra.mxu0 0.0
    %1990 = vmatpush.msra.mxu0 0.0
    %1991 = vmatpush.msra.mxu0 0.0
    %1992 = vmatpush.msra.mxu0 0.0
    %1993 = vmatpush.msra.mxu0 0.0
    %1994 = vmatpush.msra.mxu0 %v1965
    %1995 = vmatmul.f32.gmra.mxu0 %v1977
    %v1996 = vpop.f32.mrf.mxu0
    %v1997 = vadd.f32 0.0, %v1996
    %1998 = vdwg.mxu0
    %1999 = vmatpush.msra.mxu0 0.0
    %2000 = vmatpush.msra.mxu0 0.0
    %2001 = vmatpush.msra.mxu0 0.0
    %2002 = vmatpush.msra.mxu0 0.0
    %2003 = vmatpush.msra.mxu0 0.0
    %2004 = vmatpush.msra.mxu0 0.0
    %2005 = vmatpush.msra.mxu0 0.0
    %2006 = vmatpush.msra.mxu0 0.0
    %2007 = vmatpush.msra.mxu0 0.0
    %2008 = vmatpush.msra.mxu0 0.0
    %2009 = vmatpush.msra.mxu0 0.0
    %2010 = vmatpush.msra.mxu0 0.0
    %2011 = vmatpush.msra.mxu0 0.0
    %2012 = vmatpush.msra.mxu0 0.0
    %2013 = vmatpush.msra.mxu0 0.0
    %2014 = vmatpush.msra.mxu0 %v1966
    %2015 = vmatmul.f32.gmra.mxu0 %v1977
    %v2016 = vpop.f32.mrf.mxu0
    %v2017 = vadd.f32 0.0, %v2016
    %2018 = vdwg.mxu0
    %2019 = vmatpush.msra.mxu0 0.0
    %2020 = vmatpush.msra.mxu0 0.0
    %2021 = vmatpush.msra.mxu0 0.0
    %2022 = vmatpush.msra.mxu0 0.0
    %2023 = vmatpush.msra.mxu0 0.0
    %2024 = vmatpush.msra.mxu0 0.0
    %2025 = vmatpush.msra.mxu0 0.0
    %2026 = vmatpush.msra.mxu0 0.0
    %2027 = vmatpush.msra.mxu0 0.0
    %2028 = vmatpush.msra.mxu0 0.0
    %2029 = vmatpush.msra.mxu0 0.0
    %2030 = vmatpush.msra.mxu0 0.0
    %2031 = vmatpush.msra.mxu0 0.0
    %2032 = vmatpush.msra.mxu0 0.0
    %2033 = vmatpush.msra.mxu0 0.0
    %2034 = vmatpush.msra.mxu0 %v1967
    %2035 = vmatmul.f32.gmra.mxu0 %v1977
    %v2036 = vpop.f32.mrf.mxu0
    %v2037 = vadd.f32 0.0, %v2036
    %2038 = vdwg.mxu0
    %2039 = vmatpush.msra.mxu0 0.0
    %2040 = vmatpush.msra.mxu0 0.0
    %2041 = vmatpush.msra.mxu0 0.0
    %2042 = vmatpush.msra.mxu0 0.0
    %2043 = vmatpush.msra.mxu0 0.0
    %2044 = vmatpush.msra.mxu0 0.0
    %2045 = vmatpush.msra.mxu0 0.0
    %2046 = vmatpush.msra.mxu0 0.0
    %2047 = vmatpush.msra.mxu0 0.0
    %2048 = vmatpush.msra.mxu0 0.0
    %2049 = vmatpush.msra.mxu0 0.0
    %2050 = vmatpush.msra.mxu0 0.0
    %2051 = vmatpush.msra.mxu0 0.0
    %2052 = vmatpush.msra.mxu0 0.0
    %2053 = vmatpush.msra.mxu0 0.0
    %2054 = vmatpush.msra.mxu0 %v1968
    %2055 = vmatmul.f32.gmra.mxu0 %v1977
    %v2056 = vpop.f32.mrf.mxu0
    %v2057 = vadd.f32 0.0, %v2056
    %2058 = vdwg.mxu0
    %2059 = vmatpush.msra.mxu0 0.0
    %2060 = vmatpush.msra.mxu0 0.0
    %2061 = vmatpush.msra.mxu0 0.0
    %2062 = vmatpush.msra.mxu0 0.0
    %2063 = vmatpush.msra.mxu0 0.0
    %2064 = vmatpush.msra.mxu0 0.0
    %2065 = vmatpush.msra.mxu0 0.0
    %2066 = vmatpush.msra.mxu0 0.0
    %2067 = vmatpush.msra.mxu0 0.0
    %2068 = vmatpush.msra.mxu0 0.0
    %2069 = vmatpush.msra.mxu0 0.0
    %2070 = vmatpush.msra.mxu0 0.0
    %2071 = vmatpush.msra.mxu0 0.0
    %2072 = vmatpush.msra.mxu0 0.0
    %2073 = vmatpush.msra.mxu0 0.0
    %2074 = vmatpush.msra.mxu0 %v1969
    %2075 = vmatmul.f32.gmra.mxu0 %v1977
    %v2076 = vpop.f32.mrf.mxu0
    %v2077 = vadd.f32 0.0, %v2076
    %2078 = vdwg.mxu0
    %2079 = vmatpush.msra.mxu0 0.0
    %2080 = vmatpush.msra.mxu0 0.0
    %2081 = vmatpush.msra.mxu0 0.0
    %2082 = vmatpush.msra.mxu0 0.0
    %2083 = vmatpush.msra.mxu0 0.0
    %2084 = vmatpush.msra.mxu0 0.0
    %2085 = vmatpush.msra.mxu0 0.0
    %2086 = vmatpush.msra.mxu0 0.0
    %2087 = vmatpush.msra.mxu0 0.0
    %2088 = vmatpush.msra.mxu0 0.0
    %2089 = vmatpush.msra.mxu0 0.0
    %2090 = vmatpush.msra.mxu0 0.0
    %2091 = vmatpush.msra.mxu0 0.0
    %2092 = vmatpush.msra.mxu0 0.0
    %2093 = vmatpush.msra.mxu0 0.0
    %2094 = vmatpush.msra.mxu0 %v1970
    %2095 = vmatmul.f32.gmra.mxu0 %v1977
    %v2096 = vpop.f32.mrf.mxu0
    %v2097 = vadd.f32 0.0, %v2096
    %2098 = vdwg.mxu0
    %v2099 = vadd.f32 %v1943, %v1997
    %v2100 = vadd.f32 %v1944, %v2017
    %v2101 = vadd.f32 %v1945, %v2037
    %v2102 = vadd.f32 %v1946, %v2057
    %v2103 = vadd.f32 %v1947, %v2077
    %v2104 = vadd.f32 %v1948, %v2097
    %2105 = vrot.lane.b32.xlu0 %v1479, 96
    %v2106 = vpop.permute.xlu0 %2105
    %v2107 = vsel %vm76, %v2106, 0
    %2109 = vmatpush.msra.mxu0 0.0
    %2110 = vmatpush.msra.mxu0 0.0
    %2111 = vmatpush.msra.mxu0 0.0
    %2112 = vmatpush.msra.mxu0 0.0
    %2113 = vmatpush.msra.mxu0 0.0
    %2114 = vmatpush.msra.mxu0 0.0
    %2115 = vmatpush.msra.mxu0 0.0
    %2116 = vmatpush.msra.mxu0 0.0
    %2117 = vmatpush.msra.mxu0 0.0
    %2118 = vmatpush.msra.mxu0 0.0
    %2119 = vmatpush.msra.mxu0 0.0
    %2120 = vmatpush.msra.mxu0 0.0
    %2121 = vmatpush.msra.mxu0 0.0
    %2122 = vmatpush.msra.mxu0 0.0
    %2123 = vmatpush.msra.mxu0 0.0
    %2124 = vmatpush.msra.mxu0 %v1481
    %2125 = vmatmul.f32.gmra.mxu0 %v2107
    %v2126 = vpop.f32.mrf.mxu0
    %v2127 = vadd.f32 0.0, %v2126
    %2128 = vdwg.mxu0
    %2129 = vmatpush.msra.mxu0 0.0
    %2130 = vmatpush.msra.mxu0 0.0
    %2131 = vmatpush.msra.mxu0 0.0
    %2132 = vmatpush.msra.mxu0 0.0
    %2133 = vmatpush.msra.mxu0 0.0
    %2134 = vmatpush.msra.mxu0 0.0
    %2135 = vmatpush.msra.mxu0 0.0
    %2136 = vmatpush.msra.mxu0 0.0
    %2137 = vmatpush.msra.mxu0 0.0
    %2138 = vmatpush.msra.mxu0 0.0
    %2139 = vmatpush.msra.mxu0 0.0
    %2140 = vmatpush.msra.mxu0 0.0
    %2141 = vmatpush.msra.mxu0 0.0
    %2142 = vmatpush.msra.mxu0 0.0
    %2143 = vmatpush.msra.mxu0 0.0
    %2144 = vmatpush.msra.mxu0 %v1482
    %2145 = vmatmul.f32.gmra.mxu0 %v2107
    %v2146 = vpop.f32.mrf.mxu0
    %v2147 = vadd.f32 0.0, %v2146
    %2148 = vdwg.mxu0
    %2149 = vmatpush.msra.mxu0 0.0
    %2150 = vmatpush.msra.mxu0 0.0
    %2151 = vmatpush.msra.mxu0 0.0
    %2152 = vmatpush.msra.mxu0 0.0
    %2153 = vmatpush.msra.mxu0 0.0
    %2154 = vmatpush.msra.mxu0 0.0
    %2155 = vmatpush.msra.mxu0 0.0
    %2156 = vmatpush.msra.mxu0 0.0
    %2157 = vmatpush.msra.mxu0 0.0
    %2158 = vmatpush.msra.mxu0 0.0
    %2159 = vmatpush.msra.mxu0 0.0
    %2160 = vmatpush.msra.mxu0 0.0
    %2161 = vmatpush.msra.mxu0 0.0
    %2162 = vmatpush.msra.mxu0 0.0
    %2163 = vmatpush.msra.mxu0 0.0
    %2164 = vmatpush.msra.mxu0 %v1483
    %2165 = vmatmul.f32.gmra.mxu0 %v2107
    %v2166 = vpop.f32.mrf.mxu0
    %v2167 = vadd.f32 0.0, %v2166
    %2168 = vdwg.mxu0
    %2169 = vmatpush.msra.mxu0 0.0
    %2170 = vmatpush.msra.mxu0 0.0
    %2171 = vmatpush.msra.mxu0 0.0
    %2172 = vmatpush.msra.mxu0 0.0
    %2173 = vmatpush.msra.mxu0 0.0
    %2174 = vmatpush.msra.mxu0 0.0
    %2175 = vmatpush.msra.mxu0 0.0
    %2176 = vmatpush.msra.mxu0 0.0
    %2177 = vmatpush.msra.mxu0 0.0
    %2178 = vmatpush.msra.mxu0 0.0
    %2179 = vmatpush.msra.mxu0 0.0
    %2180 = vmatpush.msra.mxu0 0.0
    %2181 = vmatpush.msra.mxu0 0.0
    %2182 = vmatpush.msra.mxu0 0.0
    %2183 = vmatpush.msra.mxu0 0.0
    %2184 = vmatpush.msra.mxu0 %v1484
    %2185 = vmatmul.f32.gmra.mxu0 %v2107
    %v2186 = vpop.f32.mrf.mxu0
    %v2187 = vadd.f32 0.0, %v2186
    %2188 = vdwg.mxu0
    %2189 = vmatpush.msra.mxu0 0.0
    %2190 = vmatpush.msra.mxu0 0.0
    %2191 = vmatpush.msra.mxu0 0.0
    %2192 = vmatpush.msra.mxu0 0.0
    %2193 = vmatpush.msra.mxu0 0.0
    %2194 = vmatpush.msra.mxu0 0.0
    %2195 = vmatpush.msra.mxu0 0.0
    %2196 = vmatpush.msra.mxu0 0.0
    %2197 = vmatpush.msra.mxu0 0.0
    %2198 = vmatpush.msra.mxu0 0.0
    %2199 = vmatpush.msra.mxu0 0.0
    %2200 = vmatpush.msra.mxu0 0.0
    %2201 = vmatpush.msra.mxu0 0.0
    %2202 = vmatpush.msra.mxu0 0.0
    %2203 = vmatpush.msra.mxu0 0.0
    %2204 = vmatpush.msra.mxu0 %v1485
    %2205 = vmatmul.f32.gmra.mxu0 %v2107
    %v2206 = vpop.f32.mrf.mxu0
    %v2207 = vadd.f32 0.0, %v2206
    %2208 = vdwg.mxu0
    %2209 = vmatpush.msra.mxu0 0.0
    %2210 = vmatpush.msra.mxu0 0.0
    %2211 = vmatpush.msra.mxu0 0.0
    %2212 = vmatpush.msra.mxu0 0.0
    %2213 = vmatpush.msra.mxu0 0.0
    %2214 = vmatpush.msra.mxu0 0.0
    %2215 = vmatpush.msra.mxu0 0.0
    %2216 = vmatpush.msra.mxu0 0.0
    %2217 = vmatpush.msra.mxu0 0.0
    %2218 = vmatpush.msra.mxu0 0.0
    %2219 = vmatpush.msra.mxu0 0.0
    %2220 = vmatpush.msra.mxu0 0.0
    %2221 = vmatpush.msra.mxu0 0.0
    %2222 = vmatpush.msra.mxu0 0.0
    %2223 = vmatpush.msra.mxu0 0.0
    %2224 = vmatpush.msra.mxu0 %v1486
    %2225 = vmatmul.f32.gmra.mxu0 %v2107
    %v2226 = vpop.f32.mrf.mxu0
    %v2227 = vadd.f32 0.0, %v2226
    %2228 = vdwg.mxu0
    %v2229 = vadd.f32 %v2099, %v2127
    %v2230 = vadd.f32 %v2100, %v2147
    %v2231 = vadd.f32 %v2101, %v2167
    %v2232 = vadd.f32 %v2102, %v2187
    %v2233 = vadd.f32 %v2103, %v2207
    %v2234 = vadd.f32 %v2104, %v2227
    %v2235 = vld [vmem:[#allocation2 + $0x8] sm:$0xff]
    %v2236 = vld [vmem:[#allocation2 + $0x10] sm:$0xff]
    %v2237 = vld [vmem:[#allocation2 + $0x18] sm:$0xff]
    %v2238 = vld [vmem:[#allocation2 + $0x20] sm:$0xff]
    %v2239 = vld [vmem:[#allocation2 + $0x28] sm:$0xff]
    %v2240 = vld [vmem:[#allocation2 + $0x30] sm:$0xff]
    %v2241 = vld [vmem:[#allocation2 + $0x38] sm:$0xff]
    %2242 = vrot.lane.b32.xlu0 %v1479, 88
    %v2243 = vpop.permute.xlu0 %2242
    %2251 = vrot.lane.b32.xlu0 %v2235, 127
    %v2252 = vpop.permute.xlu0 %2251
    %2253 = vrot.lane.b32.xlu0 %v2236, 127
    %v2254 = vpop.permute.xlu0 %2253
    %2255 = vrot.lane.b32.xlu0 %v2237, 127
    %v2256 = vpop.permute.xlu0 %2255
    %2257 = vrot.lane.b32.xlu0 %v2238, 127
    %v2258 = vpop.permute.xlu0 %2257
    %2259 = vrot.lane.b32.xlu0 %v2239, 127
    %v2260 = vpop.permute.xlu0 %2259
    %2261 = vrot.lane.b32.xlu0 %v2240, 127
    %v2262 = vpop.permute.xlu0 %2261
    %2263 = vrot.lane.b32.xlu0 %v2241, 127
    %v2264 = vpop.permute.xlu0 %2263
    %v2265 = vsel %vm822, %v2252, %v2254
    %v2266 = vsel %vm822, %v2254, %v2256
    %v2267 = vsel %vm822, %v2256, %v2258
    %v2268 = vsel %vm822, %v2258, %v2260
    %v2269 = vsel %vm822, %v2260, %v2262
    %v2270 = vsel %vm822, %v2262, %v2264
    %v2277 = vsel %vm76, %v2243, 0
    %2279 = vmatpush.msra.mxu0 0.0
    %2280 = vmatpush.msra.mxu0 0.0
    %2281 = vmatpush.msra.mxu0 0.0
    %2282 = vmatpush.msra.mxu0 0.0
    %2283 = vmatpush.msra.mxu0 0.0
    %2284 = vmatpush.msra.mxu0 0.0
    %2285 = vmatpush.msra.mxu0 0.0
    %2286 = vmatpush.msra.mxu0 0.0
    %2287 = vmatpush.msra.mxu0 0.0
    %2288 = vmatpush.msra.mxu0 0.0
    %2289 = vmatpush.msra.mxu0 0.0
    %2290 = vmatpush.msra.mxu0 0.0
    %2291 = vmatpush.msra.mxu0 0.0
    %2292 = vmatpush.msra.mxu0 0.0
    %2293 = vmatpush.msra.mxu0 0.0
    %2294 = vmatpush.msra.mxu0 %v2265
    %2295 = vmatmul.f32.gmra.mxu0 %v2277
    %v2296 = vpop.f32.mrf.mxu0
    %v2297 = vadd.f32 0.0, %v2296
    %2298 = vdwg.mxu0
    %2299 = vmatpush.msra.mxu0 0.0
    %2300 = vmatpush.msra.mxu0 0.0
    %2301 = vmatpush.msra.mxu0 0.0
    %2302 = vmatpush.msra.mxu0 0.0
    %2303 = vmatpush.msra.mxu0 0.0
    %2304 = vmatpush.msra.mxu0 0.0
    %2305 = vmatpush.msra.mxu0 0.0
    %2306 = vmatpush.msra.mxu0 0.0
    %2307 = vmatpush.msra.mxu0 0.0
    %2308 = vmatpush.msra.mxu0 0.0
    %2309 = vmatpush.msra.mxu0 0.0
    %2310 = vmatpush.msra.mxu0 0.0
    %2311 = vmatpush.msra.mxu0 0.0
    %2312 = vmatpush.msra.mxu0 0.0
    %2313 = vmatpush.msra.mxu0 0.0
    %2314 = vmatpush.msra.mxu0 %v2266
    %2315 = vmatmul.f32.gmra.mxu0 %v2277
    %v2316 = vpop.f32.mrf.mxu0
    %v2317 = vadd.f32 0.0, %v2316
    %2318 = vdwg.mxu0
    %2319 = vmatpush.msra.mxu0 0.0
    %2320 = vmatpush.msra.mxu0 0.0
    %2321 = vmatpush.msra.mxu0 0.0
    %2322 = vmatpush.msra.mxu0 0.0
    %2323 = vmatpush.msra.mxu0 0.0
    %2324 = vmatpush.msra.mxu0 0.0
    %2325 = vmatpush.msra.mxu0 0.0
    %2326 = vmatpush.msra.mxu0 0.0
    %2327 = vmatpush.msra.mxu0 0.0
    %2328 = vmatpush.msra.mxu0 0.0
    %2329 = vmatpush.msra.mxu0 0.0
    %2330 = vmatpush.msra.mxu0 0.0
    %2331 = vmatpush.msra.mxu0 0.0
    %2332 = vmatpush.msra.mxu0 0.0
    %2333 = vmatpush.msra.mxu0 0.0
    %2334 = vmatpush.msra.mxu0 %v2267
    %2335 = vmatmul.f32.gmra.mxu0 %v2277
    %v2336 = vpop.f32.mrf.mxu0
    %v2337 = vadd.f32 0.0, %v2336
    %2338 = vdwg.mxu0
    %2339 = vmatpush.msra.mxu0 0.0
    %2340 = vmatpush.msra.mxu0 0.0
    %2341 = vmatpush.msra.mxu0 0.0
    %2342 = vmatpush.msra.mxu0 0.0
    %2343 = vmatpush.msra.mxu0 0.0
    %2344 = vmatpush.msra.mxu0 0.0
    %2345 = vmatpush.msra.mxu0 0.0
    %2346 = vmatpush.msra.mxu0 0.0
    %2347 = vmatpush.msra.mxu0 0.0
    %2348 = vmatpush.msra.mxu0 0.0
    %2349 = vmatpush.msra.mxu0 0.0
    %2350 = vmatpush.msra.mxu0 0.0
    %2351 = vmatpush.msra.mxu0 0.0
    %2352 = vmatpush.msra.mxu0 0.0
    %2353 = vmatpush.msra.mxu0 0.0
    %2354 = vmatpush.msra.mxu0 %v2268
    %2355 = vmatmul.f32.gmra.mxu0 %v2277
    %v2356 = vpop.f32.mrf.mxu0
    %v2357 = vadd.f32 0.0, %v2356
    %2358 = vdwg.mxu0
    %2359 = vmatpush.msra.mxu0 0.0
    %2360 = vmatpush.msra.mxu0 0.0
    %2361 = vmatpush.msra.mxu0 0.0
    %2362 = vmatpush.msra.mxu0 0.0
    %2363 = vmatpush.msra.mxu0 0.0
    %2364 = vmatpush.msra.mxu0 0.0
    %2365 = vmatpush.msra.mxu0 0.0
    %2366 = vmatpush.msra.mxu0 0.0
    %2367 = vmatpush.msra.mxu0 0.0
    %2368 = vmatpush.msra.mxu0 0.0
    %2369 = vmatpush.msra.mxu0 0.0
    %2370 = vmatpush.msra.mxu0 0.0
    %2371 = vmatpush.msra.mxu0 0.0
    %2372 = vmatpush.msra.mxu0 0.0
    %2373 = vmatpush.msra.mxu0 0.0
    %2374 = vmatpush.msra.mxu0 %v2269
    %2375 = vmatmul.f32.gmra.mxu0 %v2277
    %v2376 = vpop.f32.mrf.mxu0
    %v2377 = vadd.f32 0.0, %v2376
    %2378 = vdwg.mxu0
    %2379 = vmatpush.msra.mxu0 0.0
    %2380 = vmatpush.msra.mxu0 0.0
    %2381 = vmatpush.msra.mxu0 0.0
    %2382 = vmatpush.msra.mxu0 0.0
    %2383 = vmatpush.msra.mxu0 0.0
    %2384 = vmatpush.msra.mxu0 0.0
    %2385 = vmatpush.msra.mxu0 0.0
    %2386 = vmatpush.msra.mxu0 0.0
    %2387 = vmatpush.msra.mxu0 0.0
    %2388 = vmatpush.msra.mxu0 0.0
    %2389 = vmatpush.msra.mxu0 0.0
    %2390 = vmatpush.msra.mxu0 0.0
    %2391 = vmatpush.msra.mxu0 0.0
    %2392 = vmatpush.msra.mxu0 0.0
    %2393 = vmatpush.msra.mxu0 0.0
    %2394 = vmatpush.msra.mxu0 %v2270
    %2395 = vmatmul.f32.gmra.mxu0 %v2277
    %v2396 = vpop.f32.mrf.mxu0
    %v2397 = vadd.f32 0.0, %v2396
    %2398 = vdwg.mxu0
    %v2399 = vadd.f32 %v2229, %v2297
    %v2400 = vadd.f32 %v2230, %v2317
    %v2401 = vadd.f32 %v2231, %v2337
    %v2402 = vadd.f32 %v2232, %v2357
    %v2403 = vadd.f32 %v2233, %v2377
    %v2404 = vadd.f32 %v2234, %v2397
    %2405 = vrot.lane.b32.xlu0 %v1479, 80
    %v2406 = vpop.permute.xlu0 %2405
    %2407 = vrot.lane.b32.xlu0 %v2235, 111
    %v2408 = vpop.permute.xlu0 %2407
    %2409 = vrot.lane.b32.xlu0 %v2236, 111
    %v2410 = vpop.permute.xlu0 %2409
    %2411 = vrot.lane.b32.xlu0 %v2237, 111
    %v2412 = vpop.permute.xlu0 %2411
    %2413 = vrot.lane.b32.xlu0 %v2238, 111
    %v2414 = vpop.permute.xlu0 %2413
    %2415 = vrot.lane.b32.xlu0 %v2239, 111
    %v2416 = vpop.permute.xlu0 %2415
    %2417 = vrot.lane.b32.xlu0 %v2240, 111
    %v2418 = vpop.permute.xlu0 %2417
    %2419 = vrot.lane.b32.xlu0 %v2241, 111
    %v2420 = vpop.permute.xlu0 %2419
    %v2421 = vsel %vm979, %v2408, %v2410
    %v2422 = vsel %vm979, %v2410, %v2412
    %v2423 = vsel %vm979, %v2412, %v2414
    %v2424 = vsel %vm979, %v2414, %v2416
    %v2425 = vsel %vm979, %v2416, %v2418
    %v2426 = vsel %vm979, %v2418, %v2420
    %v2433 = vsel %vm76, %v2406, 0
    %2435 = vmatpush.msra.mxu0 0.0
    %2436 = vmatpush.msra.mxu0 0.0
    %2437 = vmatpush.msra.mxu0 0.0
    %2438 = vmatpush.msra.mxu0 0.0
    %2439 = vmatpush.msra.mxu0 0.0
    %2440 = vmatpush.msra.mxu0 0.0
    %2441 = vmatpush.msra.mxu0 0.0
    %2442 = vmatpush.msra.mxu0 0.0
    %2443 = vmatpush.msra.mxu0 0.0
    %2444 = vmatpush.msra.mxu0 0.0
    %2445 = vmatpush.msra.mxu0 0.0
    %2446 = vmatpush.msra.mxu0 0.0
    %2447 = vmatpush.msra.mxu0 0.0
    %2448 = vmatpush.msra.mxu0 0.0
    %2449 = vmatpush.msra.mxu0 0.0
    %2450 = vmatpush.msra.mxu0 %v2421
    %2451 = vmatmul.f32.gmra.mxu0 %v2433
    %v2452 = vpop.f32.mrf.mxu0
    %v2453 = vadd.f32 0.0, %v2452
    %2454 = vdwg.mxu0
    %2455 = vmatpush.msra.mxu0 0.0
    %2456 = vmatpush.msra.mxu0 0.0
    %2457 = vmatpush.msra.mxu0 0.0
    %2458 = vmatpush.msra.mxu0 0.0
    %2459 = vmatpush.msra.mxu0 0.0
    %2460 = vmatpush.msra.mxu0 0.0
    %2461 = vmatpush.msra.mxu0 0.0
    %2462 = vmatpush.msra.mxu0 0.0
    %2463 = vmatpush.msra.mxu0 0.0
    %2464 = vmatpush.msra.mxu0 0.0
    %2465 = vmatpush.msra.mxu0 0.0
    %2466 = vmatpush.msra.mxu0 0.0
    %2467 = vmatpush.msra.mxu0 0.0
    %2468 = vmatpush.msra.mxu0 0.0
    %2469 = vmatpush.msra.mxu0 0.0
    %2470 = vmatpush.msra.mxu0 %v2422
    %2471 = vmatmul.f32.gmra.mxu0 %v2433
    %v2472 = vpop.f32.mrf.mxu0
    %v2473 = vadd.f32 0.0, %v2472
    %2474 = vdwg.mxu0
    %2475 = vmatpush.msra.mxu0 0.0
    %2476 = vmatpush.msra.mxu0 0.0
    %2477 = vmatpush.msra.mxu0 0.0
    %2478 = vmatpush.msra.mxu0 0.0
    %2479 = vmatpush.msra.mxu0 0.0
    %2480 = vmatpush.msra.mxu0 0.0
    %2481 = vmatpush.msra.mxu0 0.0
    %2482 = vmatpush.msra.mxu0 0.0
    %2483 = vmatpush.msra.mxu0 0.0
    %2484 = vmatpush.msra.mxu0 0.0
    %2485 = vmatpush.msra.mxu0 0.0
    %2486 = vmatpush.msra.mxu0 0.0
    %2487 = vmatpush.msra.mxu0 0.0
    %2488 = vmatpush.msra.mxu0 0.0
    %2489 = vmatpush.msra.mxu0 0.0
    %2490 = vmatpush.msra.mxu0 %v2423
    %2491 = vmatmul.f32.gmra.mxu0 %v2433
    %v2492 = vpop.f32.mrf.mxu0
    %v2493 = vadd.f32 0.0, %v2492
    %2494 = vdwg.mxu0
    %2495 = vmatpush.msra.mxu0 0.0
    %2496 = vmatpush.msra.mxu0 0.0
    %2497 = vmatpush.msra.mxu0 0.0
    %2498 = vmatpush.msra.mxu0 0.0
    %2499 = vmatpush.msra.mxu0 0.0
    %2500 = vmatpush.msra.mxu0 0.0
    %2501 = vmatpush.msra.mxu0 0.0
    %2502 = vmatpush.msra.mxu0 0.0
    %2503 = vmatpush.msra.mxu0 0.0
    %2504 = vmatpush.msra.mxu0 0.0
    %2505 = vmatpush.msra.mxu0 0.0
    %2506 = vmatpush.msra.mxu0 0.0
    %2507 = vmatpush.msra.mxu0 0.0
    %2508 = vmatpush.msra.mxu0 0.0
    %2509 = vmatpush.msra.mxu0 0.0
    %2510 = vmatpush.msra.mxu0 %v2424
    %2511 = vmatmul.f32.gmra.mxu0 %v2433
    %v2512 = vpop.f32.mrf.mxu0
    %v2513 = vadd.f32 0.0, %v2512
    %2514 = vdwg.mxu0
    %2515 = vmatpush.msra.mxu0 0.0
    %2516 = vmatpush.msra.mxu0 0.0
    %2517 = vmatpush.msra.mxu0 0.0
    %2518 = vmatpush.msra.mxu0 0.0
    %2519 = vmatpush.msra.mxu0 0.0
    %2520 = vmatpush.msra.mxu0 0.0
    %2521 = vmatpush.msra.mxu0 0.0
    %2522 = vmatpush.msra.mxu0 0.0
    %2523 = vmatpush.msra.mxu0 0.0
    %2524 = vmatpush.msra.mxu0 0.0
    %2525 = vmatpush.msra.mxu0 0.0
    %2526 = vmatpush.msra.mxu0 0.0
    %2527 = vmatpush.msra.mxu0 0.0
    %2528 = vmatpush.msra.mxu0 0.0
    %2529 = vmatpush.msra.mxu0 0.0
    %2530 = vmatpush.msra.mxu0 %v2425
    %2531 = vmatmul.f32.gmra.mxu0 %v2433
    %v2532 = vpop.f32.mrf.mxu0
    %v2533 = vadd.f32 0.0, %v2532
    %2534 = vdwg.mxu0
    %2535 = vmatpush.msra.mxu0 0.0
    %2536 = vmatpush.msra.mxu0 0.0
    %2537 = vmatpush.msra.mxu0 0.0
    %2538 = vmatpush.msra.mxu0 0.0
    %2539 = vmatpush.msra.mxu0 0.0
    %2540 = vmatpush.msra.mxu0 0.0
    %2541 = vmatpush.msra.mxu0 0.0
    %2542 = vmatpush.msra.mxu0 0.0
    %2543 = vmatpush.msra.mxu0 0.0
    %2544 = vmatpush.msra.mxu0 0.0
    %2545 = vmatpush.msra.mxu0 0.0
    %2546 = vmatpush.msra.mxu0 0.0
    %2547 = vmatpush.msra.mxu0 0.0
    %2548 = vmatpush.msra.mxu0 0.0
    %2549 = vmatpush.msra.mxu0 0.0
    %2550 = vmatpush.msra.mxu0 %v2426
    %2551 = vmatmul.f32.gmra.mxu0 %v2433
    %v2552 = vpop.f32.mrf.mxu0
    %v2553 = vadd.f32 0.0, %v2552
    %2554 = vdwg.mxu0
    %v2555 = vadd.f32 %v2399, %v2453
    %v2556 = vadd.f32 %v2400, %v2473
    %v2557 = vadd.f32 %v2401, %v2493
    %v2558 = vadd.f32 %v2402, %v2513
    %v2559 = vadd.f32 %v2403, %v2533
    %v2560 = vadd.f32 %v2404, %v2553
    %2561 = vrot.lane.b32.xlu0 %v1479, 72
    %v2562 = vpop.permute.xlu0 %2561
    %2563 = vrot.lane.b32.xlu0 %v2235, 110
    %v2564 = vpop.permute.xlu0 %2563
    %2565 = vrot.lane.b32.xlu0 %v2236, 110
    %v2566 = vpop.permute.xlu0 %2565
    %2567 = vrot.lane.b32.xlu0 %v2237, 110
    %v2568 = vpop.permute.xlu0 %2567
    %2569 = vrot.lane.b32.xlu0 %v2238, 110
    %v2570 = vpop.permute.xlu0 %2569
    %2571 = vrot.lane.b32.xlu0 %v2239, 110
    %v2572 = vpop.permute.xlu0 %2571
    %2573 = vrot.lane.b32.xlu0 %v2240, 110
    %v2574 = vpop.permute.xlu0 %2573
    %2575 = vrot.lane.b32.xlu0 %v2241, 110
    %v2576 = vpop.permute.xlu0 %2575
    %v2577 = vsel %vm1136, %v2564, %v2566
    %v2578 = vsel %vm1136, %v2566, %v2568
    %v2579 = vsel %vm1136, %v2568, %v2570
    %v2580 = vsel %vm1136, %v2570, %v2572
    %v2581 = vsel %vm1136, %v2572, %v2574
    %v2582 = vsel %vm1136, %v2574, %v2576
    %v2589 = vsel %vm76, %v2562, 0
    %2591 = vmatpush.msra.mxu0 0.0
    %2592 = vmatpush.msra.mxu0 0.0
    %2593 = vmatpush.msra.mxu0 0.0
    %2594 = vmatpush.msra.mxu0 0.0
    %2595 = vmatpush.msra.mxu0 0.0
    %2596 = vmatpush.msra.mxu0 0.0
    %2597 = vmatpush.msra.mxu0 0.0
    %2598 = vmatpush.msra.mxu0 0.0
    %2599 = vmatpush.msra.mxu0 0.0
    %2600 = vmatpush.msra.mxu0 0.0
    %2601 = vmatpush.msra.mxu0 0.0
    %2602 = vmatpush.msra.mxu0 0.0
    %2603 = vmatpush.msra.mxu0 0.0
    %2604 = vmatpush.msra.mxu0 0.0
    %2605 = vmatpush.msra.mxu0 0.0
    %2606 = vmatpush.msra.mxu0 %v2577
    %2607 = vmatmul.f32.gmra.mxu0 %v2589
    %v2608 = vpop.f32.mrf.mxu0
    %v2609 = vadd.f32 0.0, %v2608
    %2610 = vdwg.mxu0
    %2611 = vmatpush.msra.mxu0 0.0
    %2612 = vmatpush.msra.mxu0 0.0
    %2613 = vmatpush.msra.mxu0 0.0
    %2614 = vmatpush.msra.mxu0 0.0
    %2615 = vmatpush.msra.mxu0 0.0
    %2616 = vmatpush.msra.mxu0 0.0
    %2617 = vmatpush.msra.mxu0 0.0
    %2618 = vmatpush.msra.mxu0 0.0
    %2619 = vmatpush.msra.mxu0 0.0
    %2620 = vmatpush.msra.mxu0 0.0
    %2621 = vmatpush.msra.mxu0 0.0
    %2622 = vmatpush.msra.mxu0 0.0
    %2623 = vmatpush.msra.mxu0 0.0
    %2624 = vmatpush.msra.mxu0 0.0
    %2625 = vmatpush.msra.mxu0 0.0
    %2626 = vmatpush.msra.mxu0 %v2578
    %2627 = vmatmul.f32.gmra.mxu0 %v2589
    %v2628 = vpop.f32.mrf.mxu0
    %v2629 = vadd.f32 0.0, %v2628
    %2630 = vdwg.mxu0
    %2631 = vmatpush.msra.mxu0 0.0
    %2632 = vmatpush.msra.mxu0 0.0
    %2633 = vmatpush.msra.mxu0 0.0
    %2634 = vmatpush.msra.mxu0 0.0
    %2635 = vmatpush.msra.mxu0 0.0
    %2636 = vmatpush.msra.mxu0 0.0
    %2637 = vmatpush.msra.mxu0 0.0
    %2638 = vmatpush.msra.mxu0 0.0
    %2639 = vmatpush.msra.mxu0 0.0
    %2640 = vmatpush.msra.mxu0 0.0
    %2641 = vmatpush.msra.mxu0 0.0
    %2642 = vmatpush.msra.mxu0 0.0
    %2643 = vmatpush.msra.mxu0 0.0
    %2644 = vmatpush.msra.mxu0 0.0
    %2645 = vmatpush.msra.mxu0 0.0
    %2646 = vmatpush.msra.mxu0 %v2579
    %2647 = vmatmul.f32.gmra.mxu0 %v2589
    %v2648 = vpop.f32.mrf.mxu0
    %v2649 = vadd.f32 0.0, %v2648
    %2650 = vdwg.mxu0
    %2651 = vmatpush.msra.mxu0 0.0
    %2652 = vmatpush.msra.mxu0 0.0
    %2653 = vmatpush.msra.mxu0 0.0
    %2654 = vmatpush.msra.mxu0 0.0
    %2655 = vmatpush.msra.mxu0 0.0
    %2656 = vmatpush.msra.mxu0 0.0
    %2657 = vmatpush.msra.mxu0 0.0
    %2658 = vmatpush.msra.mxu0 0.0
    %2659 = vmatpush.msra.mxu0 0.0
    %2660 = vmatpush.msra.mxu0 0.0
    %2661 = vmatpush.msra.mxu0 0.0
    %2662 = vmatpush.msra.mxu0 0.0
    %2663 = vmatpush.msra.mxu0 0.0
    %2664 = vmatpush.msra.mxu0 0.0
    %2665 = vmatpush.msra.mxu0 0.0
    %2666 = vmatpush.msra.mxu0 %v2580
    %2667 = vmatmul.f32.gmra.mxu0 %v2589
    %v2668 = vpop.f32.mrf.mxu0
    %v2669 = vadd.f32 0.0, %v2668
    %2670 = vdwg.mxu0
    %2671 = vmatpush.msra.mxu0 0.0
    %2672 = vmatpush.msra.mxu0 0.0
    %2673 = vmatpush.msra.mxu0 0.0
    %2674 = vmatpush.msra.mxu0 0.0
    %2675 = vmatpush.msra.mxu0 0.0
    %2676 = vmatpush.msra.mxu0 0.0
    %2677 = vmatpush.msra.mxu0 0.0
    %2678 = vmatpush.msra.mxu0 0.0
    %2679 = vmatpush.msra.mxu0 0.0
    %2680 = vmatpush.msra.mxu0 0.0
    %2681 = vmatpush.msra.mxu0 0.0
    %2682 = vmatpush.msra.mxu0 0.0
    %2683 = vmatpush.msra.mxu0 0.0
    %2684 = vmatpush.msra.mxu0 0.0
    %2685 = vmatpush.msra.mxu0 0.0
    %2686 = vmatpush.msra.mxu0 %v2581
    %2687 = vmatmul.f32.gmra.mxu0 %v2589
    %v2688 = vpop.f32.mrf.mxu0
    %v2689 = vadd.f32 0.0, %v2688
    %2690 = vdwg.mxu0
    %2691 = vmatpush.msra.mxu0 0.0
    %2692 = vmatpush.msra.mxu0 0.0
    %2693 = vmatpush.msra.mxu0 0.0
    %2694 = vmatpush.msra.mxu0 0.0
    %2695 = vmatpush.msra.mxu0 0.0
    %2696 = vmatpush.msra.mxu0 0.0
    %2697 = vmatpush.msra.mxu0 0.0
    %2698 = vmatpush.msra.mxu0 0.0
    %2699 = vmatpush.msra.mxu0 0.0
    %2700 = vmatpush.msra.mxu0 0.0
    %2701 = vmatpush.msra.mxu0 0.0
    %2702 = vmatpush.msra.mxu0 0.0
    %2703 = vmatpush.msra.mxu0 0.0
    %2704 = vmatpush.msra.mxu0 0.0
    %2705 = vmatpush.msra.mxu0 0.0
    %2706 = vmatpush.msra.mxu0 %v2582
    %2707 = vmatmul.f32.gmra.mxu0 %v2589
    %v2708 = vpop.f32.mrf.mxu0
    %v2709 = vadd.f32 0.0, %v2708
    %2710 = vdwg.mxu0
    %v2711 = vadd.f32 %v2555, %v2609
    %v2712 = vadd.f32 %v2556, %v2629
    %v2713 = vadd.f32 %v2557, %v2649
    %v2714 = vadd.f32 %v2558, %v2669
    %v2715 = vadd.f32 %v2559, %v2689
    %v2716 = vadd.f32 %v2560, %v2709
    %2717 = vrot.lane.b32.xlu0 %v1479, 64
    %v2718 = vpop.permute.xlu0 %2717
    %2719 = vrot.lane.b32.xlu0 %v2235, 109
    %v2720 = vpop.permute.xlu0 %2719
    %2721 = vrot.lane.b32.xlu0 %v2236, 109
    %v2722 = vpop.permute.xlu0 %2721
    %2723 = vrot.lane.b32.xlu0 %v2237, 109
    %v2724 = vpop.permute.xlu0 %2723
    %2725 = vrot.lane.b32.xlu0 %v2238, 109
    %v2726 = vpop.permute.xlu0 %2725
    %2727 = vrot.lane.b32.xlu0 %v2239, 109
    %v2728 = vpop.permute.xlu0 %2727
    %2729 = vrot.lane.b32.xlu0 %v2240, 109
    %v2730 = vpop.permute.xlu0 %2729
    %2731 = vrot.lane.b32.xlu0 %v2241, 109
    %v2732 = vpop.permute.xlu0 %2731
    %v2733 = vsel %vm1293, %v2720, %v2722
    %v2734 = vsel %vm1293, %v2722, %v2724
    %v2735 = vsel %vm1293, %v2724, %v2726
    %v2736 = vsel %vm1293, %v2726, %v2728
    %v2737 = vsel %vm1293, %v2728, %v2730
    %v2738 = vsel %vm1293, %v2730, %v2732
    %v2745 = vsel %vm76, %v2718, 0
    %2747 = vmatpush.msra.mxu0 0.0
    %2748 = vmatpush.msra.mxu0 0.0
    %2749 = vmatpush.msra.mxu0 0.0
    %2750 = vmatpush.msra.mxu0 0.0
    %2751 = vmatpush.msra.mxu0 0.0
    %2752 = vmatpush.msra.mxu0 0.0
    %2753 = vmatpush.msra.mxu0 0.0
    %2754 = vmatpush.msra.mxu0 0.0
    %2755 = vmatpush.msra.mxu0 0.0
    %2756 = vmatpush.msra.mxu0 0.0
    %2757 = vmatpush.msra.mxu0 0.0
    %2758 = vmatpush.msra.mxu0 0.0
    %2759 = vmatpush.msra.mxu0 0.0
    %2760 = vmatpush.msra.mxu0 0.0
    %2761 = vmatpush.msra.mxu0 0.0
    %2762 = vmatpush.msra.mxu0 %v2733
    %2763 = vmatmul.f32.gmra.mxu0 %v2745
    %v2764 = vpop.f32.mrf.mxu0
    %v2765 = vadd.f32 0.0, %v2764
    %2766 = vdwg.mxu0
    %2767 = vmatpush.msra.mxu0 0.0
    %2768 = vmatpush.msra.mxu0 0.0
    %2769 = vmatpush.msra.mxu0 0.0
    %2770 = vmatpush.msra.mxu0 0.0
    %2771 = vmatpush.msra.mxu0 0.0
    %2772 = vmatpush.msra.mxu0 0.0
    %2773 = vmatpush.msra.mxu0 0.0
    %2774 = vmatpush.msra.mxu0 0.0
    %2775 = vmatpush.msra.mxu0 0.0
    %2776 = vmatpush.msra.mxu0 0.0
    %2777 = vmatpush.msra.mxu0 0.0
    %2778 = vmatpush.msra.mxu0 0.0
    %2779 = vmatpush.msra.mxu0 0.0
    %2780 = vmatpush.msra.mxu0 0.0
    %2781 = vmatpush.msra.mxu0 0.0
    %2782 = vmatpush.msra.mxu0 %v2734
    %2783 = vmatmul.f32.gmra.mxu0 %v2745
    %v2784 = vpop.f32.mrf.mxu0
    %v2785 = vadd.f32 0.0, %v2784
    %2786 = vdwg.mxu0
    %2787 = vmatpush.msra.mxu0 0.0
    %2788 = vmatpush.msra.mxu0 0.0
    %2789 = vmatpush.msra.mxu0 0.0
    %2790 = vmatpush.msra.mxu0 0.0
    %2791 = vmatpush.msra.mxu0 0.0
    %2792 = vmatpush.msra.mxu0 0.0
    %2793 = vmatpush.msra.mxu0 0.0
    %2794 = vmatpush.msra.mxu0 0.0
    %2795 = vmatpush.msra.mxu0 0.0
    %2796 = vmatpush.msra.mxu0 0.0
    %2797 = vmatpush.msra.mxu0 0.0
    %2798 = vmatpush.msra.mxu0 0.0
    %2799 = vmatpush.msra.mxu0 0.0
    %2800 = vmatpush.msra.mxu0 0.0
    %2801 = vmatpush.msra.mxu0 0.0
    %2802 = vmatpush.msra.mxu0 %v2735
    %2803 = vmatmul.f32.gmra.mxu0 %v2745
    %v2804 = vpop.f32.mrf.mxu0
    %v2805 = vadd.f32 0.0, %v2804
    %2806 = vdwg.mxu0
    %2807 = vmatpush.msra.mxu0 0.0
    %2808 = vmatpush.msra.mxu0 0.0
    %2809 = vmatpush.msra.mxu0 0.0
    %2810 = vmatpush.msra.mxu0 0.0
    %2811 = vmatpush.msra.mxu0 0.0
    %2812 = vmatpush.msra.mxu0 0.0
    %2813 = vmatpush.msra.mxu0 0.0
    %2814 = vmatpush.msra.mxu0 0.0
    %2815 = vmatpush.msra.mxu0 0.0
    %2816 = vmatpush.msra.mxu0 0.0
    %2817 = vmatpush.msra.mxu0 0.0
    %2818 = vmatpush.msra.mxu0 0.0
    %2819 = vmatpush.msra.mxu0 0.0
    %2820 = vmatpush.msra.mxu0 0.0
    %2821 = vmatpush.msra.mxu0 0.0
    %2822 = vmatpush.msra.mxu0 %v2736
    %2823 = vmatmul.f32.gmra.mxu0 %v2745
    %v2824 = vpop.f32.mrf.mxu0
    %v2825 = vadd.f32 0.0, %v2824
    %2826 = vdwg.mxu0
    %2827 = vmatpush.msra.mxu0 0.0
    %2828 = vmatpush.msra.mxu0 0.0
    %2829 = vmatpush.msra.mxu0 0.0
    %2830 = vmatpush.msra.mxu0 0.0
    %2831 = vmatpush.msra.mxu0 0.0
    %2832 = vmatpush.msra.mxu0 0.0
    %2833 = vmatpush.msra.mxu0 0.0
    %2834 = vmatpush.msra.mxu0 0.0
    %2835 = vmatpush.msra.mxu0 0.0
    %2836 = vmatpush.msra.mxu0 0.0
    %2837 = vmatpush.msra.mxu0 0.0
    %2838 = vmatpush.msra.mxu0 0.0
    %2839 = vmatpush.msra.mxu0 0.0
    %2840 = vmatpush.msra.mxu0 0.0
    %2841 = vmatpush.msra.mxu0 0.0
    %2842 = vmatpush.msra.mxu0 %v2737
    %2843 = vmatmul.f32.gmra.mxu0 %v2745
    %v2844 = vpop.f32.mrf.mxu0
    %v2845 = vadd.f32 0.0, %v2844
    %2846 = vdwg.mxu0
    %2847 = vmatpush.msra.mxu0 0.0
    %2848 = vmatpush.msra.mxu0 0.0
    %2849 = vmatpush.msra.mxu0 0.0
    %2850 = vmatpush.msra.mxu0 0.0
    %2851 = vmatpush.msra.mxu0 0.0
    %2852 = vmatpush.msra.mxu0 0.0
    %2853 = vmatpush.msra.mxu0 0.0
    %2854 = vmatpush.msra.mxu0 0.0
    %2855 = vmatpush.msra.mxu0 0.0
    %2856 = vmatpush.msra.mxu0 0.0
    %2857 = vmatpush.msra.mxu0 0.0
    %2858 = vmatpush.msra.mxu0 0.0
    %2859 = vmatpush.msra.mxu0 0.0
    %2860 = vmatpush.msra.mxu0 0.0
    %2861 = vmatpush.msra.mxu0 0.0
    %2862 = vmatpush.msra.mxu0 %v2738
    %2863 = vmatmul.f32.gmra.mxu0 %v2745
    %v2864 = vpop.f32.mrf.mxu0
    %v2865 = vadd.f32 0.0, %v2864
    %2866 = vdwg.mxu0
    %v2867 = vadd.f32 %v2711, %v2765
    %v2868 = vadd.f32 %v2712, %v2785
    %v2869 = vadd.f32 %v2713, %v2805
    %v2870 = vadd.f32 %v2714, %v2825
    %v2871 = vadd.f32 %v2715, %v2845
    %v2872 = vadd.f32 %v2716, %v2865
    %v2873 = vld [vmem:[%s6] sm:$0xf]
    %2875 = vset.pattern.permute.xlu0 0
    %2876 = vperm.xlu0 %2875, %v2873
    %v2877 = vpop.permute.xlu0 %2876
    %v2879 = vadd.f32 %v2867, %v2877
    %v2880 = vadd.f32 %v2868, %v2877
    %v2881 = vadd.f32 %v2869, %v2877
    %v2882 = vadd.f32 %v2870, %v2877
    %v2883 = vadd.f32 %v2871, %v2877
    %v2884 = vadd.f32 %v2872, %v2877
    %v2885 = vld [vmem:[%s2] sm:$0xff]
    %v2886 = vld [vmem:[%s2 + $0x8] sm:$0xff]
    %v2887 = vld [vmem:[%s2 + $0x10] sm:$0xff]
    %2891 = vst [vmem:[#allocation1] ss:$2 sm:$0xff] %v2885
    %s2892 = scalar_lea.vmem [#allocation1], 16
    %2893 = vst [vmem:[%s2892] ss:$2 sm:$0xff] %v2886
    %s2894 = scalar_lea.vmem [#allocation1], 32
    %2895 = vst [vmem:[%s2894] ss:$2 sm:$0xff] %v2887
    %v2896 = vld.sshfl [vmem:[#allocation1] sm:$0xff pattern:$0x75316420]
    %v2897 = vld.sshfl [vmem:[#allocation1 + $0x8] sm:$0xff pattern:$0x75316420]
    %v2898 = vld.sshfl [vmem:[#allocation1 + $0x10] sm:$0xff pattern:$0x75316420]
    %v2899 = vld.sshfl [vmem:[#allocation1 + $0x18] sm:$0xff pattern:$0x75316420]
    %v2900 = vld.sshfl [vmem:[#allocation1 + $0x20] sm:$0xff pattern:$0x75316420]
    %v2901 = vld.sshfl [vmem:[#allocation1 + $0x28] sm:$0xff pattern:$0x75316420]
    %v2908 = vsub.f32 %v2879, %v2896
    %v2909 = vsub.f32 %v2880, %v2897
    %v2910 = vsub.f32 %v2881, %v2898
    %v2911 = vsub.f32 %v2882, %v2899
    %v2912 = vsub.f32 %v2883, %v2900
    %v2913 = vsub.f32 %v2884, %v2901
    %v2914 = vmul.f32 %v1453, %v2908
    %v2915 = vmul.f32 %v1454, %v2909
    %v2916 = vmul.f32 %v1455, %v2910
    %v2917 = vmul.f32 %v1456, %v2911
    %v2918 = vmul.f32 %v1457, %v2912
    %v2919 = vmul.f32 %v1458, %v2913
    %v2920 = vld [vmem:[%s7] sm:$0xff]
    %vm2921 = vcmask 31744
    %v2923 = vsel %vm2921, %v2920, 0
    %vm2925 = vcmask 1043456
    %v2927 = vsel %vm2925, %v2914, 0
    %v2930 = vsel %vm2925, %v2915, 0
    %v2933 = vsel %vm2925, %v2916, 0
    %v2936 = vsel %vm2925, %v2917, 0
    %v2939 = vsel %vm2925, %v2918, 0
    %v2942 = vsel %vm2925, %v2919, 0
    %2944 = vmatpush.msra.mxu0 0.0
    %2945 = vmatpush.msra.mxu0 0.0
    %2946 = vmatpush.msra.mxu0 0.0
    %2947 = vmatpush.msra.mxu0 0.0
    %2948 = vmatpush.msra.mxu0 0.0
    %2949 = vmatpush.msra.mxu0 0.0
    %2950 = vmatpush.msra.mxu0 0.0
    %2951 = vmatpush.msra.mxu0 0.0
    %2952 = vmatpush.msra.mxu0 0.0
    %2953 = vmatpush.msra.mxu0 0.0
    %2954 = vmatpush.msra.mxu0 0.0
    %2955 = vmatpush.msra.mxu0 0.0
    %2956 = vmatpush.msra.mxu0 0.0
    %2957 = vmatpush.msra.mxu0 0.0
    %2958 = vmatpush.msra.mxu0 0.0
    %2959 = vmatpush.msra.mxu0 %v2927
    %2960 = vmatmul.f32.gmra.mxu0 %v2923
    %v2961 = vpop.f32.mrf.mxu0
    %v2962 = vadd.f32 0.0, %v2961
    %2963 = vdwg.mxu0
    %2964 = vmatpush.msra.mxu0 0.0
    %2965 = vmatpush.msra.mxu0 0.0
    %2966 = vmatpush.msra.mxu0 0.0
    %2967 = vmatpush.msra.mxu0 0.0
    %2968 = vmatpush.msra.mxu0 0.0
    %2969 = vmatpush.msra.mxu0 0.0
    %2970 = vmatpush.msra.mxu0 0.0
    %2971 = vmatpush.msra.mxu0 0.0
    %2972 = vmatpush.msra.mxu0 0.0
    %2973 = vmatpush.msra.mxu0 0.0
    %2974 = vmatpush.msra.mxu0 0.0
    %2975 = vmatpush.msra.mxu0 0.0
    %2976 = vmatpush.msra.mxu0 0.0
    %2977 = vmatpush.msra.mxu0 0.0
    %2978 = vmatpush.msra.mxu0 0.0
    %2979 = vmatpush.msra.mxu0 %v2930
    %2980 = vmatmul.f32.gmra.mxu0 %v2923
    %v2981 = vpop.f32.mrf.mxu0
    %v2982 = vadd.f32 0.0, %v2981
    %2983 = vdwg.mxu0
    %2984 = vmatpush.msra.mxu0 0.0
    %2985 = vmatpush.msra.mxu0 0.0
    %2986 = vmatpush.msra.mxu0 0.0
    %2987 = vmatpush.msra.mxu0 0.0
    %2988 = vmatpush.msra.mxu0 0.0
    %2989 = vmatpush.msra.mxu0 0.0
    %2990 = vmatpush.msra.mxu0 0.0
    %2991 = vmatpush.msra.mxu0 0.0
    %2992 = vmatpush.msra.mxu0 0.0
    %2993 = vmatpush.msra.mxu0 0.0
    %2994 = vmatpush.msra.mxu0 0.0
    %2995 = vmatpush.msra.mxu0 0.0
    %2996 = vmatpush.msra.mxu0 0.0
    %2997 = vmatpush.msra.mxu0 0.0
    %2998 = vmatpush.msra.mxu0 0.0
    %2999 = vmatpush.msra.mxu0 %v2933
    %3000 = vmatmul.f32.gmra.mxu0 %v2923
    %v3001 = vpop.f32.mrf.mxu0
    %v3002 = vadd.f32 0.0, %v3001
    %3003 = vdwg.mxu0
    %3004 = vmatpush.msra.mxu0 0.0
    %3005 = vmatpush.msra.mxu0 0.0
    %3006 = vmatpush.msra.mxu0 0.0
    %3007 = vmatpush.msra.mxu0 0.0
    %3008 = vmatpush.msra.mxu0 0.0
    %3009 = vmatpush.msra.mxu0 0.0
    %3010 = vmatpush.msra.mxu0 0.0
    %3011 = vmatpush.msra.mxu0 0.0
    %3012 = vmatpush.msra.mxu0 0.0
    %3013 = vmatpush.msra.mxu0 0.0
    %3014 = vmatpush.msra.mxu0 0.0
    %3015 = vmatpush.msra.mxu0 0.0
    %3016 = vmatpush.msra.mxu0 0.0
    %3017 = vmatpush.msra.mxu0 0.0
    %3018 = vmatpush.msra.mxu0 0.0
    %3019 = vmatpush.msra.mxu0 %v2936
    %3020 = vmatmul.f32.gmra.mxu0 %v2923
    %v3021 = vpop.f32.mrf.mxu0
    %v3022 = vadd.f32 0.0, %v3021
    %3023 = vdwg.mxu0
    %3024 = vmatpush.msra.mxu0 0.0
    %3025 = vmatpush.msra.mxu0 0.0
    %3026 = vmatpush.msra.mxu0 0.0
    %3027 = vmatpush.msra.mxu0 0.0
    %3028 = vmatpush.msra.mxu0 0.0
    %3029 = vmatpush.msra.mxu0 0.0
    %3030 = vmatpush.msra.mxu0 0.0
    %3031 = vmatpush.msra.mxu0 0.0
    %3032 = vmatpush.msra.mxu0 0.0
    %3033 = vmatpush.msra.mxu0 0.0
    %3034 = vmatpush.msra.mxu0 0.0
    %3035 = vmatpush.msra.mxu0 0.0
    %3036 = vmatpush.msra.mxu0 0.0
    %3037 = vmatpush.msra.mxu0 0.0
    %3038 = vmatpush.msra.mxu0 0.0
    %3039 = vmatpush.msra.mxu0 %v2939
    %3040 = vmatmul.f32.gmra.mxu0 %v2923
    %v3041 = vpop.f32.mrf.mxu0
    %v3042 = vadd.f32 0.0, %v3041
    %3043 = vdwg.mxu0
    %3044 = vmatpush.msra.mxu0 0.0
    %3045 = vmatpush.msra.mxu0 0.0
    %3046 = vmatpush.msra.mxu0 0.0
    %3047 = vmatpush.msra.mxu0 0.0
    %3048 = vmatpush.msra.mxu0 0.0
    %3049 = vmatpush.msra.mxu0 0.0
    %3050 = vmatpush.msra.mxu0 0.0
    %3051 = vmatpush.msra.mxu0 0.0
    %3052 = vmatpush.msra.mxu0 0.0
    %3053 = vmatpush.msra.mxu0 0.0
    %3054 = vmatpush.msra.mxu0 0.0
    %3055 = vmatpush.msra.mxu0 0.0
    %3056 = vmatpush.msra.mxu0 0.0
    %3057 = vmatpush.msra.mxu0 0.0
    %3058 = vmatpush.msra.mxu0 0.0
    %3059 = vmatpush.msra.mxu0 %v2942
    %3060 = vmatmul.f32.gmra.mxu0 %v2923
    %v3061 = vpop.f32.mrf.mxu0
    %v3062 = vadd.f32 0.0, %v3061
    %3063 = vdwg.mxu0
    %v3064 = vmul.f32 %v2962, %v2962
    %v3065 = vmul.f32 %v2982, %v2982
    %v3066 = vmul.f32 %v3002, %v3002
    %v3067 = vmul.f32 %v3022, %v3022
    %v3068 = vmul.f32 %v3042, %v3042
    %v3069 = vmul.f32 %v3062, %v3062
    %v3070 = vadd.f32 %v3064, %v3065
    %v3071 = vadd.f32 %v3070, %v3066
    %v3072 = vadd.f32 %v3071, %v3067
    %v3073 = vadd.f32 %v3072, %v3068
    %v3074 = vadd.f32 %v3073, %v3069
    %3075 = vadd.xlane.f32.xlu0 %v3074
    %v3076 = vpop.xlane.xlu0 %3075
    %v3077 = vrot.slane %v3076, 4
    %v3078 = vadd.f32 %v3076, %v3077
    %v3079 = vrot.slane %v3078, 2
    %v3080 = vadd.f32 %v3078, %v3079
    %v3081 = vrot.slane %v3080, 1
    %v3082 = vadd.f32 %v3080, %v3081
    %s3083 = vtos %v3082
    %s3084 = smul.f32 %s3083, 0.00012207031
    %v3085 = vstv %s3084
    %vm3086 = vcmask 0
    %3087 = vst.msk [vmem:[#allocation3] sm:$0x1] %vm3086, %v3085
    // Predicated region
    $region34: #{fused_forward.1} parent=1 // pred_check
      _
    $region35: #{fused_forward.1} parent=1 // pred_check_branch
      %3089 = sbr.rel (0) target = $region37
    $region36: #{fused_forward.1} parent=1 // pred_region
      %3091 = vsyncadd [#allocation4], 0
      %s3093 = sshll.u32 [#allocation3], 4
      %s3094 = int_to_ptr.vmem [resolvable:$true] %s3093
      %s3095 = sshll.u32 %s8, 4
      %s3096 = int_to_ptr.hbm [resolvable:$true] %s3095
      %3098 = dma.vmem_to_hbm [thread:$0]  %s3094, 16, %s3096, [#allocation4]
    $region37: #{fused_forward.1} parent=1 // pred_fallthru
      _
    // Predicated region
    $region38: #{fused_forward.1} parent=1 // pred_check
      _
    $region39: #{fused_forward.1} parent=1 // pred_check_branch
      %3100 = sbr.rel (0) target = $region41
    $region40: #{fused_forward.1} parent=1 // pred_region
      %3102 = dma.done [#allocation4], 16
    $region41: #{fused_forward.1} parent=1 // pred_fallthru
      _
    %3103 = vsyncpa [#allocation4], 1

</llo_original>
